<compile_context>
chip_gen: v5e
topology: v5e:2x2
jax: 0.10.0
libtpu: 0.0.40
codegen_flags: <defaults>
</compile_context>

<pallas_src>
import jax
import jax.numpy as jnp
from jax.experimental import pallas as pl
from jax.experimental.pallas import tpu as pltpu


def _tree_sum(terms):
    """Pairwise (tree) reduction of a Python list of arrays."""
    terms = list(terms)
    while len(terms) > 1:
        nxt = []
        for i in range(0, len(terms) - 1, 2):
            nxt.append(terms[i] + terms[i + 1])
        if len(terms) % 2:
            nxt.append(terms[-1])
        terms = nxt
    return terms[0]


def actor_kernel(vals_ref, amap_ref,
                 w1_ref, b1_ref, w2_ref, b2_ref, w3_ref, b3_ref,
                 w5_ref, b5_ref, w6_ref, b6_ref,
                 policy_ref, value_ref):
    TB, C, HW = amap_ref.shape
    C1 = w1_ref.shape[0]     # 8
    C2 = w2_ref.shape[0]     # 16

    # softmax(log(v), dim=1) == v / sum(v) for v > 0 (direct normalization).
    vals = vals_ref[...]                                               # (TB, C)
    inv = pl.reciprocal(jnp.sum(vals, axis=1, keepdims=True), approx=True)
    sm = vals * inv                                                    # (TB, C)

    # attention_map * values.view(-1, 4, 1, 1): one full-slab broadcast multiply.
    x = amap_ref[...] * sm[:, :, None]                                 # (TB, C, HW)
    xc = [x[:, c, :] for c in range(C)]                                # C x (TB, HW)

    # conv1 (1x1, 4->8) + ReLU: unrolled VPU FMAs, scalar weights from SMEM,
    # tree-summed partial products.
    h1 = []
    for o in range(C1):
        acc = _tree_sum([xc[c] * w1_ref[o, c] for c in range(C)])
        h1.append(jnp.maximum(acc + b1_ref[o], 0.0))                   # (TB, HW)

    # conv2 (8->16) + ReLU fused with conv3 (16->1) + ReLU.  Each conv2 channel
    # uses a depth-3 tree sum; conv3 contributions go into 4 rotating partial
    # accumulators (depth 4) and are tree-summed at the end.
    n_parts = 4
    pol_parts = [None] * n_parts
    for o in range(C2):
        acc = _tree_sum([h1[c] * w2_ref[o, c] for c in range(C1)])
        h2o = jnp.maximum(acc + b2_ref[o], 0.0)                        # (TB, HW)
        contrib = h2o * w3_ref[0, o]
        p = o % n_parts
        pol_parts[p] = contrib if pol_parts[p] is None else pol_parts[p] + contrib
    pol = jnp.maximum(_tree_sum(pol_parts) + b3_ref[0], 0.0)           # (TB, HW)

    # policy = out.view(B, H*W) -- already lane-dense, write directly (f32).
    policy_ref[...] = pol

    # fc5 + leaky_relu (dropout p=0 is identity).  bf16 operands on the MXU,
    # f32 accumulate.
    h5 = jnp.dot(pol.astype(jnp.bfloat16), w5_ref[...],
                 preferred_element_type=jnp.float32) + b5_ref[...]     # (TB, 64)
    h5 = jnp.where(h5 > 0, h5, 0.01 * h5)

    # fc6 (64->1) + leaky_relu as a VPU multiply + lane reduction.
    h6 = jnp.sum(h5 * w6_ref[...], axis=1, keepdims=True) + b6_ref[0]  # (TB, 1)
    value_ref[...] = jnp.where(h6 > 0, h6, 0.01 * h6)


def _round_up(x, m):
    return (x + m - 1) // m * m


@jax.jit
def actor_forward(attention_map, values, params):
    B, C, H, W = attention_map.shape
    HW = H * W

    # Pad batch to a multiple of 8 (full sublanes) and pick the batch tile.
    Bp = _round_up(B, 8)
    TB = min(Bp, 512)            # 512 fits comfortably in v7x's 64 MiB VMEM.
    Bp = _round_up(Bp, TB)
    n_tiles = Bp // TB

    # NCHW -> (B, C, H*W) is a free reshape (no transpose); HW stays on lanes.
    amap = attention_map.reshape(B, C, HW)
    if Bp != B:
        amap = jnp.pad(amap, ((0, Bp - B), (0, 0), (0, 0)))
        values = jnp.pad(values, ((0, Bp - B), (0, 0)), constant_values=1.0)

    w5_bf16 = params["w5"].astype(jnp.bfloat16)   # bf16 MXU operand (halved DMA)
    w6_row = params["w6"].reshape(1, -1)          # (64, 1) -> (1, 64), free

    vmem = pltpu.MemorySpace.VMEM
    smem = pl.BlockSpec(memory_space=pltpu.MemorySpace.SMEM)
    vmem_full = pl.BlockSpec(memory_space=vmem)

    args = (values, amap,
            params["w1"], params["b1"], params["w2"], params["b2"],
            params["w3"], params["b3"], w5_bf16, params["b5"],
            w6_row, params["b6"])
    in_specs = [
        pl.BlockSpec((TB, C), lambda i: (i, 0), memory_space=vmem),
        pl.BlockSpec((TB, C, HW), lambda i: (i, 0, 0), memory_space=vmem),
        smem, smem, smem, smem, smem, smem,     # w1,b1,w2,b2,w3,b3 (scalars)
        vmem_full, vmem_full, vmem_full, smem,  # w5(bf16), b5, w6_row, b6
    ]
    out_specs = (
        pl.BlockSpec((TB, HW), lambda i: (i, 0), memory_space=vmem),
        pl.BlockSpec((TB, 1), lambda i: (i, 0), memory_space=vmem),
    )

    flops = (2 * Bp * HW * (4 * 8 + 8 * 16 + 16 * 1)   # 1x1 convs
             + 2 * Bp * HW * 64                        # fc5
             + 2 * Bp * 64)                            # fc6
    bytes_accessed = (4 * (amap.size + values.size + Bp * HW + Bp)
                      + 2 * w5_bf16.size
                      + 4 * sum(int(p.size) for k, p in params.items() if k != "w5"))
    cost = pl.CostEstimate(flops=int(flops), transcendentals=int(Bp),
                           bytes_accessed=int(bytes_accessed))

    policy, value = pl.pallas_call(
        actor_kernel,
        grid=(n_tiles,),
        out_shape=(jax.ShapeDtypeStruct((Bp, HW), jnp.float32),
                   jax.ShapeDtypeStruct((Bp, 1), jnp.float32)),
        in_specs=in_specs,
        out_specs=out_specs,
        compiler_params=pltpu.CompilerParams(
            dimension_semantics=("parallel",)),
        cost_estimate=cost,
    )(*args)
    return policy[:B], value[:B]


def actor_reference(attention_map, values, params):
    """Plain-JAX reference with the PyTorch module's exact semantics."""
    B, C, H, W = attention_map.shape
    sm = jax.nn.softmax(jnp.log(values), axis=1)                  # (B, 4)
    x = attention_map * sm[:, :, None, None]                      # (B, 4, H, W)
    x = x.reshape(B, C, H * W)                                    # (B, 4, HW)
    h1 = jnp.maximum(jnp.einsum("oc,bcl->bol", params["w1"], x)
                     + params["b1"][None, :, None], 0.0)
    h2 = jnp.maximum(jnp.einsum("oc,bcl->bol", params["w2"], h1)
                     + params["b2"][None, :, None], 0.0)
    h3 = jnp.maximum(jnp.einsum("oc,bcl->bol", params["w3"], h2)
                     + params["b3"][None, :, None], 0.0)
    policy = h3.reshape(B, H * W)
    h5 = policy @ params["w5"] + params["b5"]
    h5 = jnp.where(h5 > 0, h5, 0.01 * h5)
    h6 = h5 @ params["w6"] + params["b6"]
    value = jnp.where(h6 > 0, h6, 0.01 * h6)
    return policy, value


if __name__ == "__main__":
    B, C, S = 2, 4, 16          # batch, channels, spatial side (env size)
    HW = S * S

    key = jax.random.PRNGKey(0)
    ks = jax.random.split(key, 12)

    attention_map = jax.random.normal(ks[0], (B, C, S, S), dtype=jnp.float32)
    values = jax.random.uniform(ks[1], (B, C), dtype=jnp.float32,
                                minval=0.1, maxval=2.0)   # positive (log is taken)

    def init(k, shape, scale=0.3):
        return (scale * jax.random.normal(k, shape)).astype(jnp.float32)

    params = {
        "w1": init(ks[2], (8, 4)),           "b1": init(ks[3], (8,), 0.1),
        "w2": init(ks[4], (16, 8)),          "b2": init(ks[5], (16,), 0.1),
        "w3": init(ks[6], (1, 16)),          "b3": init(ks[7], (1,), 0.1),
        "w5": init(ks[8], (HW, 64), 0.05),   "b5": init(ks[9], (1, 64), 0.1),
        "w6": init(ks[10], (64, 1), 0.1),    "b6": init(ks[11], (1,), 0.1),
    }

    policy, value = actor_forward(attention_map, values, params)
    jax.block_until_ready((policy, value))

    ref_policy, ref_value = actor_reference(attention_map, values, params)
    assert policy.shape == (B, HW) and value.shape == (B, 1)
    assert jnp.allclose(policy, ref_policy, rtol=1e-2, atol=1e-2), \
        float(jnp.max(jnp.abs(policy - ref_policy)))
    assert jnp.allclose(value, ref_value, rtol=1e-2, atol=1e-2), \
        float(jnp.max(jnp.abs(value - ref_value)))

    print("KERNEL_OK")
</pallas_src>

<mosaic_0001>
module attributes {stable_mosaic.version = 11 : i64} {
  func.func @actor_kernel(%arg0: i32, %arg1: memref<8x4xf32, #tpu.memory_space<vmem>>, %arg2: memref<8x4x256xf32, #tpu.memory_space<vmem>>, %arg3: memref<8x4xf32, #tpu.memory_space<smem>>, %arg4: memref<8xf32, #tpu.memory_space<smem>>, %arg5: memref<16x8xf32, #tpu.memory_space<smem>>, %arg6: memref<16xf32, #tpu.memory_space<smem>>, %arg7: memref<1x16xf32, #tpu.memory_space<smem>>, %arg8: memref<1xf32, #tpu.memory_space<smem>>, %arg9: memref<256x64xbf16, #tpu.memory_space<vmem>>, %arg10: memref<1x64xf32, #tpu.memory_space<vmem>>, %arg11: memref<1x64xf32, #tpu.memory_space<vmem>>, %arg12: memref<1xf32, #tpu.memory_space<smem>>, %arg13: memref<8x256xf32, #tpu.memory_space<vmem>>, %arg14: memref<8x1xf32, #tpu.memory_space<vmem>>) attributes {dimension_semantics = [#tpu.dimension_semantics<parallel>], iteration_bounds = array<i64: 1>, scalar_prefetch = 0 : i64, scratch_operands = 0 : i64, tpu.core_type = #tpu.core_type<tc>, window_params = [{transform_indices = @transform_0, window_bounds = array<i64: 8, 4>}, {transform_indices = @transform_1, window_bounds = array<i64: 8, 4, 256>}, {transform_indices = @transform_2, window_bounds = array<i64: 8, 4>}, {transform_indices = @transform_3, window_bounds = array<i64: 8>}, {transform_indices = @transform_4, window_bounds = array<i64: 16, 8>}, {transform_indices = @transform_5, window_bounds = array<i64: 16>}, {transform_indices = @transform_6, window_bounds = array<i64: 1, 16>}, {transform_indices = @transform_7, window_bounds = array<i64: 1>}, {pipeline_mode = #tpu.pipeline_mode<synchronous>, transform_indices = @transform_8, window_bounds = array<i64: 256, 64>}, {pipeline_mode = #tpu.pipeline_mode<synchronous>, transform_indices = @transform_9, window_bounds = array<i64: 1, 64>}, {pipeline_mode = #tpu.pipeline_mode<synchronous>, transform_indices = @transform_10, window_bounds = array<i64: 1, 64>}, {transform_indices = @transform_11, window_bounds = array<i64: 1>}, {transform_indices = @transform_12, window_bounds = array<i64: 8, 256>}, {transform_indices = @transform_13, window_bounds = array<i64: 8, 1>}]} {
    %c0 = arith.constant 0 : index
    %c0_0 = arith.constant 0 : index
    %0 = vector.load %arg1[%c0, %c0_0] : memref<8x4xf32, #tpu.memory_space<vmem>>, vector<8x4xf32>
    %cst = arith.constant dense<0.000000e+00> : vector<8xf32>
    %1 = vector.multi_reduction <add>, %0, %cst [1] : vector<8x4xf32> to vector<8xf32>
    %2 = vector.shape_cast %1 : vector<8xf32> to vector<8x1xf32>
    %3 = tpu.reciprocal %2 {approx = true} : vector<8x1xf32> -> vector<8x1xf32>
    %4 = vector.broadcast %3 : vector<8x1xf32> to vector<8x4xf32>
    %5 = arith.mulf %0, %4 : vector<8x4xf32>
    %c0_1 = arith.constant 0 : index
    %c0_2 = arith.constant 0 : index
    %c0_3 = arith.constant 0 : index
    %6 = vector.load %arg2[%c0_1, %c0_2, %c0_3] : memref<8x4x256xf32, #tpu.memory_space<vmem>>, vector<8x4x256xf32>
    %7 = vector.shape_cast %5 : vector<8x4xf32> to vector<8x4x1xf32>
    %8 = vector.broadcast %7 : vector<8x4x1xf32> to vector<8x4x256xf32>
    %9 = arith.mulf %6, %8 : vector<8x4x256xf32>
    %10 = vector.extract_strided_slice %9 {offsets = [0, 0, 0], sizes = [8, 1, 256], strides = [1, 1, 1]} : vector<8x4x256xf32> to vector<8x1x256xf32>
    %11 = vector.shape_cast %10 : vector<8x1x256xf32> to vector<8x256xf32>
    %12 = vector.extract_strided_slice %9 {offsets = [0, 1, 0], sizes = [8, 1, 256], strides = [1, 1, 1]} : vector<8x4x256xf32> to vector<8x1x256xf32>
    %13 = vector.shape_cast %12 : vector<8x1x256xf32> to vector<8x256xf32>
    %14 = vector.extract_strided_slice %9 {offsets = [0, 2, 0], sizes = [8, 1, 256], strides = [1, 1, 1]} : vector<8x4x256xf32> to vector<8x1x256xf32>
    %15 = vector.shape_cast %14 : vector<8x1x256xf32> to vector<8x256xf32>
    %16 = vector.extract_strided_slice %9 {offsets = [0, 3, 0], sizes = [8, 1, 256], strides = [1, 1, 1]} : vector<8x4x256xf32> to vector<8x1x256xf32>
    %17 = vector.shape_cast %16 : vector<8x1x256xf32> to vector<8x256xf32>
    %c0_4 = arith.constant 0 : index
    %c0_5 = arith.constant 0 : index
    %18 = memref.load %arg3[%c0_4, %c0_5] : memref<8x4xf32, #tpu.memory_space<smem>>
    %19 = vector.broadcast %18 : f32 to vector<8x256xf32>
    %20 = arith.mulf %11, %19 : vector<8x256xf32>
    %c0_6 = arith.constant 0 : index
    %c1 = arith.constant 1 : index
    %21 = memref.load %arg3[%c0_6, %c1] : memref<8x4xf32, #tpu.memory_space<smem>>
    %22 = vector.broadcast %21 : f32 to vector<8x256xf32>
    %23 = arith.mulf %13, %22 : vector<8x256xf32>
    %c0_7 = arith.constant 0 : index
    %c2 = arith.constant 2 : index
    %24 = memref.load %arg3[%c0_7, %c2] : memref<8x4xf32, #tpu.memory_space<smem>>
    %25 = vector.broadcast %24 : f32 to vector<8x256xf32>
    %26 = arith.mulf %15, %25 : vector<8x256xf32>
    %c0_8 = arith.constant 0 : index
    %c3 = arith.constant 3 : index
    %27 = memref.load %arg3[%c0_8, %c3] : memref<8x4xf32, #tpu.memory_space<smem>>
    %28 = vector.broadcast %27 : f32 to vector<8x256xf32>
    %29 = arith.mulf %17, %28 : vector<8x256xf32>
    %30 = arith.addf %20, %23 : vector<8x256xf32>
    %31 = arith.addf %26, %29 : vector<8x256xf32>
    %32 = arith.addf %30, %31 : vector<8x256xf32>
    %c0_9 = arith.constant 0 : index
    %33 = memref.load %arg4[%c0_9] : memref<8xf32, #tpu.memory_space<smem>>
    %34 = vector.broadcast %33 : f32 to vector<8x256xf32>
    %35 = arith.addf %32, %34 : vector<8x256xf32>
    %cst_10 = arith.constant 0.000000e+00 : f32
    %36 = vector.broadcast %cst_10 : f32 to vector<8x256xf32>
    %37 = arith.maximumf %35, %36 : vector<8x256xf32>
    %c1_11 = arith.constant 1 : index
    %c0_12 = arith.constant 0 : index
    %38 = memref.load %arg3[%c1_11, %c0_12] : memref<8x4xf32, #tpu.memory_space<smem>>
    %39 = vector.broadcast %38 : f32 to vector<8x256xf32>
    %40 = arith.mulf %11, %39 : vector<8x256xf32>
    %c1_13 = arith.constant 1 : index
    %c1_14 = arith.constant 1 : index
    %41 = memref.load %arg3[%c1_13, %c1_14] : memref<8x4xf32, #tpu.memory_space<smem>>
    %42 = vector.broadcast %41 : f32 to vector<8x256xf32>
    %43 = arith.mulf %13, %42 : vector<8x256xf32>
    %c1_15 = arith.constant 1 : index
    %c2_16 = arith.constant 2 : index
    %44 = memref.load %arg3[%c1_15, %c2_16] : memref<8x4xf32, #tpu.memory_space<smem>>
    %45 = vector.broadcast %44 : f32 to vector<8x256xf32>
    %46 = arith.mulf %15, %45 : vector<8x256xf32>
    %c1_17 = arith.constant 1 : index
    %c3_18 = arith.constant 3 : index
    %47 = memref.load %arg3[%c1_17, %c3_18] : memref<8x4xf32, #tpu.memory_space<smem>>
    %48 = vector.broadcast %47 : f32 to vector<8x256xf32>
    %49 = arith.mulf %17, %48 : vector<8x256xf32>
    %50 = arith.addf %40, %43 : vector<8x256xf32>
    %51 = arith.addf %46, %49 : vector<8x256xf32>
    %52 = arith.addf %50, %51 : vector<8x256xf32>
    %c1_19 = arith.constant 1 : index
    %53 = memref.load %arg4[%c1_19] : memref<8xf32, #tpu.memory_space<smem>>
    %54 = vector.broadcast %53 : f32 to vector<8x256xf32>
    %55 = arith.addf %52, %54 : vector<8x256xf32>
    %cst_20 = arith.constant 0.000000e+00 : f32
    %56 = vector.broadcast %cst_20 : f32 to vector<8x256xf32>
    %57 = arith.maximumf %55, %56 : vector<8x256xf32>
    %c2_21 = arith.constant 2 : index
    %c0_22 = arith.constant 0 : index
    %58 = memref.load %arg3[%c2_21, %c0_22] : memref<8x4xf32, #tpu.memory_space<smem>>
    %59 = vector.broadcast %58 : f32 to vector<8x256xf32>
    %60 = arith.mulf %11, %59 : vector<8x256xf32>
    %c2_23 = arith.constant 2 : index
    %c1_24 = arith.constant 1 : index
    %61 = memref.load %arg3[%c2_23, %c1_24] : memref<8x4xf32, #tpu.memory_space<smem>>
    %62 = vector.broadcast %61 : f32 to vector<8x256xf32>
    %63 = arith.mulf %13, %62 : vector<8x256xf32>
    %c2_25 = arith.constant 2 : index
    %c2_26 = arith.constant 2 : index
    %64 = memref.load %arg3[%c2_25, %c2_26] : memref<8x4xf32, #tpu.memory_space<smem>>
    %65 = vector.broadcast %64 : f32 to vector<8x256xf32>
    %66 = arith.mulf %15, %65 : vector<8x256xf32>
    %c2_27 = arith.constant 2 : index
    %c3_28 = arith.constant 3 : index
    %67 = memref.load %arg3[%c2_27, %c3_28] : memref<8x4xf32, #tpu.memory_space<smem>>
    %68 = vector.broadcast %67 : f32 to vector<8x256xf32>
    %69 = arith.mulf %17, %68 : vector<8x256xf32>
    %70 = arith.addf %60, %63 : vector<8x256xf32>
    %71 = arith.addf %66, %69 : vector<8x256xf32>
    %72 = arith.addf %70, %71 : vector<8x256xf32>
    %c2_29 = arith.constant 2 : index
    %73 = memref.load %arg4[%c2_29] : memref<8xf32, #tpu.memory_space<smem>>
    %74 = vector.broadcast %73 : f32 to vector<8x256xf32>
    %75 = arith.addf %72, %74 : vector<8x256xf32>
    %cst_30 = arith.constant 0.000000e+00 : f32
    %76 = vector.broadcast %cst_30 : f32 to vector<8x256xf32>
    %77 = arith.maximumf %75, %76 : vector<8x256xf32>
    %c3_31 = arith.constant 3 : index
    %c0_32 = arith.constant 0 : index
    %78 = memref.load %arg3[%c3_31, %c0_32] : memref<8x4xf32, #tpu.memory_space<smem>>
    %79 = vector.broadcast %78 : f32 to vector<8x256xf32>
    %80 = arith.mulf %11, %79 : vector<8x256xf32>
    %c3_33 = arith.constant 3 : index
    %c1_34 = arith.constant 1 : index
    %81 = memref.load %arg3[%c3_33, %c1_34] : memref<8x4xf32, #tpu.memory_space<smem>>
    %82 = vector.broadcast %81 : f32 to vector<8x256xf32>
    %83 = arith.mulf %13, %82 : vector<8x256xf32>
    %c3_35 = arith.constant 3 : index
    %c2_36 = arith.constant 2 : index
    %84 = memref.load %arg3[%c3_35, %c2_36] : memref<8x4xf32, #tpu.memory_space<smem>>
    %85 = vector.broadcast %84 : f32 to vector<8x256xf32>
    %86 = arith.mulf %15, %85 : vector<8x256xf32>
    %c3_37 = arith.constant 3 : index
    %c3_38 = arith.constant 3 : index
    %87 = memref.load %arg3[%c3_37, %c3_38] : memref<8x4xf32, #tpu.memory_space<smem>>
    %88 = vector.broadcast %87 : f32 to vector<8x256xf32>
    %89 = arith.mulf %17, %88 : vector<8x256xf32>
    %90 = arith.addf %80, %83 : vector<8x256xf32>
    %91 = arith.addf %86, %89 : vector<8x256xf32>
    %92 = arith.addf %90, %91 : vector<8x256xf32>
    %c3_39 = arith.constant 3 : index
    %93 = memref.load %arg4[%c3_39] : memref<8xf32, #tpu.memory_space<smem>>
    %94 = vector.broadcast %93 : f32 to vector<8x256xf32>
    %95 = arith.addf %92, %94 : vector<8x256xf32>
    %cst_40 = arith.constant 0.000000e+00 : f32
    %96 = vector.broadcast %cst_40 : f32 to vector<8x256xf32>
    %97 = arith.maximumf %95, %96 : vector<8x256xf32>
    %c4 = arith.constant 4 : index
    %c0_41 = arith.constant 0 : index
    %98 = memref.load %arg3[%c4, %c0_41] : memref<8x4xf32, #tpu.memory_space<smem>>
    %99 = vector.broadcast %98 : f32 to vector<8x256xf32>
    %100 = arith.mulf %11, %99 : vector<8x256xf32>
    %c4_42 = arith.constant 4 : index
    %c1_43 = arith.constant 1 : index
    %101 = memref.load %arg3[%c4_42, %c1_43] : memref<8x4xf32, #tpu.memory_space<smem>>
    %102 = vector.broadcast %101 : f32 to vector<8x256xf32>
    %103 = arith.mulf %13, %102 : vector<8x256xf32>
    %c4_44 = arith.constant 4 : index
    %c2_45 = arith.constant 2 : index
    %104 = memref.load %arg3[%c4_44, %c2_45] : memref<8x4xf32, #tpu.memory_space<smem>>
    %105 = vector.broadcast %104 : f32 to vector<8x256xf32>
    %106 = arith.mulf %15, %105 : vector<8x256xf32>
    %c4_46 = arith.constant 4 : index
    %c3_47 = arith.constant 3 : index
    %107 = memref.load %arg3[%c4_46, %c3_47] : memref<8x4xf32, #tpu.memory_space<smem>>
    %108 = vector.broadcast %107 : f32 to vector<8x256xf32>
    %109 = arith.mulf %17, %108 : vector<8x256xf32>
    %110 = arith.addf %100, %103 : vector<8x256xf32>
    %111 = arith.addf %106, %109 : vector<8x256xf32>
    %112 = arith.addf %110, %111 : vector<8x256xf32>
    %c4_48 = arith.constant 4 : index
    %113 = memref.load %arg4[%c4_48] : memref<8xf32, #tpu.memory_space<smem>>
    %114 = vector.broadcast %113 : f32 to vector<8x256xf32>
    %115 = arith.addf %112, %114 : vector<8x256xf32>
    %cst_49 = arith.constant 0.000000e+00 : f32
    %116 = vector.broadcast %cst_49 : f32 to vector<8x256xf32>
    %117 = arith.maximumf %115, %116 : vector<8x256xf32>
    %c5 = arith.constant 5 : index
    %c0_50 = arith.constant 0 : index
    %118 = memref.load %arg3[%c5, %c0_50] : memref<8x4xf32, #tpu.memory_space<smem>>
    %119 = vector.broadcast %118 : f32 to vector<8x256xf32>
    %120 = arith.mulf %11, %119 : vector<8x256xf32>
    %c5_51 = arith.constant 5 : index
    %c1_52 = arith.constant 1 : index
    %121 = memref.load %arg3[%c5_51, %c1_52] : memref<8x4xf32, #tpu.memory_space<smem>>
    %122 = vector.broadcast %121 : f32 to vector<8x256xf32>
    %123 = arith.mulf %13, %122 : vector<8x256xf32>
    %c5_53 = arith.constant 5 : index
    %c2_54 = arith.constant 2 : index
    %124 = memref.load %arg3[%c5_53, %c2_54] : memref<8x4xf32, #tpu.memory_space<smem>>
    %125 = vector.broadcast %124 : f32 to vector<8x256xf32>
    %126 = arith.mulf %15, %125 : vector<8x256xf32>
    %c5_55 = arith.constant 5 : index
    %c3_56 = arith.constant 3 : index
    %127 = memref.load %arg3[%c5_55, %c3_56] : memref<8x4xf32, #tpu.memory_space<smem>>
    %128 = vector.broadcast %127 : f32 to vector<8x256xf32>
    %129 = arith.mulf %17, %128 : vector<8x256xf32>
    %130 = arith.addf %120, %123 : vector<8x256xf32>
    %131 = arith.addf %126, %129 : vector<8x256xf32>
    %132 = arith.addf %130, %131 : vector<8x256xf32>
    %c5_57 = arith.constant 5 : index
    %133 = memref.load %arg4[%c5_57] : memref<8xf32, #tpu.memory_space<smem>>
    %134 = vector.broadcast %133 : f32 to vector<8x256xf32>
    %135 = arith.addf %132, %134 : vector<8x256xf32>
    %cst_58 = arith.constant 0.000000e+00 : f32
    %136 = vector.broadcast %cst_58 : f32 to vector<8x256xf32>
    %137 = arith.maximumf %135, %136 : vector<8x256xf32>
    %c6 = arith.constant 6 : index
    %c0_59 = arith.constant 0 : index
    %138 = memref.load %arg3[%c6, %c0_59] : memref<8x4xf32, #tpu.memory_space<smem>>
    %139 = vector.broadcast %138 : f32 to vector<8x256xf32>
    %140 = arith.mulf %11, %139 : vector<8x256xf32>
    %c6_60 = arith.constant 6 : index
    %c1_61 = arith.constant 1 : index
    %141 = memref.load %arg3[%c6_60, %c1_61] : memref<8x4xf32, #tpu.memory_space<smem>>
    %142 = vector.broadcast %141 : f32 to vector<8x256xf32>
    %143 = arith.mulf %13, %142 : vector<8x256xf32>
    %c6_62 = arith.constant 6 : index
    %c2_63 = arith.constant 2 : index
    %144 = memref.load %arg3[%c6_62, %c2_63] : memref<8x4xf32, #tpu.memory_space<smem>>
    %145 = vector.broadcast %144 : f32 to vector<8x256xf32>
    %146 = arith.mulf %15, %145 : vector<8x256xf32>
    %c6_64 = arith.constant 6 : index
    %c3_65 = arith.constant 3 : index
    %147 = memref.load %arg3[%c6_64, %c3_65] : memref<8x4xf32, #tpu.memory_space<smem>>
    %148 = vector.broadcast %147 : f32 to vector<8x256xf32>
    %149 = arith.mulf %17, %148 : vector<8x256xf32>
    %150 = arith.addf %140, %143 : vector<8x256xf32>
    %151 = arith.addf %146, %149 : vector<8x256xf32>
    %152 = arith.addf %150, %151 : vector<8x256xf32>
    %c6_66 = arith.constant 6 : index
    %153 = memref.load %arg4[%c6_66] : memref<8xf32, #tpu.memory_space<smem>>
    %154 = vector.broadcast %153 : f32 to vector<8x256xf32>
    %155 = arith.addf %152, %154 : vector<8x256xf32>
    %cst_67 = arith.constant 0.000000e+00 : f32
    %156 = vector.broadcast %cst_67 : f32 to vector<8x256xf32>
    %157 = arith.maximumf %155, %156 : vector<8x256xf32>
    %c7 = arith.constant 7 : index
    %c0_68 = arith.constant 0 : index
    %158 = memref.load %arg3[%c7, %c0_68] : memref<8x4xf32, #tpu.memory_space<smem>>
    %159 = vector.broadcast %158 : f32 to vector<8x256xf32>
    %160 = arith.mulf %11, %159 : vector<8x256xf32>
    %c7_69 = arith.constant 7 : index
    %c1_70 = arith.constant 1 : index
    %161 = memref.load %arg3[%c7_69, %c1_70] : memref<8x4xf32, #tpu.memory_space<smem>>
    %162 = vector.broadcast %161 : f32 to vector<8x256xf32>
    %163 = arith.mulf %13, %162 : vector<8x256xf32>
    %c7_71 = arith.constant 7 : index
    %c2_72 = arith.constant 2 : index
    %164 = memref.load %arg3[%c7_71, %c2_72] : memref<8x4xf32, #tpu.memory_space<smem>>
    %165 = vector.broadcast %164 : f32 to vector<8x256xf32>
    %166 = arith.mulf %15, %165 : vector<8x256xf32>
    %c7_73 = arith.constant 7 : index
    %c3_74 = arith.constant 3 : index
    %167 = memref.load %arg3[%c7_73, %c3_74] : memref<8x4xf32, #tpu.memory_space<smem>>
    %168 = vector.broadcast %167 : f32 to vector<8x256xf32>
    %169 = arith.mulf %17, %168 : vector<8x256xf32>
    %170 = arith.addf %160, %163 : vector<8x256xf32>
    %171 = arith.addf %166, %169 : vector<8x256xf32>
    %172 = arith.addf %170, %171 : vector<8x256xf32>
    %c7_75 = arith.constant 7 : index
    %173 = memref.load %arg4[%c7_75] : memref<8xf32, #tpu.memory_space<smem>>
    %174 = vector.broadcast %173 : f32 to vector<8x256xf32>
    %175 = arith.addf %172, %174 : vector<8x256xf32>
    %cst_76 = arith.constant 0.000000e+00 : f32
    %176 = vector.broadcast %cst_76 : f32 to vector<8x256xf32>
    %177 = arith.maximumf %175, %176 : vector<8x256xf32>
    %c0_77 = arith.constant 0 : index
    %c0_78 = arith.constant 0 : index
    %178 = memref.load %arg5[%c0_77, %c0_78] : memref<16x8xf32, #tpu.memory_space<smem>>
    %179 = vector.broadcast %178 : f32 to vector<8x256xf32>
    %180 = arith.mulf %37, %179 : vector<8x256xf32>
    %c0_79 = arith.constant 0 : index
    %c1_80 = arith.constant 1 : index
    %181 = memref.load %arg5[%c0_79, %c1_80] : memref<16x8xf32, #tpu.memory_space<smem>>
    %182 = vector.broadcast %181 : f32 to vector<8x256xf32>
    %183 = arith.mulf %57, %182 : vector<8x256xf32>
    %c0_81 = arith.constant 0 : index
    %c2_82 = arith.constant 2 : index
    %184 = memref.load %arg5[%c0_81, %c2_82] : memref<16x8xf32, #tpu.memory_space<smem>>
    %185 = vector.broadcast %184 : f32 to vector<8x256xf32>
    %186 = arith.mulf %77, %185 : vector<8x256xf32>
    %c0_83 = arith.constant 0 : index
    %c3_84 = arith.constant 3 : index
    %187 = memref.load %arg5[%c0_83, %c3_84] : memref<16x8xf32, #tpu.memory_space<smem>>
    %188 = vector.broadcast %187 : f32 to vector<8x256xf32>
    %189 = arith.mulf %97, %188 : vector<8x256xf32>
    %c0_85 = arith.constant 0 : index
    %c4_86 = arith.constant 4 : index
    %190 = memref.load %arg5[%c0_85, %c4_86] : memref<16x8xf32, #tpu.memory_space<smem>>
    %191 = vector.broadcast %190 : f32 to vector<8x256xf32>
    %192 = arith.mulf %117, %191 : vector<8x256xf32>
    %c0_87 = arith.constant 0 : index
    %c5_88 = arith.constant 5 : index
    %193 = memref.load %arg5[%c0_87, %c5_88] : memref<16x8xf32, #tpu.memory_space<smem>>
    %194 = vector.broadcast %193 : f32 to vector<8x256xf32>
    %195 = arith.mulf %137, %194 : vector<8x256xf32>
    %c0_89 = arith.constant 0 : index
    %c6_90 = arith.constant 6 : index
    %196 = memref.load %arg5[%c0_89, %c6_90] : memref<16x8xf32, #tpu.memory_space<smem>>
    %197 = vector.broadcast %196 : f32 to vector<8x256xf32>
    %198 = arith.mulf %157, %197 : vector<8x256xf32>
    %c0_91 = arith.constant 0 : index
    %c7_92 = arith.constant 7 : index
    %199 = memref.load %arg5[%c0_91, %c7_92] : memref<16x8xf32, #tpu.memory_space<smem>>
    %200 = vector.broadcast %199 : f32 to vector<8x256xf32>
    %201 = arith.mulf %177, %200 : vector<8x256xf32>
    %202 = arith.addf %180, %183 : vector<8x256xf32>
    %203 = arith.addf %186, %189 : vector<8x256xf32>
    %204 = arith.addf %192, %195 : vector<8x256xf32>
    %205 = arith.addf %198, %201 : vector<8x256xf32>
    %206 = arith.addf %202, %203 : vector<8x256xf32>
    %207 = arith.addf %204, %205 : vector<8x256xf32>
    %208 = arith.addf %206, %207 : vector<8x256xf32>
    %c0_93 = arith.constant 0 : index
    %209 = memref.load %arg6[%c0_93] : memref<16xf32, #tpu.memory_space<smem>>
    %210 = vector.broadcast %209 : f32 to vector<8x256xf32>
    %211 = arith.addf %208, %210 : vector<8x256xf32>
    %cst_94 = arith.constant 0.000000e+00 : f32
    %212 = vector.broadcast %cst_94 : f32 to vector<8x256xf32>
    %213 = arith.maximumf %211, %212 : vector<8x256xf32>
    %c0_95 = arith.constant 0 : index
    %c0_96 = arith.constant 0 : index
    %214 = memref.load %arg7[%c0_95, %c0_96] : memref<1x16xf32, #tpu.memory_space<smem>>
    %215 = vector.broadcast %214 : f32 to vector<8x256xf32>
    %216 = arith.mulf %213, %215 : vector<8x256xf32>
    %c1_97 = arith.constant 1 : index
    %c0_98 = arith.constant 0 : index
    %217 = memref.load %arg5[%c1_97, %c0_98] : memref<16x8xf32, #tpu.memory_space<smem>>
    %218 = vector.broadcast %217 : f32 to vector<8x256xf32>
    %219 = arith.mulf %37, %218 : vector<8x256xf32>
    %c1_99 = arith.constant 1 : index
    %c1_100 = arith.constant 1 : index
    %220 = memref.load %arg5[%c1_99, %c1_100] : memref<16x8xf32, #tpu.memory_space<smem>>
    %221 = vector.broadcast %220 : f32 to vector<8x256xf32>
    %222 = arith.mulf %57, %221 : vector<8x256xf32>
    %c1_101 = arith.constant 1 : index
    %c2_102 = arith.constant 2 : index
    %223 = memref.load %arg5[%c1_101, %c2_102] : memref<16x8xf32, #tpu.memory_space<smem>>
    %224 = vector.broadcast %223 : f32 to vector<8x256xf32>
    %225 = arith.mulf %77, %224 : vector<8x256xf32>
    %c1_103 = arith.constant 1 : index
    %c3_104 = arith.constant 3 : index
    %226 = memref.load %arg5[%c1_103, %c3_104] : memref<16x8xf32, #tpu.memory_space<smem>>
    %227 = vector.broadcast %226 : f32 to vector<8x256xf32>
    %228 = arith.mulf %97, %227 : vector<8x256xf32>
    %c1_105 = arith.constant 1 : index
    %c4_106 = arith.constant 4 : index
    %229 = memref.load %arg5[%c1_105, %c4_106] : memref<16x8xf32, #tpu.memory_space<smem>>
    %230 = vector.broadcast %229 : f32 to vector<8x256xf32>
    %231 = arith.mulf %117, %230 : vector<8x256xf32>
    %c1_107 = arith.constant 1 : index
    %c5_108 = arith.constant 5 : index
    %232 = memref.load %arg5[%c1_107, %c5_108] : memref<16x8xf32, #tpu.memory_space<smem>>
    %233 = vector.broadcast %232 : f32 to vector<8x256xf32>
    %234 = arith.mulf %137, %233 : vector<8x256xf32>
    %c1_109 = arith.constant 1 : index
    %c6_110 = arith.constant 6 : index
    %235 = memref.load %arg5[%c1_109, %c6_110] : memref<16x8xf32, #tpu.memory_space<smem>>
    %236 = vector.broadcast %235 : f32 to vector<8x256xf32>
    %237 = arith.mulf %157, %236 : vector<8x256xf32>
    %c1_111 = arith.constant 1 : index
    %c7_112 = arith.constant 7 : index
    %238 = memref.load %arg5[%c1_111, %c7_112] : memref<16x8xf32, #tpu.memory_space<smem>>
    %239 = vector.broadcast %238 : f32 to vector<8x256xf32>
    %240 = arith.mulf %177, %239 : vector<8x256xf32>
    %241 = arith.addf %219, %222 : vector<8x256xf32>
    %242 = arith.addf %225, %228 : vector<8x256xf32>
    %243 = arith.addf %231, %234 : vector<8x256xf32>
    %244 = arith.addf %237, %240 : vector<8x256xf32>
    %245 = arith.addf %241, %242 : vector<8x256xf32>
    %246 = arith.addf %243, %244 : vector<8x256xf32>
    %247 = arith.addf %245, %246 : vector<8x256xf32>
    %c1_113 = arith.constant 1 : index
    %248 = memref.load %arg6[%c1_113] : memref<16xf32, #tpu.memory_space<smem>>
    %249 = vector.broadcast %248 : f32 to vector<8x256xf32>
    %250 = arith.addf %247, %249 : vector<8x256xf32>
    %cst_114 = arith.constant 0.000000e+00 : f32
    %251 = vector.broadcast %cst_114 : f32 to vector<8x256xf32>
    %252 = arith.maximumf %250, %251 : vector<8x256xf32>
    %c0_115 = arith.constant 0 : index
    %c1_116 = arith.constant 1 : index
    %253 = memref.load %arg7[%c0_115, %c1_116] : memref<1x16xf32, #tpu.memory_space<smem>>
    %254 = vector.broadcast %253 : f32 to vector<8x256xf32>
    %255 = arith.mulf %252, %254 : vector<8x256xf32>
    %c2_117 = arith.constant 2 : index
    %c0_118 = arith.constant 0 : index
    %256 = memref.load %arg5[%c2_117, %c0_118] : memref<16x8xf32, #tpu.memory_space<smem>>
    %257 = vector.broadcast %256 : f32 to vector<8x256xf32>
    %258 = arith.mulf %37, %257 : vector<8x256xf32>
    %c2_119 = arith.constant 2 : index
    %c1_120 = arith.constant 1 : index
    %259 = memref.load %arg5[%c2_119, %c1_120] : memref<16x8xf32, #tpu.memory_space<smem>>
    %260 = vector.broadcast %259 : f32 to vector<8x256xf32>
    %261 = arith.mulf %57, %260 : vector<8x256xf32>
    %c2_121 = arith.constant 2 : index
    %c2_122 = arith.constant 2 : index
    %262 = memref.load %arg5[%c2_121, %c2_122] : memref<16x8xf32, #tpu.memory_space<smem>>
    %263 = vector.broadcast %262 : f32 to vector<8x256xf32>
    %264 = arith.mulf %77, %263 : vector<8x256xf32>
    %c2_123 = arith.constant 2 : index
    %c3_124 = arith.constant 3 : index
    %265 = memref.load %arg5[%c2_123, %c3_124] : memref<16x8xf32, #tpu.memory_space<smem>>
    %266 = vector.broadcast %265 : f32 to vector<8x256xf32>
    %267 = arith.mulf %97, %266 : vector<8x256xf32>
    %c2_125 = arith.constant 2 : index
    %c4_126 = arith.constant 4 : index
    %268 = memref.load %arg5[%c2_125, %c4_126] : memref<16x8xf32, #tpu.memory_space<smem>>
    %269 = vector.broadcast %268 : f32 to vector<8x256xf32>
    %270 = arith.mulf %117, %269 : vector<8x256xf32>
    %c2_127 = arith.constant 2 : index
    %c5_128 = arith.constant 5 : index
    %271 = memref.load %arg5[%c2_127, %c5_128] : memref<16x8xf32, #tpu.memory_space<smem>>
    %272 = vector.broadcast %271 : f32 to vector<8x256xf32>
    %273 = arith.mulf %137, %272 : vector<8x256xf32>
    %c2_129 = arith.constant 2 : index
    %c6_130 = arith.constant 6 : index
    %274 = memref.load %arg5[%c2_129, %c6_130] : memref<16x8xf32, #tpu.memory_space<smem>>
    %275 = vector.broadcast %274 : f32 to vector<8x256xf32>
    %276 = arith.mulf %157, %275 : vector<8x256xf32>
    %c2_131 = arith.constant 2 : index
    %c7_132 = arith.constant 7 : index
    %277 = memref.load %arg5[%c2_131, %c7_132] : memref<16x8xf32, #tpu.memory_space<smem>>
    %278 = vector.broadcast %277 : f32 to vector<8x256xf32>
    %279 = arith.mulf %177, %278 : vector<8x256xf32>
    %280 = arith.addf %258, %261 : vector<8x256xf32>
    %281 = arith.addf %264, %267 : vector<8x256xf32>
    %282 = arith.addf %270, %273 : vector<8x256xf32>
    %283 = arith.addf %276, %279 : vector<8x256xf32>
    %284 = arith.addf %280, %281 : vector<8x256xf32>
    %285 = arith.addf %282, %283 : vector<8x256xf32>
    %286 = arith.addf %284, %285 : vector<8x256xf32>
    %c2_133 = arith.constant 2 : index
    %287 = memref.load %arg6[%c2_133] : memref<16xf32, #tpu.memory_space<smem>>
    %288 = vector.broadcast %287 : f32 to vector<8x256xf32>
    %289 = arith.addf %286, %288 : vector<8x256xf32>
    %cst_134 = arith.constant 0.000000e+00 : f32
    %290 = vector.broadcast %cst_134 : f32 to vector<8x256xf32>
    %291 = arith.maximumf %289, %290 : vector<8x256xf32>
    %c0_135 = arith.constant 0 : index
    %c2_136 = arith.constant 2 : index
    %292 = memref.load %arg7[%c0_135, %c2_136] : memref<1x16xf32, #tpu.memory_space<smem>>
    %293 = vector.broadcast %292 : f32 to vector<8x256xf32>
    %294 = arith.mulf %291, %293 : vector<8x256xf32>
    %c3_137 = arith.constant 3 : index
    %c0_138 = arith.constant 0 : index
    %295 = memref.load %arg5[%c3_137, %c0_138] : memref<16x8xf32, #tpu.memory_space<smem>>
    %296 = vector.broadcast %295 : f32 to vector<8x256xf32>
    %297 = arith.mulf %37, %296 : vector<8x256xf32>
    %c3_139 = arith.constant 3 : index
    %c1_140 = arith.constant 1 : index
    %298 = memref.load %arg5[%c3_139, %c1_140] : memref<16x8xf32, #tpu.memory_space<smem>>
    %299 = vector.broadcast %298 : f32 to vector<8x256xf32>
    %300 = arith.mulf %57, %299 : vector<8x256xf32>
    %c3_141 = arith.constant 3 : index
    %c2_142 = arith.constant 2 : index
    %301 = memref.load %arg5[%c3_141, %c2_142] : memref<16x8xf32, #tpu.memory_space<smem>>
    %302 = vector.broadcast %301 : f32 to vector<8x256xf32>
    %303 = arith.mulf %77, %302 : vector<8x256xf32>
    %c3_143 = arith.constant 3 : index
    %c3_144 = arith.constant 3 : index
    %304 = memref.load %arg5[%c3_143, %c3_144] : memref<16x8xf32, #tpu.memory_space<smem>>
    %305 = vector.broadcast %304 : f32 to vector<8x256xf32>
    %306 = arith.mulf %97, %305 : vector<8x256xf32>
    %c3_145 = arith.constant 3 : index
    %c4_146 = arith.constant 4 : index
    %307 = memref.load %arg5[%c3_145, %c4_146] : memref<16x8xf32, #tpu.memory_space<smem>>
    %308 = vector.broadcast %307 : f32 to vector<8x256xf32>
    %309 = arith.mulf %117, %308 : vector<8x256xf32>
    %c3_147 = arith.constant 3 : index
    %c5_148 = arith.constant 5 : index
    %310 = memref.load %arg5[%c3_147, %c5_148] : memref<16x8xf32, #tpu.memory_space<smem>>
    %311 = vector.broadcast %310 : f32 to vector<8x256xf32>
    %312 = arith.mulf %137, %311 : vector<8x256xf32>
    %c3_149 = arith.constant 3 : index
    %c6_150 = arith.constant 6 : index
    %313 = memref.load %arg5[%c3_149, %c6_150] : memref<16x8xf32, #tpu.memory_space<smem>>
    %314 = vector.broadcast %313 : f32 to vector<8x256xf32>
    %315 = arith.mulf %157, %314 : vector<8x256xf32>
    %c3_151 = arith.constant 3 : index
    %c7_152 = arith.constant 7 : index
    %316 = memref.load %arg5[%c3_151, %c7_152] : memref<16x8xf32, #tpu.memory_space<smem>>
    %317 = vector.broadcast %316 : f32 to vector<8x256xf32>
    %318 = arith.mulf %177, %317 : vector<8x256xf32>
    %319 = arith.addf %297, %300 : vector<8x256xf32>
    %320 = arith.addf %303, %306 : vector<8x256xf32>
    %321 = arith.addf %309, %312 : vector<8x256xf32>
    %322 = arith.addf %315, %318 : vector<8x256xf32>
    %323 = arith.addf %319, %320 : vector<8x256xf32>
    %324 = arith.addf %321, %322 : vector<8x256xf32>
    %325 = arith.addf %323, %324 : vector<8x256xf32>
    %c3_153 = arith.constant 3 : index
    %326 = memref.load %arg6[%c3_153] : memref<16xf32, #tpu.memory_space<smem>>
    %327 = vector.broadcast %326 : f32 to vector<8x256xf32>
    %328 = arith.addf %325, %327 : vector<8x256xf32>
    %cst_154 = arith.constant 0.000000e+00 : f32
    %329 = vector.broadcast %cst_154 : f32 to vector<8x256xf32>
    %330 = arith.maximumf %328, %329 : vector<8x256xf32>
    %c0_155 = arith.constant 0 : index
    %c3_156 = arith.constant 3 : index
    %331 = memref.load %arg7[%c0_155, %c3_156] : memref<1x16xf32, #tpu.memory_space<smem>>
    %332 = vector.broadcast %331 : f32 to vector<8x256xf32>
    %333 = arith.mulf %330, %332 : vector<8x256xf32>
    %c4_157 = arith.constant 4 : index
    %c0_158 = arith.constant 0 : index
    %334 = memref.load %arg5[%c4_157, %c0_158] : memref<16x8xf32, #tpu.memory_space<smem>>
    %335 = vector.broadcast %334 : f32 to vector<8x256xf32>
    %336 = arith.mulf %37, %335 : vector<8x256xf32>
    %c4_159 = arith.constant 4 : index
    %c1_160 = arith.constant 1 : index
    %337 = memref.load %arg5[%c4_159, %c1_160] : memref<16x8xf32, #tpu.memory_space<smem>>
    %338 = vector.broadcast %337 : f32 to vector<8x256xf32>
    %339 = arith.mulf %57, %338 : vector<8x256xf32>
    %c4_161 = arith.constant 4 : index
    %c2_162 = arith.constant 2 : index
    %340 = memref.load %arg5[%c4_161, %c2_162] : memref<16x8xf32, #tpu.memory_space<smem>>
    %341 = vector.broadcast %340 : f32 to vector<8x256xf32>
    %342 = arith.mulf %77, %341 : vector<8x256xf32>
    %c4_163 = arith.constant 4 : index
    %c3_164 = arith.constant 3 : index
    %343 = memref.load %arg5[%c4_163, %c3_164] : memref<16x8xf32, #tpu.memory_space<smem>>
    %344 = vector.broadcast %343 : f32 to vector<8x256xf32>
    %345 = arith.mulf %97, %344 : vector<8x256xf32>
    %c4_165 = arith.constant 4 : index
    %c4_166 = arith.constant 4 : index
    %346 = memref.load %arg5[%c4_165, %c4_166] : memref<16x8xf32, #tpu.memory_space<smem>>
    %347 = vector.broadcast %346 : f32 to vector<8x256xf32>
    %348 = arith.mulf %117, %347 : vector<8x256xf32>
    %c4_167 = arith.constant 4 : index
    %c5_168 = arith.constant 5 : index
    %349 = memref.load %arg5[%c4_167, %c5_168] : memref<16x8xf32, #tpu.memory_space<smem>>
    %350 = vector.broadcast %349 : f32 to vector<8x256xf32>
    %351 = arith.mulf %137, %350 : vector<8x256xf32>
    %c4_169 = arith.constant 4 : index
    %c6_170 = arith.constant 6 : index
    %352 = memref.load %arg5[%c4_169, %c6_170] : memref<16x8xf32, #tpu.memory_space<smem>>
    %353 = vector.broadcast %352 : f32 to vector<8x256xf32>
    %354 = arith.mulf %157, %353 : vector<8x256xf32>
    %c4_171 = arith.constant 4 : index
    %c7_172 = arith.constant 7 : index
    %355 = memref.load %arg5[%c4_171, %c7_172] : memref<16x8xf32, #tpu.memory_space<smem>>
    %356 = vector.broadcast %355 : f32 to vector<8x256xf32>
    %357 = arith.mulf %177, %356 : vector<8x256xf32>
    %358 = arith.addf %336, %339 : vector<8x256xf32>
    %359 = arith.addf %342, %345 : vector<8x256xf32>
    %360 = arith.addf %348, %351 : vector<8x256xf32>
    %361 = arith.addf %354, %357 : vector<8x256xf32>
    %362 = arith.addf %358, %359 : vector<8x256xf32>
    %363 = arith.addf %360, %361 : vector<8x256xf32>
    %364 = arith.addf %362, %363 : vector<8x256xf32>
    %c4_173 = arith.constant 4 : index
    %365 = memref.load %arg6[%c4_173] : memref<16xf32, #tpu.memory_space<smem>>
    %366 = vector.broadcast %365 : f32 to vector<8x256xf32>
    %367 = arith.addf %364, %366 : vector<8x256xf32>
    %cst_174 = arith.constant 0.000000e+00 : f32
    %368 = vector.broadcast %cst_174 : f32 to vector<8x256xf32>
    %369 = arith.maximumf %367, %368 : vector<8x256xf32>
    %c0_175 = arith.constant 0 : index
    %c4_176 = arith.constant 4 : index
    %370 = memref.load %arg7[%c0_175, %c4_176] : memref<1x16xf32, #tpu.memory_space<smem>>
    %371 = vector.broadcast %370 : f32 to vector<8x256xf32>
    %372 = arith.mulf %369, %371 : vector<8x256xf32>
    %373 = arith.addf %216, %372 : vector<8x256xf32>
    %c5_177 = arith.constant 5 : index
    %c0_178 = arith.constant 0 : index
    %374 = memref.load %arg5[%c5_177, %c0_178] : memref<16x8xf32, #tpu.memory_space<smem>>
    %375 = vector.broadcast %374 : f32 to vector<8x256xf32>
    %376 = arith.mulf %37, %375 : vector<8x256xf32>
    %c5_179 = arith.constant 5 : index
    %c1_180 = arith.constant 1 : index
    %377 = memref.load %arg5[%c5_179, %c1_180] : memref<16x8xf32, #tpu.memory_space<smem>>
    %378 = vector.broadcast %377 : f32 to vector<8x256xf32>
    %379 = arith.mulf %57, %378 : vector<8x256xf32>
    %c5_181 = arith.constant 5 : index
    %c2_182 = arith.constant 2 : index
    %380 = memref.load %arg5[%c5_181, %c2_182] : memref<16x8xf32, #tpu.memory_space<smem>>
    %381 = vector.broadcast %380 : f32 to vector<8x256xf32>
    %382 = arith.mulf %77, %381 : vector<8x256xf32>
    %c5_183 = arith.constant 5 : index
    %c3_184 = arith.constant 3 : index
    %383 = memref.load %arg5[%c5_183, %c3_184] : memref<16x8xf32, #tpu.memory_space<smem>>
    %384 = vector.broadcast %383 : f32 to vector<8x256xf32>
    %385 = arith.mulf %97, %384 : vector<8x256xf32>
    %c5_185 = arith.constant 5 : index
    %c4_186 = arith.constant 4 : index
    %386 = memref.load %arg5[%c5_185, %c4_186] : memref<16x8xf32, #tpu.memory_space<smem>>
    %387 = vector.broadcast %386 : f32 to vector<8x256xf32>
    %388 = arith.mulf %117, %387 : vector<8x256xf32>
    %c5_187 = arith.constant 5 : index
    %c5_188 = arith.constant 5 : index
    %389 = memref.load %arg5[%c5_187, %c5_188] : memref<16x8xf32, #tpu.memory_space<smem>>
    %390 = vector.broadcast %389 : f32 to vector<8x256xf32>
    %391 = arith.mulf %137, %390 : vector<8x256xf32>
    %c5_189 = arith.constant 5 : index
    %c6_190 = arith.constant 6 : index
    %392 = memref.load %arg5[%c5_189, %c6_190] : memref<16x8xf32, #tpu.memory_space<smem>>
    %393 = vector.broadcast %392 : f32 to vector<8x256xf32>
    %394 = arith.mulf %157, %393 : vector<8x256xf32>
    %c5_191 = arith.constant 5 : index
    %c7_192 = arith.constant 7 : index
    %395 = memref.load %arg5[%c5_191, %c7_192] : memref<16x8xf32, #tpu.memory_space<smem>>
    %396 = vector.broadcast %395 : f32 to vector<8x256xf32>
    %397 = arith.mulf %177, %396 : vector<8x256xf32>
    %398 = arith.addf %376, %379 : vector<8x256xf32>
    %399 = arith.addf %382, %385 : vector<8x256xf32>
    %400 = arith.addf %388, %391 : vector<8x256xf32>
    %401 = arith.addf %394, %397 : vector<8x256xf32>
    %402 = arith.addf %398, %399 : vector<8x256xf32>
    %403 = arith.addf %400, %401 : vector<8x256xf32>
    %404 = arith.addf %402, %403 : vector<8x256xf32>
    %c5_193 = arith.constant 5 : index
    %405 = memref.load %arg6[%c5_193] : memref<16xf32, #tpu.memory_space<smem>>
    %406 = vector.broadcast %405 : f32 to vector<8x256xf32>
    %407 = arith.addf %404, %406 : vector<8x256xf32>
    %cst_194 = arith.constant 0.000000e+00 : f32
    %408 = vector.broadcast %cst_194 : f32 to vector<8x256xf32>
    %409 = arith.maximumf %407, %408 : vector<8x256xf32>
    %c0_195 = arith.constant 0 : index
    %c5_196 = arith.constant 5 : index
    %410 = memref.load %arg7[%c0_195, %c5_196] : memref<1x16xf32, #tpu.memory_space<smem>>
    %411 = vector.broadcast %410 : f32 to vector<8x256xf32>
    %412 = arith.mulf %409, %411 : vector<8x256xf32>
    %413 = arith.addf %255, %412 : vector<8x256xf32>
    %c6_197 = arith.constant 6 : index
    %c0_198 = arith.constant 0 : index
    %414 = memref.load %arg5[%c6_197, %c0_198] : memref<16x8xf32, #tpu.memory_space<smem>>
    %415 = vector.broadcast %414 : f32 to vector<8x256xf32>
    %416 = arith.mulf %37, %415 : vector<8x256xf32>
    %c6_199 = arith.constant 6 : index
    %c1_200 = arith.constant 1 : index
    %417 = memref.load %arg5[%c6_199, %c1_200] : memref<16x8xf32, #tpu.memory_space<smem>>
    %418 = vector.broadcast %417 : f32 to vector<8x256xf32>
    %419 = arith.mulf %57, %418 : vector<8x256xf32>
    %c6_201 = arith.constant 6 : index
    %c2_202 = arith.constant 2 : index
    %420 = memref.load %arg5[%c6_201, %c2_202] : memref<16x8xf32, #tpu.memory_space<smem>>
    %421 = vector.broadcast %420 : f32 to vector<8x256xf32>
    %422 = arith.mulf %77, %421 : vector<8x256xf32>
    %c6_203 = arith.constant 6 : index
    %c3_204 = arith.constant 3 : index
    %423 = memref.load %arg5[%c6_203, %c3_204] : memref<16x8xf32, #tpu.memory_space<smem>>
    %424 = vector.broadcast %423 : f32 to vector<8x256xf32>
    %425 = arith.mulf %97, %424 : vector<8x256xf32>
    %c6_205 = arith.constant 6 : index
    %c4_206 = arith.constant 4 : index
    %426 = memref.load %arg5[%c6_205, %c4_206] : memref<16x8xf32, #tpu.memory_space<smem>>
    %427 = vector.broadcast %426 : f32 to vector<8x256xf32>
    %428 = arith.mulf %117, %427 : vector<8x256xf32>
    %c6_207 = arith.constant 6 : index
    %c5_208 = arith.constant 5 : index
    %429 = memref.load %arg5[%c6_207, %c5_208] : memref<16x8xf32, #tpu.memory_space<smem>>
    %430 = vector.broadcast %429 : f32 to vector<8x256xf32>
    %431 = arith.mulf %137, %430 : vector<8x256xf32>
    %c6_209 = arith.constant 6 : index
    %c6_210 = arith.constant 6 : index
    %432 = memref.load %arg5[%c6_209, %c6_210] : memref<16x8xf32, #tpu.memory_space<smem>>
    %433 = vector.broadcast %432 : f32 to vector<8x256xf32>
    %434 = arith.mulf %157, %433 : vector<8x256xf32>
    %c6_211 = arith.constant 6 : index
    %c7_212 = arith.constant 7 : index
    %435 = memref.load %arg5[%c6_211, %c7_212] : memref<16x8xf32, #tpu.memory_space<smem>>
    %436 = vector.broadcast %435 : f32 to vector<8x256xf32>
    %437 = arith.mulf %177, %436 : vector<8x256xf32>
    %438 = arith.addf %416, %419 : vector<8x256xf32>
    %439 = arith.addf %422, %425 : vector<8x256xf32>
    %440 = arith.addf %428, %431 : vector<8x256xf32>
    %441 = arith.addf %434, %437 : vector<8x256xf32>
    %442 = arith.addf %438, %439 : vector<8x256xf32>
    %443 = arith.addf %440, %441 : vector<8x256xf32>
    %444 = arith.addf %442, %443 : vector<8x256xf32>
    %c6_213 = arith.constant 6 : index
    %445 = memref.load %arg6[%c6_213] : memref<16xf32, #tpu.memory_space<smem>>
    %446 = vector.broadcast %445 : f32 to vector<8x256xf32>
    %447 = arith.addf %444, %446 : vector<8x256xf32>
    %cst_214 = arith.constant 0.000000e+00 : f32
    %448 = vector.broadcast %cst_214 : f32 to vector<8x256xf32>
    %449 = arith.maximumf %447, %448 : vector<8x256xf32>
    %c0_215 = arith.constant 0 : index
    %c6_216 = arith.constant 6 : index
    %450 = memref.load %arg7[%c0_215, %c6_216] : memref<1x16xf32, #tpu.memory_space<smem>>
    %451 = vector.broadcast %450 : f32 to vector<8x256xf32>
    %452 = arith.mulf %449, %451 : vector<8x256xf32>
    %453 = arith.addf %294, %452 : vector<8x256xf32>
    %c7_217 = arith.constant 7 : index
    %c0_218 = arith.constant 0 : index
    %454 = memref.load %arg5[%c7_217, %c0_218] : memref<16x8xf32, #tpu.memory_space<smem>>
    %455 = vector.broadcast %454 : f32 to vector<8x256xf32>
    %456 = arith.mulf %37, %455 : vector<8x256xf32>
    %c7_219 = arith.constant 7 : index
    %c1_220 = arith.constant 1 : index
    %457 = memref.load %arg5[%c7_219, %c1_220] : memref<16x8xf32, #tpu.memory_space<smem>>
    %458 = vector.broadcast %457 : f32 to vector<8x256xf32>
    %459 = arith.mulf %57, %458 : vector<8x256xf32>
    %c7_221 = arith.constant 7 : index
    %c2_222 = arith.constant 2 : index
    %460 = memref.load %arg5[%c7_221, %c2_222] : memref<16x8xf32, #tpu.memory_space<smem>>
    %461 = vector.broadcast %460 : f32 to vector<8x256xf32>
    %462 = arith.mulf %77, %461 : vector<8x256xf32>
    %c7_223 = arith.constant 7 : index
    %c3_224 = arith.constant 3 : index
    %463 = memref.load %arg5[%c7_223, %c3_224] : memref<16x8xf32, #tpu.memory_space<smem>>
    %464 = vector.broadcast %463 : f32 to vector<8x256xf32>
    %465 = arith.mulf %97, %464 : vector<8x256xf32>
    %c7_225 = arith.constant 7 : index
    %c4_226 = arith.constant 4 : index
    %466 = memref.load %arg5[%c7_225, %c4_226] : memref<16x8xf32, #tpu.memory_space<smem>>
    %467 = vector.broadcast %466 : f32 to vector<8x256xf32>
    %468 = arith.mulf %117, %467 : vector<8x256xf32>
    %c7_227 = arith.constant 7 : index
    %c5_228 = arith.constant 5 : index
    %469 = memref.load %arg5[%c7_227, %c5_228] : memref<16x8xf32, #tpu.memory_space<smem>>
    %470 = vector.broadcast %469 : f32 to vector<8x256xf32>
    %471 = arith.mulf %137, %470 : vector<8x256xf32>
    %c7_229 = arith.constant 7 : index
    %c6_230 = arith.constant 6 : index
    %472 = memref.load %arg5[%c7_229, %c6_230] : memref<16x8xf32, #tpu.memory_space<smem>>
    %473 = vector.broadcast %472 : f32 to vector<8x256xf32>
    %474 = arith.mulf %157, %473 : vector<8x256xf32>
    %c7_231 = arith.constant 7 : index
    %c7_232 = arith.constant 7 : index
    %475 = memref.load %arg5[%c7_231, %c7_232] : memref<16x8xf32, #tpu.memory_space<smem>>
    %476 = vector.broadcast %475 : f32 to vector<8x256xf32>
    %477 = arith.mulf %177, %476 : vector<8x256xf32>
    %478 = arith.addf %456, %459 : vector<8x256xf32>
    %479 = arith.addf %462, %465 : vector<8x256xf32>
    %480 = arith.addf %468, %471 : vector<8x256xf32>
    %481 = arith.addf %474, %477 : vector<8x256xf32>
    %482 = arith.addf %478, %479 : vector<8x256xf32>
    %483 = arith.addf %480, %481 : vector<8x256xf32>
    %484 = arith.addf %482, %483 : vector<8x256xf32>
    %c7_233 = arith.constant 7 : index
    %485 = memref.load %arg6[%c7_233] : memref<16xf32, #tpu.memory_space<smem>>
    %486 = vector.broadcast %485 : f32 to vector<8x256xf32>
    %487 = arith.addf %484, %486 : vector<8x256xf32>
    %cst_234 = arith.constant 0.000000e+00 : f32
    %488 = vector.broadcast %cst_234 : f32 to vector<8x256xf32>
    %489 = arith.maximumf %487, %488 : vector<8x256xf32>
    %c0_235 = arith.constant 0 : index
    %c7_236 = arith.constant 7 : index
    %490 = memref.load %arg7[%c0_235, %c7_236] : memref<1x16xf32, #tpu.memory_space<smem>>
    %491 = vector.broadcast %490 : f32 to vector<8x256xf32>
    %492 = arith.mulf %489, %491 : vector<8x256xf32>
    %493 = arith.addf %333, %492 : vector<8x256xf32>
    %c8 = arith.constant 8 : index
    %c0_237 = arith.constant 0 : index
    %494 = memref.load %arg5[%c8, %c0_237] : memref<16x8xf32, #tpu.memory_space<smem>>
    %495 = vector.broadcast %494 : f32 to vector<8x256xf32>
    %496 = arith.mulf %37, %495 : vector<8x256xf32>
    %c8_238 = arith.constant 8 : index
    %c1_239 = arith.constant 1 : index
    %497 = memref.load %arg5[%c8_238, %c1_239] : memref<16x8xf32, #tpu.memory_space<smem>>
    %498 = vector.broadcast %497 : f32 to vector<8x256xf32>
    %499 = arith.mulf %57, %498 : vector<8x256xf32>
    %c8_240 = arith.constant 8 : index
    %c2_241 = arith.constant 2 : index
    %500 = memref.load %arg5[%c8_240, %c2_241] : memref<16x8xf32, #tpu.memory_space<smem>>
    %501 = vector.broadcast %500 : f32 to vector<8x256xf32>
    %502 = arith.mulf %77, %501 : vector<8x256xf32>
    %c8_242 = arith.constant 8 : index
    %c3_243 = arith.constant 3 : index
    %503 = memref.load %arg5[%c8_242, %c3_243] : memref<16x8xf32, #tpu.memory_space<smem>>
    %504 = vector.broadcast %503 : f32 to vector<8x256xf32>
    %505 = arith.mulf %97, %504 : vector<8x256xf32>
    %c8_244 = arith.constant 8 : index
    %c4_245 = arith.constant 4 : index
    %506 = memref.load %arg5[%c8_244, %c4_245] : memref<16x8xf32, #tpu.memory_space<smem>>
    %507 = vector.broadcast %506 : f32 to vector<8x256xf32>
    %508 = arith.mulf %117, %507 : vector<8x256xf32>
    %c8_246 = arith.constant 8 : index
    %c5_247 = arith.constant 5 : index
    %509 = memref.load %arg5[%c8_246, %c5_247] : memref<16x8xf32, #tpu.memory_space<smem>>
    %510 = vector.broadcast %509 : f32 to vector<8x256xf32>
    %511 = arith.mulf %137, %510 : vector<8x256xf32>
    %c8_248 = arith.constant 8 : index
    %c6_249 = arith.constant 6 : index
    %512 = memref.load %arg5[%c8_248, %c6_249] : memref<16x8xf32, #tpu.memory_space<smem>>
    %513 = vector.broadcast %512 : f32 to vector<8x256xf32>
    %514 = arith.mulf %157, %513 : vector<8x256xf32>
    %c8_250 = arith.constant 8 : index
    %c7_251 = arith.constant 7 : index
    %515 = memref.load %arg5[%c8_250, %c7_251] : memref<16x8xf32, #tpu.memory_space<smem>>
    %516 = vector.broadcast %515 : f32 to vector<8x256xf32>
    %517 = arith.mulf %177, %516 : vector<8x256xf32>
    %518 = arith.addf %496, %499 : vector<8x256xf32>
    %519 = arith.addf %502, %505 : vector<8x256xf32>
    %520 = arith.addf %508, %511 : vector<8x256xf32>
    %521 = arith.addf %514, %517 : vector<8x256xf32>
    %522 = arith.addf %518, %519 : vector<8x256xf32>
    %523 = arith.addf %520, %521 : vector<8x256xf32>
    %524 = arith.addf %522, %523 : vector<8x256xf32>
    %c8_252 = arith.constant 8 : index
    %525 = memref.load %arg6[%c8_252] : memref<16xf32, #tpu.memory_space<smem>>
    %526 = vector.broadcast %525 : f32 to vector<8x256xf32>
    %527 = arith.addf %524, %526 : vector<8x256xf32>
    %cst_253 = arith.constant 0.000000e+00 : f32
    %528 = vector.broadcast %cst_253 : f32 to vector<8x256xf32>
    %529 = arith.maximumf %527, %528 : vector<8x256xf32>
    %c0_254 = arith.constant 0 : index
    %c8_255 = arith.constant 8 : index
    %530 = memref.load %arg7[%c0_254, %c8_255] : memref<1x16xf32, #tpu.memory_space<smem>>
    %531 = vector.broadcast %530 : f32 to vector<8x256xf32>
    %532 = arith.mulf %529, %531 : vector<8x256xf32>
    %533 = arith.addf %373, %532 : vector<8x256xf32>
    %c9 = arith.constant 9 : index
    %c0_256 = arith.constant 0 : index
    %534 = memref.load %arg5[%c9, %c0_256] : memref<16x8xf32, #tpu.memory_space<smem>>
    %535 = vector.broadcast %534 : f32 to vector<8x256xf32>
    %536 = arith.mulf %37, %535 : vector<8x256xf32>
    %c9_257 = arith.constant 9 : index
    %c1_258 = arith.constant 1 : index
    %537 = memref.load %arg5[%c9_257, %c1_258] : memref<16x8xf32, #tpu.memory_space<smem>>
    %538 = vector.broadcast %537 : f32 to vector<8x256xf32>
    %539 = arith.mulf %57, %538 : vector<8x256xf32>
    %c9_259 = arith.constant 9 : index
    %c2_260 = arith.constant 2 : index
    %540 = memref.load %arg5[%c9_259, %c2_260] : memref<16x8xf32, #tpu.memory_space<smem>>
    %541 = vector.broadcast %540 : f32 to vector<8x256xf32>
    %542 = arith.mulf %77, %541 : vector<8x256xf32>
    %c9_261 = arith.constant 9 : index
    %c3_262 = arith.constant 3 : index
    %543 = memref.load %arg5[%c9_261, %c3_262] : memref<16x8xf32, #tpu.memory_space<smem>>
    %544 = vector.broadcast %543 : f32 to vector<8x256xf32>
    %545 = arith.mulf %97, %544 : vector<8x256xf32>
    %c9_263 = arith.constant 9 : index
    %c4_264 = arith.constant 4 : index
    %546 = memref.load %arg5[%c9_263, %c4_264] : memref<16x8xf32, #tpu.memory_space<smem>>
    %547 = vector.broadcast %546 : f32 to vector<8x256xf32>
    %548 = arith.mulf %117, %547 : vector<8x256xf32>
    %c9_265 = arith.constant 9 : index
    %c5_266 = arith.constant 5 : index
    %549 = memref.load %arg5[%c9_265, %c5_266] : memref<16x8xf32, #tpu.memory_space<smem>>
    %550 = vector.broadcast %549 : f32 to vector<8x256xf32>
    %551 = arith.mulf %137, %550 : vector<8x256xf32>
    %c9_267 = arith.constant 9 : index
    %c6_268 = arith.constant 6 : index
    %552 = memref.load %arg5[%c9_267, %c6_268] : memref<16x8xf32, #tpu.memory_space<smem>>
    %553 = vector.broadcast %552 : f32 to vector<8x256xf32>
    %554 = arith.mulf %157, %553 : vector<8x256xf32>
    %c9_269 = arith.constant 9 : index
    %c7_270 = arith.constant 7 : index
    %555 = memref.load %arg5[%c9_269, %c7_270] : memref<16x8xf32, #tpu.memory_space<smem>>
    %556 = vector.broadcast %555 : f32 to vector<8x256xf32>
    %557 = arith.mulf %177, %556 : vector<8x256xf32>
    %558 = arith.addf %536, %539 : vector<8x256xf32>
    %559 = arith.addf %542, %545 : vector<8x256xf32>
    %560 = arith.addf %548, %551 : vector<8x256xf32>
    %561 = arith.addf %554, %557 : vector<8x256xf32>
    %562 = arith.addf %558, %559 : vector<8x256xf32>
    %563 = arith.addf %560, %561 : vector<8x256xf32>
    %564 = arith.addf %562, %563 : vector<8x256xf32>
    %c9_271 = arith.constant 9 : index
    %565 = memref.load %arg6[%c9_271] : memref<16xf32, #tpu.memory_space<smem>>
    %566 = vector.broadcast %565 : f32 to vector<8x256xf32>
    %567 = arith.addf %564, %566 : vector<8x256xf32>
    %cst_272 = arith.constant 0.000000e+00 : f32
    %568 = vector.broadcast %cst_272 : f32 to vector<8x256xf32>
    %569 = arith.maximumf %567, %568 : vector<8x256xf32>
    %c0_273 = arith.constant 0 : index
    %c9_274 = arith.constant 9 : index
    %570 = memref.load %arg7[%c0_273, %c9_274] : memref<1x16xf32, #tpu.memory_space<smem>>
    %571 = vector.broadcast %570 : f32 to vector<8x256xf32>
    %572 = arith.mulf %569, %571 : vector<8x256xf32>
    %573 = arith.addf %413, %572 : vector<8x256xf32>
    %c10 = arith.constant 10 : index
    %c0_275 = arith.constant 0 : index
    %574 = memref.load %arg5[%c10, %c0_275] : memref<16x8xf32, #tpu.memory_space<smem>>
    %575 = vector.broadcast %574 : f32 to vector<8x256xf32>
    %576 = arith.mulf %37, %575 : vector<8x256xf32>
    %c10_276 = arith.constant 10 : index
    %c1_277 = arith.constant 1 : index
    %577 = memref.load %arg5[%c10_276, %c1_277] : memref<16x8xf32, #tpu.memory_space<smem>>
    %578 = vector.broadcast %577 : f32 to vector<8x256xf32>
    %579 = arith.mulf %57, %578 : vector<8x256xf32>
    %c10_278 = arith.constant 10 : index
    %c2_279 = arith.constant 2 : index
    %580 = memref.load %arg5[%c10_278, %c2_279] : memref<16x8xf32, #tpu.memory_space<smem>>
    %581 = vector.broadcast %580 : f32 to vector<8x256xf32>
    %582 = arith.mulf %77, %581 : vector<8x256xf32>
    %c10_280 = arith.constant 10 : index
    %c3_281 = arith.constant 3 : index
    %583 = memref.load %arg5[%c10_280, %c3_281] : memref<16x8xf32, #tpu.memory_space<smem>>
    %584 = vector.broadcast %583 : f32 to vector<8x256xf32>
    %585 = arith.mulf %97, %584 : vector<8x256xf32>
    %c10_282 = arith.constant 10 : index
    %c4_283 = arith.constant 4 : index
    %586 = memref.load %arg5[%c10_282, %c4_283] : memref<16x8xf32, #tpu.memory_space<smem>>
    %587 = vector.broadcast %586 : f32 to vector<8x256xf32>
    %588 = arith.mulf %117, %587 : vector<8x256xf32>
    %c10_284 = arith.constant 10 : index
    %c5_285 = arith.constant 5 : index
    %589 = memref.load %arg5[%c10_284, %c5_285] : memref<16x8xf32, #tpu.memory_space<smem>>
    %590 = vector.broadcast %589 : f32 to vector<8x256xf32>
    %591 = arith.mulf %137, %590 : vector<8x256xf32>
    %c10_286 = arith.constant 10 : index
    %c6_287 = arith.constant 6 : index
    %592 = memref.load %arg5[%c10_286, %c6_287] : memref<16x8xf32, #tpu.memory_space<smem>>
    %593 = vector.broadcast %592 : f32 to vector<8x256xf32>
    %594 = arith.mulf %157, %593 : vector<8x256xf32>
    %c10_288 = arith.constant 10 : index
    %c7_289 = arith.constant 7 : index
    %595 = memref.load %arg5[%c10_288, %c7_289] : memref<16x8xf32, #tpu.memory_space<smem>>
    %596 = vector.broadcast %595 : f32 to vector<8x256xf32>
    %597 = arith.mulf %177, %596 : vector<8x256xf32>
    %598 = arith.addf %576, %579 : vector<8x256xf32>
    %599 = arith.addf %582, %585 : vector<8x256xf32>
    %600 = arith.addf %588, %591 : vector<8x256xf32>
    %601 = arith.addf %594, %597 : vector<8x256xf32>
    %602 = arith.addf %598, %599 : vector<8x256xf32>
    %603 = arith.addf %600, %601 : vector<8x256xf32>
    %604 = arith.addf %602, %603 : vector<8x256xf32>
    %c10_290 = arith.constant 10 : index
    %605 = memref.load %arg6[%c10_290] : memref<16xf32, #tpu.memory_space<smem>>
    %606 = vector.broadcast %605 : f32 to vector<8x256xf32>
    %607 = arith.addf %604, %606 : vector<8x256xf32>
    %cst_291 = arith.constant 0.000000e+00 : f32
    %608 = vector.broadcast %cst_291 : f32 to vector<8x256xf32>
    %609 = arith.maximumf %607, %608 : vector<8x256xf32>
    %c0_292 = arith.constant 0 : index
    %c10_293 = arith.constant 10 : index
    %610 = memref.load %arg7[%c0_292, %c10_293] : memref<1x16xf32, #tpu.memory_space<smem>>
    %611 = vector.broadcast %610 : f32 to vector<8x256xf32>
    %612 = arith.mulf %609, %611 : vector<8x256xf32>
    %613 = arith.addf %453, %612 : vector<8x256xf32>
    %c11 = arith.constant 11 : index
    %c0_294 = arith.constant 0 : index
    %614 = memref.load %arg5[%c11, %c0_294] : memref<16x8xf32, #tpu.memory_space<smem>>
    %615 = vector.broadcast %614 : f32 to vector<8x256xf32>
    %616 = arith.mulf %37, %615 : vector<8x256xf32>
    %c11_295 = arith.constant 11 : index
    %c1_296 = arith.constant 1 : index
    %617 = memref.load %arg5[%c11_295, %c1_296] : memref<16x8xf32, #tpu.memory_space<smem>>
    %618 = vector.broadcast %617 : f32 to vector<8x256xf32>
    %619 = arith.mulf %57, %618 : vector<8x256xf32>
    %c11_297 = arith.constant 11 : index
    %c2_298 = arith.constant 2 : index
    %620 = memref.load %arg5[%c11_297, %c2_298] : memref<16x8xf32, #tpu.memory_space<smem>>
    %621 = vector.broadcast %620 : f32 to vector<8x256xf32>
    %622 = arith.mulf %77, %621 : vector<8x256xf32>
    %c11_299 = arith.constant 11 : index
    %c3_300 = arith.constant 3 : index
    %623 = memref.load %arg5[%c11_299, %c3_300] : memref<16x8xf32, #tpu.memory_space<smem>>
    %624 = vector.broadcast %623 : f32 to vector<8x256xf32>
    %625 = arith.mulf %97, %624 : vector<8x256xf32>
    %c11_301 = arith.constant 11 : index
    %c4_302 = arith.constant 4 : index
    %626 = memref.load %arg5[%c11_301, %c4_302] : memref<16x8xf32, #tpu.memory_space<smem>>
    %627 = vector.broadcast %626 : f32 to vector<8x256xf32>
    %628 = arith.mulf %117, %627 : vector<8x256xf32>
    %c11_303 = arith.constant 11 : index
    %c5_304 = arith.constant 5 : index
    %629 = memref.load %arg5[%c11_303, %c5_304] : memref<16x8xf32, #tpu.memory_space<smem>>
    %630 = vector.broadcast %629 : f32 to vector<8x256xf32>
    %631 = arith.mulf %137, %630 : vector<8x256xf32>
    %c11_305 = arith.constant 11 : index
    %c6_306 = arith.constant 6 : index
    %632 = memref.load %arg5[%c11_305, %c6_306] : memref<16x8xf32, #tpu.memory_space<smem>>
    %633 = vector.broadcast %632 : f32 to vector<8x256xf32>
    %634 = arith.mulf %157, %633 : vector<8x256xf32>
    %c11_307 = arith.constant 11 : index
    %c7_308 = arith.constant 7 : index
    %635 = memref.load %arg5[%c11_307, %c7_308] : memref<16x8xf32, #tpu.memory_space<smem>>
    %636 = vector.broadcast %635 : f32 to vector<8x256xf32>
    %637 = arith.mulf %177, %636 : vector<8x256xf32>
    %638 = arith.addf %616, %619 : vector<8x256xf32>
    %639 = arith.addf %622, %625 : vector<8x256xf32>
    %640 = arith.addf %628, %631 : vector<8x256xf32>
    %641 = arith.addf %634, %637 : vector<8x256xf32>
    %642 = arith.addf %638, %639 : vector<8x256xf32>
    %643 = arith.addf %640, %641 : vector<8x256xf32>
    %644 = arith.addf %642, %643 : vector<8x256xf32>
    %c11_309 = arith.constant 11 : index
    %645 = memref.load %arg6[%c11_309] : memref<16xf32, #tpu.memory_space<smem>>
    %646 = vector.broadcast %645 : f32 to vector<8x256xf32>
    %647 = arith.addf %644, %646 : vector<8x256xf32>
    %cst_310 = arith.constant 0.000000e+00 : f32
    %648 = vector.broadcast %cst_310 : f32 to vector<8x256xf32>
    %649 = arith.maximumf %647, %648 : vector<8x256xf32>
    %c0_311 = arith.constant 0 : index
    %c11_312 = arith.constant 11 : index
    %650 = memref.load %arg7[%c0_311, %c11_312] : memref<1x16xf32, #tpu.memory_space<smem>>
    %651 = vector.broadcast %650 : f32 to vector<8x256xf32>
    %652 = arith.mulf %649, %651 : vector<8x256xf32>
    %653 = arith.addf %493, %652 : vector<8x256xf32>
    %c12 = arith.constant 12 : index
    %c0_313 = arith.constant 0 : index
    %654 = memref.load %arg5[%c12, %c0_313] : memref<16x8xf32, #tpu.memory_space<smem>>
    %655 = vector.broadcast %654 : f32 to vector<8x256xf32>
    %656 = arith.mulf %37, %655 : vector<8x256xf32>
    %c12_314 = arith.constant 12 : index
    %c1_315 = arith.constant 1 : index
    %657 = memref.load %arg5[%c12_314, %c1_315] : memref<16x8xf32, #tpu.memory_space<smem>>
    %658 = vector.broadcast %657 : f32 to vector<8x256xf32>
    %659 = arith.mulf %57, %658 : vector<8x256xf32>
    %c12_316 = arith.constant 12 : index
    %c2_317 = arith.constant 2 : index
    %660 = memref.load %arg5[%c12_316, %c2_317] : memref<16x8xf32, #tpu.memory_space<smem>>
    %661 = vector.broadcast %660 : f32 to vector<8x256xf32>
    %662 = arith.mulf %77, %661 : vector<8x256xf32>
    %c12_318 = arith.constant 12 : index
    %c3_319 = arith.constant 3 : index
    %663 = memref.load %arg5[%c12_318, %c3_319] : memref<16x8xf32, #tpu.memory_space<smem>>
    %664 = vector.broadcast %663 : f32 to vector<8x256xf32>
    %665 = arith.mulf %97, %664 : vector<8x256xf32>
    %c12_320 = arith.constant 12 : index
    %c4_321 = arith.constant 4 : index
    %666 = memref.load %arg5[%c12_320, %c4_321] : memref<16x8xf32, #tpu.memory_space<smem>>
    %667 = vector.broadcast %666 : f32 to vector<8x256xf32>
    %668 = arith.mulf %117, %667 : vector<8x256xf32>
    %c12_322 = arith.constant 12 : index
    %c5_323 = arith.constant 5 : index
    %669 = memref.load %arg5[%c12_322, %c5_323] : memref<16x8xf32, #tpu.memory_space<smem>>
    %670 = vector.broadcast %669 : f32 to vector<8x256xf32>
    %671 = arith.mulf %137, %670 : vector<8x256xf32>
    %c12_324 = arith.constant 12 : index
    %c6_325 = arith.constant 6 : index
    %672 = memref.load %arg5[%c12_324, %c6_325] : memref<16x8xf32, #tpu.memory_space<smem>>
    %673 = vector.broadcast %672 : f32 to vector<8x256xf32>
    %674 = arith.mulf %157, %673 : vector<8x256xf32>
    %c12_326 = arith.constant 12 : index
    %c7_327 = arith.constant 7 : index
    %675 = memref.load %arg5[%c12_326, %c7_327] : memref<16x8xf32, #tpu.memory_space<smem>>
    %676 = vector.broadcast %675 : f32 to vector<8x256xf32>
    %677 = arith.mulf %177, %676 : vector<8x256xf32>
    %678 = arith.addf %656, %659 : vector<8x256xf32>
    %679 = arith.addf %662, %665 : vector<8x256xf32>
    %680 = arith.addf %668, %671 : vector<8x256xf32>
    %681 = arith.addf %674, %677 : vector<8x256xf32>
    %682 = arith.addf %678, %679 : vector<8x256xf32>
    %683 = arith.addf %680, %681 : vector<8x256xf32>
    %684 = arith.addf %682, %683 : vector<8x256xf32>
    %c12_328 = arith.constant 12 : index
    %685 = memref.load %arg6[%c12_328] : memref<16xf32, #tpu.memory_space<smem>>
    %686 = vector.broadcast %685 : f32 to vector<8x256xf32>
    %687 = arith.addf %684, %686 : vector<8x256xf32>
    %cst_329 = arith.constant 0.000000e+00 : f32
    %688 = vector.broadcast %cst_329 : f32 to vector<8x256xf32>
    %689 = arith.maximumf %687, %688 : vector<8x256xf32>
    %c0_330 = arith.constant 0 : index
    %c12_331 = arith.constant 12 : index
    %690 = memref.load %arg7[%c0_330, %c12_331] : memref<1x16xf32, #tpu.memory_space<smem>>
    %691 = vector.broadcast %690 : f32 to vector<8x256xf32>
    %692 = arith.mulf %689, %691 : vector<8x256xf32>
    %693 = arith.addf %533, %692 : vector<8x256xf32>
    %c13 = arith.constant 13 : index
    %c0_332 = arith.constant 0 : index
    %694 = memref.load %arg5[%c13, %c0_332] : memref<16x8xf32, #tpu.memory_space<smem>>
    %695 = vector.broadcast %694 : f32 to vector<8x256xf32>
    %696 = arith.mulf %37, %695 : vector<8x256xf32>
    %c13_333 = arith.constant 13 : index
    %c1_334 = arith.constant 1 : index
    %697 = memref.load %arg5[%c13_333, %c1_334] : memref<16x8xf32, #tpu.memory_space<smem>>
    %698 = vector.broadcast %697 : f32 to vector<8x256xf32>
    %699 = arith.mulf %57, %698 : vector<8x256xf32>
    %c13_335 = arith.constant 13 : index
    %c2_336 = arith.constant 2 : index
    %700 = memref.load %arg5[%c13_335, %c2_336] : memref<16x8xf32, #tpu.memory_space<smem>>
    %701 = vector.broadcast %700 : f32 to vector<8x256xf32>
    %702 = arith.mulf %77, %701 : vector<8x256xf32>
    %c13_337 = arith.constant 13 : index
    %c3_338 = arith.constant 3 : index
    %703 = memref.load %arg5[%c13_337, %c3_338] : memref<16x8xf32, #tpu.memory_space<smem>>
    %704 = vector.broadcast %703 : f32 to vector<8x256xf32>
    %705 = arith.mulf %97, %704 : vector<8x256xf32>
    %c13_339 = arith.constant 13 : index
    %c4_340 = arith.constant 4 : index
    %706 = memref.load %arg5[%c13_339, %c4_340] : memref<16x8xf32, #tpu.memory_space<smem>>
    %707 = vector.broadcast %706 : f32 to vector<8x256xf32>
    %708 = arith.mulf %117, %707 : vector<8x256xf32>
    %c13_341 = arith.constant 13 : index
    %c5_342 = arith.constant 5 : index
    %709 = memref.load %arg5[%c13_341, %c5_342] : memref<16x8xf32, #tpu.memory_space<smem>>
    %710 = vector.broadcast %709 : f32 to vector<8x256xf32>
    %711 = arith.mulf %137, %710 : vector<8x256xf32>
    %c13_343 = arith.constant 13 : index
    %c6_344 = arith.constant 6 : index
    %712 = memref.load %arg5[%c13_343, %c6_344] : memref<16x8xf32, #tpu.memory_space<smem>>
    %713 = vector.broadcast %712 : f32 to vector<8x256xf32>
    %714 = arith.mulf %157, %713 : vector<8x256xf32>
    %c13_345 = arith.constant 13 : index
    %c7_346 = arith.constant 7 : index
    %715 = memref.load %arg5[%c13_345, %c7_346] : memref<16x8xf32, #tpu.memory_space<smem>>
    %716 = vector.broadcast %715 : f32 to vector<8x256xf32>
    %717 = arith.mulf %177, %716 : vector<8x256xf32>
    %718 = arith.addf %696, %699 : vector<8x256xf32>
    %719 = arith.addf %702, %705 : vector<8x256xf32>
    %720 = arith.addf %708, %711 : vector<8x256xf32>
    %721 = arith.addf %714, %717 : vector<8x256xf32>
    %722 = arith.addf %718, %719 : vector<8x256xf32>
    %723 = arith.addf %720, %721 : vector<8x256xf32>
    %724 = arith.addf %722, %723 : vector<8x256xf32>
    %c13_347 = arith.constant 13 : index
    %725 = memref.load %arg6[%c13_347] : memref<16xf32, #tpu.memory_space<smem>>
    %726 = vector.broadcast %725 : f32 to vector<8x256xf32>
    %727 = arith.addf %724, %726 : vector<8x256xf32>
    %cst_348 = arith.constant 0.000000e+00 : f32
    %728 = vector.broadcast %cst_348 : f32 to vector<8x256xf32>
    %729 = arith.maximumf %727, %728 : vector<8x256xf32>
    %c0_349 = arith.constant 0 : index
    %c13_350 = arith.constant 13 : index
    %730 = memref.load %arg7[%c0_349, %c13_350] : memref<1x16xf32, #tpu.memory_space<smem>>
    %731 = vector.broadcast %730 : f32 to vector<8x256xf32>
    %732 = arith.mulf %729, %731 : vector<8x256xf32>
    %733 = arith.addf %573, %732 : vector<8x256xf32>
    %c14 = arith.constant 14 : index
    %c0_351 = arith.constant 0 : index
    %734 = memref.load %arg5[%c14, %c0_351] : memref<16x8xf32, #tpu.memory_space<smem>>
    %735 = vector.broadcast %734 : f32 to vector<8x256xf32>
    %736 = arith.mulf %37, %735 : vector<8x256xf32>
    %c14_352 = arith.constant 14 : index
    %c1_353 = arith.constant 1 : index
    %737 = memref.load %arg5[%c14_352, %c1_353] : memref<16x8xf32, #tpu.memory_space<smem>>
    %738 = vector.broadcast %737 : f32 to vector<8x256xf32>
    %739 = arith.mulf %57, %738 : vector<8x256xf32>
    %c14_354 = arith.constant 14 : index
    %c2_355 = arith.constant 2 : index
    %740 = memref.load %arg5[%c14_354, %c2_355] : memref<16x8xf32, #tpu.memory_space<smem>>
    %741 = vector.broadcast %740 : f32 to vector<8x256xf32>
    %742 = arith.mulf %77, %741 : vector<8x256xf32>
    %c14_356 = arith.constant 14 : index
    %c3_357 = arith.constant 3 : index
    %743 = memref.load %arg5[%c14_356, %c3_357] : memref<16x8xf32, #tpu.memory_space<smem>>
    %744 = vector.broadcast %743 : f32 to vector<8x256xf32>
    %745 = arith.mulf %97, %744 : vector<8x256xf32>
    %c14_358 = arith.constant 14 : index
    %c4_359 = arith.constant 4 : index
    %746 = memref.load %arg5[%c14_358, %c4_359] : memref<16x8xf32, #tpu.memory_space<smem>>
    %747 = vector.broadcast %746 : f32 to vector<8x256xf32>
    %748 = arith.mulf %117, %747 : vector<8x256xf32>
    %c14_360 = arith.constant 14 : index
    %c5_361 = arith.constant 5 : index
    %749 = memref.load %arg5[%c14_360, %c5_361] : memref<16x8xf32, #tpu.memory_space<smem>>
    %750 = vector.broadcast %749 : f32 to vector<8x256xf32>
    %751 = arith.mulf %137, %750 : vector<8x256xf32>
    %c14_362 = arith.constant 14 : index
    %c6_363 = arith.constant 6 : index
    %752 = memref.load %arg5[%c14_362, %c6_363] : memref<16x8xf32, #tpu.memory_space<smem>>
    %753 = vector.broadcast %752 : f32 to vector<8x256xf32>
    %754 = arith.mulf %157, %753 : vector<8x256xf32>
    %c14_364 = arith.constant 14 : index
    %c7_365 = arith.constant 7 : index
    %755 = memref.load %arg5[%c14_364, %c7_365] : memref<16x8xf32, #tpu.memory_space<smem>>
    %756 = vector.broadcast %755 : f32 to vector<8x256xf32>
    %757 = arith.mulf %177, %756 : vector<8x256xf32>
    %758 = arith.addf %736, %739 : vector<8x256xf32>
    %759 = arith.addf %742, %745 : vector<8x256xf32>
    %760 = arith.addf %748, %751 : vector<8x256xf32>
    %761 = arith.addf %754, %757 : vector<8x256xf32>
    %762 = arith.addf %758, %759 : vector<8x256xf32>
    %763 = arith.addf %760, %761 : vector<8x256xf32>
    %764 = arith.addf %762, %763 : vector<8x256xf32>
    %c14_366 = arith.constant 14 : index
    %765 = memref.load %arg6[%c14_366] : memref<16xf32, #tpu.memory_space<smem>>
    %766 = vector.broadcast %765 : f32 to vector<8x256xf32>
    %767 = arith.addf %764, %766 : vector<8x256xf32>
    %cst_367 = arith.constant 0.000000e+00 : f32
    %768 = vector.broadcast %cst_367 : f32 to vector<8x256xf32>
    %769 = arith.maximumf %767, %768 : vector<8x256xf32>
    %c0_368 = arith.constant 0 : index
    %c14_369 = arith.constant 14 : index
    %770 = memref.load %arg7[%c0_368, %c14_369] : memref<1x16xf32, #tpu.memory_space<smem>>
    %771 = vector.broadcast %770 : f32 to vector<8x256xf32>
    %772 = arith.mulf %769, %771 : vector<8x256xf32>
    %773 = arith.addf %613, %772 : vector<8x256xf32>
    %c15 = arith.constant 15 : index
    %c0_370 = arith.constant 0 : index
    %774 = memref.load %arg5[%c15, %c0_370] : memref<16x8xf32, #tpu.memory_space<smem>>
    %775 = vector.broadcast %774 : f32 to vector<8x256xf32>
    %776 = arith.mulf %37, %775 : vector<8x256xf32>
    %c15_371 = arith.constant 15 : index
    %c1_372 = arith.constant 1 : index
    %777 = memref.load %arg5[%c15_371, %c1_372] : memref<16x8xf32, #tpu.memory_space<smem>>
    %778 = vector.broadcast %777 : f32 to vector<8x256xf32>
    %779 = arith.mulf %57, %778 : vector<8x256xf32>
    %c15_373 = arith.constant 15 : index
    %c2_374 = arith.constant 2 : index
    %780 = memref.load %arg5[%c15_373, %c2_374] : memref<16x8xf32, #tpu.memory_space<smem>>
    %781 = vector.broadcast %780 : f32 to vector<8x256xf32>
    %782 = arith.mulf %77, %781 : vector<8x256xf32>
    %c15_375 = arith.constant 15 : index
    %c3_376 = arith.constant 3 : index
    %783 = memref.load %arg5[%c15_375, %c3_376] : memref<16x8xf32, #tpu.memory_space<smem>>
    %784 = vector.broadcast %783 : f32 to vector<8x256xf32>
    %785 = arith.mulf %97, %784 : vector<8x256xf32>
    %c15_377 = arith.constant 15 : index
    %c4_378 = arith.constant 4 : index
    %786 = memref.load %arg5[%c15_377, %c4_378] : memref<16x8xf32, #tpu.memory_space<smem>>
    %787 = vector.broadcast %786 : f32 to vector<8x256xf32>
    %788 = arith.mulf %117, %787 : vector<8x256xf32>
    %c15_379 = arith.constant 15 : index
    %c5_380 = arith.constant 5 : index
    %789 = memref.load %arg5[%c15_379, %c5_380] : memref<16x8xf32, #tpu.memory_space<smem>>
    %790 = vector.broadcast %789 : f32 to vector<8x256xf32>
    %791 = arith.mulf %137, %790 : vector<8x256xf32>
    %c15_381 = arith.constant 15 : index
    %c6_382 = arith.constant 6 : index
    %792 = memref.load %arg5[%c15_381, %c6_382] : memref<16x8xf32, #tpu.memory_space<smem>>
    %793 = vector.broadcast %792 : f32 to vector<8x256xf32>
    %794 = arith.mulf %157, %793 : vector<8x256xf32>
    %c15_383 = arith.constant 15 : index
    %c7_384 = arith.constant 7 : index
    %795 = memref.load %arg5[%c15_383, %c7_384] : memref<16x8xf32, #tpu.memory_space<smem>>
    %796 = vector.broadcast %795 : f32 to vector<8x256xf32>
    %797 = arith.mulf %177, %796 : vector<8x256xf32>
    %798 = arith.addf %776, %779 : vector<8x256xf32>
    %799 = arith.addf %782, %785 : vector<8x256xf32>
    %800 = arith.addf %788, %791 : vector<8x256xf32>
    %801 = arith.addf %794, %797 : vector<8x256xf32>
    %802 = arith.addf %798, %799 : vector<8x256xf32>
    %803 = arith.addf %800, %801 : vector<8x256xf32>
    %804 = arith.addf %802, %803 : vector<8x256xf32>
    %c15_385 = arith.constant 15 : index
    %805 = memref.load %arg6[%c15_385] : memref<16xf32, #tpu.memory_space<smem>>
    %806 = vector.broadcast %805 : f32 to vector<8x256xf32>
    %807 = arith.addf %804, %806 : vector<8x256xf32>
    %cst_386 = arith.constant 0.000000e+00 : f32
    %808 = vector.broadcast %cst_386 : f32 to vector<8x256xf32>
    %809 = arith.maximumf %807, %808 : vector<8x256xf32>
    %c0_387 = arith.constant 0 : index
    %c15_388 = arith.constant 15 : index
    %810 = memref.load %arg7[%c0_387, %c15_388] : memref<1x16xf32, #tpu.memory_space<smem>>
    %811 = vector.broadcast %810 : f32 to vector<8x256xf32>
    %812 = arith.mulf %809, %811 : vector<8x256xf32>
    %813 = arith.addf %653, %812 : vector<8x256xf32>
    %814 = arith.addf %693, %733 : vector<8x256xf32>
    %815 = arith.addf %773, %813 : vector<8x256xf32>
    %816 = arith.addf %814, %815 : vector<8x256xf32>
    %c0_389 = arith.constant 0 : index
    %817 = memref.load %arg8[%c0_389] : memref<1xf32, #tpu.memory_space<smem>>
    %818 = vector.broadcast %817 : f32 to vector<8x256xf32>
    %819 = arith.addf %816, %818 : vector<8x256xf32>
    %cst_390 = arith.constant 0.000000e+00 : f32
    %820 = vector.broadcast %cst_390 : f32 to vector<8x256xf32>
    %821 = arith.maximumf %819, %820 : vector<8x256xf32>
    %c0_391 = arith.constant 0 : index
    %c0_392 = arith.constant 0 : index
    %822 = vector.load %arg13[%c0_391, %c0_392] : memref<8x256xf32, #tpu.memory_space<vmem>>, vector<8x256xf32>
    tpu.vector_store %arg13[%c0_391, %c0_392], %821 {strides = array<i32>} : memref<8x256xf32, #tpu.memory_space<vmem>>, vector<8x256xf32>,
    %823 = arith.truncf %821 : vector<8x256xf32> to vector<8x256xbf16>
    %c0_393 = arith.constant 0 : index
    %c0_394 = arith.constant 0 : index
    %824 = vector.load %arg9[%c0_393, %c0_394] : memref<256x64xbf16, #tpu.memory_space<vmem>>, vector<256x64xbf16>
    %cst_395 = arith.constant dense<0.000000e+00> : vector<8x64xf32>
    %825 = tpu.matmul %823, %824, %cst_395 {dimension_numbers = #tpu.dot_dimension_numbers<[1], [0], [0], [1], [0, 0, 1, 1], [], []>} : vector<8x256xbf16>, vector<256x64xbf16>, vector<8x64xf32> -> vector<8x64xf32>
    %c0_396 = arith.constant 0 : index
    %c0_397 = arith.constant 0 : index
    %826 = vector.load %arg10[%c0_396, %c0_397] : memref<1x64xf32, #tpu.memory_space<vmem>>, vector<1x64xf32>
    %827 = vector.broadcast %826 : vector<1x64xf32> to vector<8x64xf32>
    %828 = arith.addf %825, %827 : vector<8x64xf32>
    %cst_398 = arith.constant 0.000000e+00 : f32
    %829 = vector.broadcast %cst_398 : f32 to vector<8x64xf32>
    %830 = arith.cmpf ogt, %828, %829 : vector<8x64xf32>
    %cst_399 = arith.constant 0.00999999977 : f32
    %831 = vector.broadcast %cst_399 : f32 to vector<8x64xf32>
    %832 = arith.mulf %831, %828 : vector<8x64xf32>
    %833 = arith.select %830, %828, %832 : vector<8x64xi1>, vector<8x64xf32>
    %c0_400 = arith.constant 0 : index
    %c0_401 = arith.constant 0 : index
    %834 = vector.load %arg11[%c0_400, %c0_401] : memref<1x64xf32, #tpu.memory_space<vmem>>, vector<1x64xf32>
    %835 = vector.broadcast %834 : vector<1x64xf32> to vector<8x64xf32>
    %836 = arith.mulf %833, %835 : vector<8x64xf32>
    %cst_402 = arith.constant dense<0.000000e+00> : vector<8xf32>
    %837 = vector.multi_reduction <add>, %836, %cst_402 [1] : vector<8x64xf32> to vector<8xf32>
    %838 = vector.shape_cast %837 : vector<8xf32> to vector<8x1xf32>
    %c0_403 = arith.constant 0 : index
    %839 = memref.load %arg12[%c0_403] : memref<1xf32, #tpu.memory_space<smem>>
    %840 = vector.broadcast %839 : f32 to vector<8x1xf32>
    %841 = arith.addf %838, %840 : vector<8x1xf32>
    %cst_404 = arith.constant 0.000000e+00 : f32
    %842 = vector.broadcast %cst_404 : f32 to vector<8x1xf32>
    %843 = arith.cmpf ogt, %841, %842 : vector<8x1xf32>
    %cst_405 = arith.constant 0.00999999977 : f32
    %844 = vector.broadcast %cst_405 : f32 to vector<8x1xf32>
    %845 = arith.mulf %844, %841 : vector<8x1xf32>
    %846 = arith.select %843, %841, %845 : vector<8x1xi1>, vector<8x1xf32>
    %c0_406 = arith.constant 0 : index
    %c0_407 = arith.constant 0 : index
    %847 = vector.load %arg14[%c0_406, %c0_407] : memref<8x1xf32, #tpu.memory_space<vmem>>, vector<8x1xf32>
    tpu.vector_store %arg14[%c0_406, %c0_407], %846 {strides = array<i32>} : memref<8x1xf32, #tpu.memory_space<vmem>>, vector<8x1xf32>,
    return
  }
  func.func @transform_0(%arg0: i32) -> (i32, i32) {
    %c0_i32 = arith.constant 0 : i32
    %c0_i32_0 = arith.constant 0 : i32
    return %arg0, %c0_i32 : i32, i32
  }
  func.func @transform_1(%arg0: i32) -> (i32, i32, i32) {
    %c0_i32 = arith.constant 0 : i32
    %c0_i32_0 = arith.constant 0 : i32
    %c0_i32_1 = arith.constant 0 : i32
    return %arg0, %c0_i32, %c0_i32_0 : i32, i32, i32
  }
  func.func @transform_2(%arg0: i32) -> (i32, i32) {
    %c0_i32 = arith.constant 0 : i32
    %c0_i32_0 = arith.constant 0 : i32
    %c0_i32_1 = arith.constant 0 : i32
    return %c0_i32, %c0_i32_0 : i32, i32
  }
  func.func @transform_3(%arg0: i32) -> i32 {
    %c0_i32 = arith.constant 0 : i32
    %c0_i32_0 = arith.constant 0 : i32
    return %c0_i32 : i32
  }
  func.func @transform_4(%arg0: i32) -> (i32, i32) {
    %c0_i32 = arith.constant 0 : i32
    %c0_i32_0 = arith.constant 0 : i32
    %c0_i32_1 = arith.constant 0 : i32
    return %c0_i32, %c0_i32_0 : i32, i32
  }
  func.func @transform_5(%arg0: i32) -> i32 {
    %c0_i32 = arith.constant 0 : i32
    %c0_i32_0 = arith.constant 0 : i32
    return %c0_i32 : i32
  }
  func.func @transform_6(%arg0: i32) -> (i32, i32) {
    %c0_i32 = arith.constant 0 : i32
    %c0_i32_0 = arith.constant 0 : i32
    %c0_i32_1 = arith.constant 0 : i32
    return %c0_i32, %c0_i32_0 : i32, i32
  }
  func.func @transform_7(%arg0: i32) -> i32 {
    %c0_i32 = arith.constant 0 : i32
    %c0_i32_0 = arith.constant 0 : i32
    return %c0_i32 : i32
  }
  func.func @transform_8(%arg0: i32) -> (i32, i32) {
    %c0_i32 = arith.constant 0 : i32
    %c0_i32_0 = arith.constant 0 : i32
    %c0_i32_1 = arith.constant 0 : i32
    return %c0_i32, %c0_i32_0 : i32, i32
  }
  func.func @transform_9(%arg0: i32) -> (i32, i32) {
    %c0_i32 = arith.constant 0 : i32
    %c0_i32_0 = arith.constant 0 : i32
    %c0_i32_1 = arith.constant 0 : i32
    return %c0_i32, %c0_i32_0 : i32, i32
  }
  func.func @transform_10(%arg0: i32) -> (i32, i32) {
    %c0_i32 = arith.constant 0 : i32
    %c0_i32_0 = arith.constant 0 : i32
    %c0_i32_1 = arith.constant 0 : i32
    return %c0_i32, %c0_i32_0 : i32, i32
  }
  func.func @transform_11(%arg0: i32) -> i32 {
    %c0_i32 = arith.constant 0 : i32
    %c0_i32_0 = arith.constant 0 : i32
    return %c0_i32 : i32
  }
  func.func @transform_12(%arg0: i32) -> (i32, i32) {
    %c0_i32 = arith.constant 0 : i32
    %c0_i32_0 = arith.constant 0 : i32
    return %arg0, %c0_i32 : i32, i32
  }
  func.func @transform_13(%arg0: i32) -> (i32, i32) {
    %c0_i32 = arith.constant 0 : i32
    %c0_i32_0 = arith.constant 0 : i32
    return %arg0, %c0_i32 : i32, i32
  }
}

</mosaic_0001>

<llo_original>
// kernel: actor_forward.1
$region0: #{actor_forward.1}
  #allocation0 [shape = 'u32[]', space=smem, size = 0x4, offset = 0x4, fixed_abs, tag = 'smem constant byte address 0x4 - core index']
  #allocation1 [shape = 'u32[72,128]{1,0:T(1,128)}', space=vmem, size = 0x9000, scoped, tag = 'internal scratch']
  #allocation2 [shape = 'f32[1]{0:T(128)S(6)}', space=smem, size = 0x200, scoped, tag = 'scoped memory for actor_forward.1']
  #allocation3 [shape = 'f32[1]{0:T(128)S(6)}', space=smem, size = 0x200, scoped, tag = 'scoped memory for actor_forward.1']
  %s0 = inlined_call_operand.vmem [shape: f32[8,4], index: 0, kind: input, shape index: {}]
  %s1 = inlined_call_operand.vmem [shape: f32[8,4,256], index: 1, kind: input, shape index: {}]
  %s2 = inlined_call_operand.vmem [shape: f32[8,4], index: 2, kind: input, shape index: {}]
  %s3 = inlined_call_operand.vmem [shape: f32[8], index: 3, kind: input, shape index: {}]
  %s4 = inlined_call_operand.vmem [shape: f32[16,8], index: 4, kind: input, shape index: {}]
  %s5 = inlined_call_operand.vmem [shape: f32[16], index: 5, kind: input, shape index: {}]
  %s6 = inlined_call_operand.vmem [shape: f32[1,16], index: 6, kind: input, shape index: {}]
  %s7 = inlined_call_operand.<no memory space> [shape: f32[1], index: 7, kind: input, shape index: {}]
  %s8 = inlined_call_operand.vmem [shape: bf16[256,64], index: 8, kind: input, shape index: {}]
  %s9 = inlined_call_operand.vmem [shape: f32[1,64], index: 9, kind: input, shape index: {}]
  %s10 = inlined_call_operand.vmem [shape: f32[1,64], index: 10, kind: input, shape index: {}]
  %s11 = inlined_call_operand.<no memory space> [shape: f32[1], index: 11, kind: input, shape index: {}]
  %s12 = inlined_call_operand.vmem [shape: f32[8,256], index: 12, kind: output, shape index: {0}]
  %s13 = inlined_call_operand.vmem [shape: f32[8,1], index: 13, kind: output, shape index: {1}]
  %14 = xla_tuple %s12, %s13
  %s15 = sld [smem:[#allocation0]]
  $region86: #{actor_forward.1} parent=0
    _
  %s17 = ssub.s32 1, %s15
  %s18 = scalar_select 0, %s17, %s15
  %19 = sst [smem:[#allocation2]] %s7
  %20 = sst [smem:[#allocation3]] %s11
  $region1: #{actor_forward.1} parent=0
    #allocation4 [shape = 'u8[4096]{0}', space=smem, size = 0x1000, scoped, tag = 'input window, operand 2, single buffered']
    #allocation5 [shape = 's32[1]{0}', space=sflag, size = 0x4, scoped, tag = 'scoped memory for actor_forward.1']
    #allocation6 [shape = 'u8[512]{0}', space=smem, size = 0x200, scoped, tag = 'input window, operand 3, single buffered']
    #allocation7 [shape = 's32[1]{0}', space=sflag, size = 0x4, scoped, tag = 'scoped memory for actor_forward.1']
    #allocation8 [shape = 'u8[8192]{0}', space=smem, size = 0x2000, scoped, tag = 'input window, operand 4, single buffered']
    #allocation9 [shape = 'u8[512]{0}', space=smem, size = 0x200, scoped, tag = 'input window, operand 5, single buffered']
    #allocation10 [shape = 's32[1]{0}', space=sflag, size = 0x4, scoped, tag = 'scoped memory for actor_forward.1']
    #allocation11 [shape = 'u8[512]{0}', space=smem, size = 0x200, scoped, tag = 'input window, operand 6, single buffered']
    %21 = vsyncpa [#allocation5], 0
    %22 = vsyncpa [#allocation7], 0
    %23 = vsyncpa [#allocation10], 0
    // Predicated region
    $region2: #{actor_forward.1} parent=1 // pred_check
      _
    $region3: #{actor_forward.1} parent=1 // pred_check_branch
      %25 = sbr.rel (0) target = $region5
    $region4: #{actor_forward.1} parent=1 // pred_region
      _
    $region5: #{actor_forward.1} parent=1 // pred_fallthru
      _
    // Predicated region
    $region6: #{actor_forward.1} parent=1 // pred_check
      _
    $region7: #{actor_forward.1} parent=1 // pred_check_branch
      %27 = sbr.rel (0) target = $region9
    $region8: #{actor_forward.1} parent=1 // pred_region
      _
    $region9: #{actor_forward.1} parent=1 // pred_fallthru
      _
    // Predicated region
    $region10: #{actor_forward.1} parent=1 // pred_check
      _
    $region11: #{actor_forward.1} parent=1 // pred_check_branch
      %29 = sbr.rel (0) target = $region13
    $region12: #{actor_forward.1} parent=1 // pred_region
      %31 = vsyncadd [#allocation5], 0
      %s33 = sshll.u32 %s2, 4
      %s34 = int_to_ptr.vmem [resolvable:$true] %s33
      %36 = dma.vmem_to_smem %s34, 128, [#allocation4], [#allocation5]
    $region13: #{actor_forward.1} parent=1 // pred_fallthru
      _
    // Predicated region
    $region14: #{actor_forward.1} parent=1 // pred_check
      _
    $region15: #{actor_forward.1} parent=1 // pred_check_branch
      %38 = sbr.rel (0) target = $region17
    $region16: #{actor_forward.1} parent=1 // pred_region
      %40 = vsyncadd [#allocation7], 0
      %s42 = sshll.u32 %s3, 4
      %s43 = int_to_ptr.vmem [resolvable:$true] %s42
      %45 = dma.vmem_to_smem %s43, 16, [#allocation6], [#allocation7]
    $region17: #{actor_forward.1} parent=1 // pred_fallthru
      _
    // Predicated region
    $region18: #{actor_forward.1} parent=1 // pred_check
      _
    $region19: #{actor_forward.1} parent=1 // pred_check_branch
      %47 = sbr.rel (0) target = $region21
    $region20: #{actor_forward.1} parent=1 // pred_region
      %49 = vsyncadd [#allocation7], 0
      %s50 = sshll.u32 %s4, 4
      %s51 = int_to_ptr.vmem [resolvable:$true] %s50
      %56 = dma.vmem_to_smem %s51, 256, [#allocation8], [#allocation7], 128, 128, 8
    $region21: #{actor_forward.1} parent=1 // pred_fallthru
      _
    // Predicated region
    $region22: #{actor_forward.1} parent=1 // pred_check
      _
    $region23: #{actor_forward.1} parent=1 // pred_check_branch
      %58 = sbr.rel (0) target = $region25
    $region24: #{actor_forward.1} parent=1 // pred_region
      %60 = vsyncadd [#allocation10], 0
      %s62 = sshll.u32 %s5, 4
      %s63 = int_to_ptr.vmem [resolvable:$true] %s62
      %65 = dma.vmem_to_smem %s63, 16, [#allocation9], [#allocation10]
    $region25: #{actor_forward.1} parent=1 // pred_fallthru
      _
    // Predicated region
    $region26: #{actor_forward.1} parent=1 // pred_check
      _
    $region27: #{actor_forward.1} parent=1 // pred_check_branch
      %67 = sbr.rel (0) target = $region29
    $region28: #{actor_forward.1} parent=1 // pred_region
      %69 = vsyncadd [#allocation10], 0
      %s71 = sshll.u32 %s6, 4
      %s72 = int_to_ptr.vmem [resolvable:$true] %s71
      %74 = dma.vmem_to_smem %s72, 16, [#allocation11], [#allocation10]
    $region29: #{actor_forward.1} parent=1 // pred_fallthru
      _
    // Predicated region
    $region30: #{actor_forward.1} parent=1 // pred_check
      _
    $region31: #{actor_forward.1} parent=1 // pred_check_branch
      %76 = sbr.rel (0) target = $region33
    $region32: #{actor_forward.1} parent=1 // pred_region
      _
    $region33: #{actor_forward.1} parent=1 // pred_fallthru
      _
    // Predicated region
    $region34: #{actor_forward.1} parent=1 // pred_check
      _
    $region35: #{actor_forward.1} parent=1 // pred_check_branch
      %78 = sbr.rel (0) target = $region37
    $region36: #{actor_forward.1} parent=1 // pred_region
      _
    $region37: #{actor_forward.1} parent=1 // pred_fallthru
      _
    // Predicated region
    $region38: #{actor_forward.1} parent=1 // pred_check
      _
    $region39: #{actor_forward.1} parent=1 // pred_check_branch
      %80 = sbr.rel (0) target = $region41
    $region40: #{actor_forward.1} parent=1 // pred_region
      _
    $region41: #{actor_forward.1} parent=1 // pred_fallthru
      _
    // Predicated region
    $region42: #{actor_forward.1} parent=1 // pred_check
      _
    $region43: #{actor_forward.1} parent=1 // pred_check_branch
      %82 = sbr.rel (0) target = $region45
    $region44: #{actor_forward.1} parent=1 // pred_region
      _
    $region45: #{actor_forward.1} parent=1 // pred_fallthru
      _
    // Predicated region
    $region46: #{actor_forward.1} parent=1 // pred_check
      _
    $region47: #{actor_forward.1} parent=1 // pred_check_branch
      %84 = sbr.rel (0) target = $region49
    $region48: #{actor_forward.1} parent=1 // pred_region
      _
    $region49: #{actor_forward.1} parent=1 // pred_fallthru
      _
    // Predicated region
    $region50: #{actor_forward.1} parent=1 // pred_check
      _
    $region51: #{actor_forward.1} parent=1 // pred_check_branch
      %86 = sbr.rel (0) target = $region53
    $region52: #{actor_forward.1} parent=1 // pred_region
      %88 = dma.done [#allocation5], 128
    $region53: #{actor_forward.1} parent=1 // pred_fallthru
      _
    // Predicated region
    $region54: #{actor_forward.1} parent=1 // pred_check
      _
    $region55: #{actor_forward.1} parent=1 // pred_check_branch
      %90 = sbr.rel (0) target = $region57
    $region56: #{actor_forward.1} parent=1 // pred_region
      %92 = dma.done [#allocation7], 16
    $region57: #{actor_forward.1} parent=1 // pred_fallthru
      _
    // Predicated region
    $region58: #{actor_forward.1} parent=1 // pred_check
      _
    $region59: #{actor_forward.1} parent=1 // pred_check_branch
      %94 = sbr.rel (0) target = $region61
    $region60: #{actor_forward.1} parent=1 // pred_region
      %96 = dma.done [#allocation7], 256
    $region61: #{actor_forward.1} parent=1 // pred_fallthru
      _
    // Predicated region
    $region62: #{actor_forward.1} parent=1 // pred_check
      _
    $region63: #{actor_forward.1} parent=1 // pred_check_branch
      %98 = sbr.rel (0) target = $region65
    $region64: #{actor_forward.1} parent=1 // pred_region
      %100 = dma.done [#allocation10], 16
    $region65: #{actor_forward.1} parent=1 // pred_fallthru
      _
    // Predicated region
    $region66: #{actor_forward.1} parent=1 // pred_check
      _
    $region67: #{actor_forward.1} parent=1 // pred_check_branch
      %102 = sbr.rel (0) target = $region69
    $region68: #{actor_forward.1} parent=1 // pred_region
      %104 = dma.done [#allocation10], 16
    $region69: #{actor_forward.1} parent=1 // pred_fallthru
      _
    %105 = sfence
    %v106 = vld [vmem:[%s0] sm:$0xff]
    %vm107 = vcmask 31744
    %v108 = vsel %vm107, %v106, 0.0
    %109 = vadd.xlane.f32.xlu0 %v108
    %v110 = vpop.xlane.xlu0 %109
    %v111 = vrcp.pop %v110
    %v112 = vmul.f32 %v106, %v111
    %v113 = vld [vmem:[%s1] sm:$0xff]
    %v114 = vld [vmem:[%s1 + $0x8] sm:$0xff]
    %v115 = vld [vmem:[%s1 + $0x10] sm:$0xff]
    %v116 = vld [vmem:[%s1 + $0x18] sm:$0xff]
    %v117 = vld [vmem:[%s1 + $0x20] sm:$0xff]
    %v118 = vld [vmem:[%s1 + $0x28] sm:$0xff]
    %v119 = vld [vmem:[%s1 + $0x30] sm:$0xff]
    %v120 = vld [vmem:[%s1 + $0x38] sm:$0xff]
    %v121 = vperm.slane %v112, 0
    %v122 = vlaneseq
    %v123 = vshrl.u32 %v122, 7
    %125 = vset.pattern.permute.xlu0 %v123
    %126 = vperm.xlu0 %125, %v121
    %v127 = vpop.permute.xlu0 %126
    %v128 = vperm.slane %v112, 1
    %v129 = vlaneseq
    %v130 = vshrl.u32 %v129, 7
    %132 = vset.pattern.permute.xlu0 %v130
    %133 = vperm.xlu0 %132, %v128
    %v134 = vpop.permute.xlu0 %133
    %v135 = vperm.slane %v112, 2
    %v136 = vlaneseq
    %v137 = vshrl.u32 %v136, 7
    %139 = vset.pattern.permute.xlu0 %v137
    %140 = vperm.xlu0 %139, %v135
    %v141 = vpop.permute.xlu0 %140
    %v142 = vperm.slane %v112, 3
    %v143 = vlaneseq
    %v144 = vshrl.u32 %v143, 7
    %146 = vset.pattern.permute.xlu0 %v144
    %147 = vperm.xlu0 %146, %v142
    %v148 = vpop.permute.xlu0 %147
    %v149 = vperm.slane %v112, 4
    %v150 = vlaneseq
    %v151 = vshrl.u32 %v150, 7
    %153 = vset.pattern.permute.xlu0 %v151
    %154 = vperm.xlu0 %153, %v149
    %v155 = vpop.permute.xlu0 %154
    %v156 = vperm.slane %v112, 5
    %v157 = vlaneseq
    %v158 = vshrl.u32 %v157, 7
    %160 = vset.pattern.permute.xlu0 %v158
    %161 = vperm.xlu0 %160, %v156
    %v162 = vpop.permute.xlu0 %161
    %v163 = vperm.slane %v112, 6
    %v164 = vlaneseq
    %v165 = vshrl.u32 %v164, 7
    %167 = vset.pattern.permute.xlu0 %v165
    %168 = vperm.xlu0 %167, %v163
    %v169 = vpop.permute.xlu0 %168
    %v170 = vperm.slane %v112, 7
    %v171 = vlaneseq
    %v172 = vshrl.u32 %v171, 7
    %174 = vset.pattern.permute.xlu0 %v172
    %175 = vperm.xlu0 %174, %v170
    %v176 = vpop.permute.xlu0 %175
    %v186 = vunpack.c.l.s4 839922192
    %v187 = vunpack.c.0.s8 %v186
    %v188 = vperm.slane %v127, %v187
    %v190 = vunpack.c.l.s4 839922192
    %v191 = vunpack.c.0.s8 %v190
    %v192 = vperm.slane %v134, %v191
    %v194 = vunpack.c.l.s4 839922192
    %v195 = vunpack.c.0.s8 %v194
    %v196 = vperm.slane %v141, %v195
    %v198 = vunpack.c.l.s4 839922192
    %v199 = vunpack.c.0.s8 %v198
    %v200 = vperm.slane %v148, %v199
    %v202 = vunpack.c.l.s4 839922192
    %v203 = vunpack.c.0.s8 %v202
    %v204 = vperm.slane %v155, %v203
    %v206 = vunpack.c.l.s4 839922192
    %v207 = vunpack.c.0.s8 %v206
    %v208 = vperm.slane %v162, %v207
    %v210 = vunpack.c.l.s4 839922192
    %v211 = vunpack.c.0.s8 %v210
    %v212 = vperm.slane %v169, %v211
    %v214 = vunpack.c.l.s4 839922192
    %v215 = vunpack.c.0.s8 %v214
    %v216 = vperm.slane %v176, %v215
    %v225 = vmul.f32 %v113, %v188
    %v226 = vmul.f32 %v114, %v192
    %v227 = vmul.f32 %v115, %v196
    %v228 = vmul.f32 %v116, %v200
    %v229 = vmul.f32 %v117, %v204
    %v230 = vmul.f32 %v118, %v208
    %v231 = vmul.f32 %v119, %v212
    %v232 = vmul.f32 %v120, %v216
    %s233 = sld [smem:[#allocation4]]
    %v234 = vstv %s233
    %v235 = vmul.f32 %v225, %v234
    %v236 = vmul.f32 %v226, %v234
    %v237 = vmul.f32 %v227, %v234
    %v238 = vmul.f32 %v228, %v234
    %v239 = vmul.f32 %v229, %v234
    %v240 = vmul.f32 %v230, %v234
    %v241 = vmul.f32 %v231, %v234
    %v242 = vmul.f32 %v232, %v234
    %s243 = sld [smem:[#allocation4 + $0x1]]
    %v244 = vstv %s243
    %v245 = vmul.f32 %v225, %v244
    %v246 = vmul.f32 %v226, %v244
    %v247 = vmul.f32 %v227, %v244
    %v248 = vmul.f32 %v228, %v244
    %v249 = vmul.f32 %v229, %v244
    %v250 = vmul.f32 %v230, %v244
    %v251 = vmul.f32 %v231, %v244
    %v252 = vmul.f32 %v232, %v244
    %s253 = sld [smem:[#allocation4 + $0x2]]
    %v254 = vstv %s253
    %v255 = vmul.f32 %v225, %v254
    %v256 = vmul.f32 %v226, %v254
    %v257 = vmul.f32 %v227, %v254
    %v258 = vmul.f32 %v228, %v254
    %v259 = vmul.f32 %v229, %v254
    %v260 = vmul.f32 %v230, %v254
    %v261 = vmul.f32 %v231, %v254
    %v262 = vmul.f32 %v232, %v254
    %s263 = sld [smem:[#allocation4 + $0x3]]
    %v264 = vstv %s263
    %v265 = vmul.f32 %v225, %v264
    %v266 = vmul.f32 %v226, %v264
    %v267 = vmul.f32 %v227, %v264
    %v268 = vmul.f32 %v228, %v264
    %v269 = vmul.f32 %v229, %v264
    %v270 = vmul.f32 %v230, %v264
    %v271 = vmul.f32 %v231, %v264
    %v272 = vmul.f32 %v232, %v264
    %v281 = vrot.slane %v245, 5
    %v282 = vrot.slane %v281, 4
    %v283 = vrot.slane %v246, 5
    %v284 = vrot.slane %v283, 4
    %v285 = vrot.slane %v247, 5
    %v286 = vrot.slane %v285, 4
    %v287 = vrot.slane %v248, 5
    %v288 = vrot.slane %v287, 4
    %v289 = vrot.slane %v249, 5
    %v290 = vrot.slane %v289, 4
    %v291 = vrot.slane %v250, 5
    %v292 = vrot.slane %v291, 4
    %v293 = vrot.slane %v251, 5
    %v294 = vrot.slane %v293, 4
    %v295 = vrot.slane %v252, 5
    %v296 = vrot.slane %v295, 4
    %v305 = vadd.f32 %v235, %v282
    %v306 = vadd.f32 %v236, %v284
    %v307 = vadd.f32 %v237, %v286
    %v308 = vadd.f32 %v238, %v288
    %v309 = vadd.f32 %v239, %v290
    %v310 = vadd.f32 %v240, %v292
    %v311 = vadd.f32 %v241, %v294
    %v312 = vadd.f32 %v242, %v296
    %v321 = vrot.slane %v265, 5
    %v322 = vrot.slane %v321, 4
    %v323 = vrot.slane %v266, 5
    %v324 = vrot.slane %v323, 4
    %v325 = vrot.slane %v267, 5
    %v326 = vrot.slane %v325, 4
    %v327 = vrot.slane %v268, 5
    %v328 = vrot.slane %v327, 4
    %v329 = vrot.slane %v269, 5
    %v330 = vrot.slane %v329, 4
    %v331 = vrot.slane %v270, 5
    %v332 = vrot.slane %v331, 4
    %v333 = vrot.slane %v271, 5
    %v334 = vrot.slane %v333, 4
    %v335 = vrot.slane %v272, 5
    %v336 = vrot.slane %v335, 4
    %v345 = vadd.f32 %v255, %v322
    %v346 = vadd.f32 %v256, %v324
    %v347 = vadd.f32 %v257, %v326
    %v348 = vadd.f32 %v258, %v328
    %v349 = vadd.f32 %v259, %v330
    %v350 = vadd.f32 %v260, %v332
    %v351 = vadd.f32 %v261, %v334
    %v352 = vadd.f32 %v262, %v336
    %v361 = vrot.slane %v345, 6
    %v362 = vrot.slane %v361, 4
    %v363 = vrot.slane %v346, 6
    %v364 = vrot.slane %v363, 4
    %v365 = vrot.slane %v347, 6
    %v366 = vrot.slane %v365, 4
    %v367 = vrot.slane %v348, 6
    %v368 = vrot.slane %v367, 4
    %v369 = vrot.slane %v349, 6
    %v370 = vrot.slane %v369, 4
    %v371 = vrot.slane %v350, 6
    %v372 = vrot.slane %v371, 4
    %v373 = vrot.slane %v351, 6
    %v374 = vrot.slane %v373, 4
    %v375 = vrot.slane %v352, 6
    %v376 = vrot.slane %v375, 4
    %v385 = vadd.f32 %v305, %v362
    %v386 = vadd.f32 %v306, %v364
    %v387 = vadd.f32 %v307, %v366
    %v388 = vadd.f32 %v308, %v368
    %v389 = vadd.f32 %v309, %v370
    %v390 = vadd.f32 %v310, %v372
    %v391 = vadd.f32 %v311, %v374
    %v392 = vadd.f32 %v312, %v376
    %s393 = sld [smem:[#allocation6]]
    %v394 = vstv %s393
    %v395 = vadd.f32 %v385, %v394
    %v396 = vadd.f32 %v386, %v394
    %v397 = vadd.f32 %v387, %v394
    %v398 = vadd.f32 %v388, %v394
    %v399 = vadd.f32 %v389, %v394
    %v400 = vadd.f32 %v390, %v394
    %v401 = vadd.f32 %v391, %v394
    %v402 = vadd.f32 %v392, %v394
    %v403 = vmax.f32 %v395, 0.0
    %v404 = vmax.f32 %v396, 0.0
    %v405 = vmax.f32 %v397, 0.0
    %v406 = vmax.f32 %v398, 0.0
    %v407 = vmax.f32 %v399, 0.0
    %v408 = vmax.f32 %v400, 0.0
    %v409 = vmax.f32 %v401, 0.0
    %v410 = vmax.f32 %v402, 0.0
    %s411 = sld [smem:[#allocation4 + $0x80]]
    %v412 = vstv %s411
    %v413 = vmul.f32 %v225, %v412
    %v414 = vmul.f32 %v226, %v412
    %v415 = vmul.f32 %v227, %v412
    %v416 = vmul.f32 %v228, %v412
    %v417 = vmul.f32 %v229, %v412
    %v418 = vmul.f32 %v230, %v412
    %v419 = vmul.f32 %v231, %v412
    %v420 = vmul.f32 %v232, %v412
    %s421 = sld [smem:[#allocation4 + $0x81]]
    %v422 = vstv %s421
    %v423 = vmul.f32 %v225, %v422
    %v424 = vmul.f32 %v226, %v422
    %v425 = vmul.f32 %v227, %v422
    %v426 = vmul.f32 %v228, %v422
    %v427 = vmul.f32 %v229, %v422
    %v428 = vmul.f32 %v230, %v422
    %v429 = vmul.f32 %v231, %v422
    %v430 = vmul.f32 %v232, %v422
    %s431 = sld [smem:[#allocation4 + $0x82]]
    %v432 = vstv %s431
    %v433 = vmul.f32 %v225, %v432
    %v434 = vmul.f32 %v226, %v432
    %v435 = vmul.f32 %v227, %v432
    %v436 = vmul.f32 %v228, %v432
    %v437 = vmul.f32 %v229, %v432
    %v438 = vmul.f32 %v230, %v432
    %v439 = vmul.f32 %v231, %v432
    %v440 = vmul.f32 %v232, %v432
    %s441 = sld [smem:[#allocation4 + $0x83]]
    %v442 = vstv %s441
    %v443 = vmul.f32 %v225, %v442
    %v444 = vmul.f32 %v226, %v442
    %v445 = vmul.f32 %v227, %v442
    %v446 = vmul.f32 %v228, %v442
    %v447 = vmul.f32 %v229, %v442
    %v448 = vmul.f32 %v230, %v442
    %v449 = vmul.f32 %v231, %v442
    %v450 = vmul.f32 %v232, %v442
    %v459 = vrot.slane %v423, 5
    %v460 = vrot.slane %v459, 4
    %v461 = vrot.slane %v424, 5
    %v462 = vrot.slane %v461, 4
    %v463 = vrot.slane %v425, 5
    %v464 = vrot.slane %v463, 4
    %v465 = vrot.slane %v426, 5
    %v466 = vrot.slane %v465, 4
    %v467 = vrot.slane %v427, 5
    %v468 = vrot.slane %v467, 4
    %v469 = vrot.slane %v428, 5
    %v470 = vrot.slane %v469, 4
    %v471 = vrot.slane %v429, 5
    %v472 = vrot.slane %v471, 4
    %v473 = vrot.slane %v430, 5
    %v474 = vrot.slane %v473, 4
    %v483 = vadd.f32 %v413, %v460
    %v484 = vadd.f32 %v414, %v462
    %v485 = vadd.f32 %v415, %v464
    %v486 = vadd.f32 %v416, %v466
    %v487 = vadd.f32 %v417, %v468
    %v488 = vadd.f32 %v418, %v470
    %v489 = vadd.f32 %v419, %v472
    %v490 = vadd.f32 %v420, %v474
    %v499 = vrot.slane %v443, 5
    %v500 = vrot.slane %v499, 4
    %v501 = vrot.slane %v444, 5
    %v502 = vrot.slane %v501, 4
    %v503 = vrot.slane %v445, 5
    %v504 = vrot.slane %v503, 4
    %v505 = vrot.slane %v446, 5
    %v506 = vrot.slane %v505, 4
    %v507 = vrot.slane %v447, 5
    %v508 = vrot.slane %v507, 4
    %v509 = vrot.slane %v448, 5
    %v510 = vrot.slane %v509, 4
    %v511 = vrot.slane %v449, 5
    %v512 = vrot.slane %v511, 4
    %v513 = vrot.slane %v450, 5
    %v514 = vrot.slane %v513, 4
    %v523 = vadd.f32 %v433, %v500
    %v524 = vadd.f32 %v434, %v502
    %v525 = vadd.f32 %v435, %v504
    %v526 = vadd.f32 %v436, %v506
    %v527 = vadd.f32 %v437, %v508
    %v528 = vadd.f32 %v438, %v510
    %v529 = vadd.f32 %v439, %v512
    %v530 = vadd.f32 %v440, %v514
    %v539 = vrot.slane %v523, 6
    %v540 = vrot.slane %v539, 4
    %v541 = vrot.slane %v524, 6
    %v542 = vrot.slane %v541, 4
    %v543 = vrot.slane %v525, 6
    %v544 = vrot.slane %v543, 4
    %v545 = vrot.slane %v526, 6
    %v546 = vrot.slane %v545, 4
    %v547 = vrot.slane %v527, 6
    %v548 = vrot.slane %v547, 4
    %v549 = vrot.slane %v528, 6
    %v550 = vrot.slane %v549, 4
    %v551 = vrot.slane %v529, 6
    %v552 = vrot.slane %v551, 4
    %v553 = vrot.slane %v530, 6
    %v554 = vrot.slane %v553, 4
    %v563 = vadd.f32 %v483, %v540
    %v564 = vadd.f32 %v484, %v542
    %v565 = vadd.f32 %v485, %v544
    %v566 = vadd.f32 %v486, %v546
    %v567 = vadd.f32 %v487, %v548
    %v568 = vadd.f32 %v488, %v550
    %v569 = vadd.f32 %v489, %v552
    %v570 = vadd.f32 %v490, %v554
    %s571 = sld [smem:[#allocation6 + $0x1]]
    %v572 = vstv %s571
    %v573 = vadd.f32 %v563, %v572
    %v574 = vadd.f32 %v564, %v572
    %v575 = vadd.f32 %v565, %v572
    %v576 = vadd.f32 %v566, %v572
    %v577 = vadd.f32 %v567, %v572
    %v578 = vadd.f32 %v568, %v572
    %v579 = vadd.f32 %v569, %v572
    %v580 = vadd.f32 %v570, %v572
    %v581 = vmax.f32 %v573, 0.0
    %v582 = vmax.f32 %v574, 0.0
    %v583 = vmax.f32 %v575, 0.0
    %v584 = vmax.f32 %v576, 0.0
    %v585 = vmax.f32 %v577, 0.0
    %v586 = vmax.f32 %v578, 0.0
    %v587 = vmax.f32 %v579, 0.0
    %v588 = vmax.f32 %v580, 0.0
    %s589 = sld [smem:[#allocation4 + $0x100]]
    %v590 = vstv %s589
    %v591 = vmul.f32 %v225, %v590
    %v592 = vmul.f32 %v226, %v590
    %v593 = vmul.f32 %v227, %v590
    %v594 = vmul.f32 %v228, %v590
    %v595 = vmul.f32 %v229, %v590
    %v596 = vmul.f32 %v230, %v590
    %v597 = vmul.f32 %v231, %v590
    %v598 = vmul.f32 %v232, %v590
    %s599 = sld [smem:[#allocation4 + $0x101]]
    %v600 = vstv %s599
    %v601 = vmul.f32 %v225, %v600
    %v602 = vmul.f32 %v226, %v600
    %v603 = vmul.f32 %v227, %v600
    %v604 = vmul.f32 %v228, %v600
    %v605 = vmul.f32 %v229, %v600
    %v606 = vmul.f32 %v230, %v600
    %v607 = vmul.f32 %v231, %v600
    %v608 = vmul.f32 %v232, %v600
    %s609 = sld [smem:[#allocation4 + $0x102]]
    %v610 = vstv %s609
    %v611 = vmul.f32 %v225, %v610
    %v612 = vmul.f32 %v226, %v610
    %v613 = vmul.f32 %v227, %v610
    %v614 = vmul.f32 %v228, %v610
    %v615 = vmul.f32 %v229, %v610
    %v616 = vmul.f32 %v230, %v610
    %v617 = vmul.f32 %v231, %v610
    %v618 = vmul.f32 %v232, %v610
    %s619 = sld [smem:[#allocation4 + $0x103]]
    %v620 = vstv %s619
    %v621 = vmul.f32 %v225, %v620
    %v622 = vmul.f32 %v226, %v620
    %v623 = vmul.f32 %v227, %v620
    %v624 = vmul.f32 %v228, %v620
    %v625 = vmul.f32 %v229, %v620
    %v626 = vmul.f32 %v230, %v620
    %v627 = vmul.f32 %v231, %v620
    %v628 = vmul.f32 %v232, %v620
    %v637 = vrot.slane %v601, 5
    %v638 = vrot.slane %v637, 4
    %v639 = vrot.slane %v602, 5
    %v640 = vrot.slane %v639, 4
    %v641 = vrot.slane %v603, 5
    %v642 = vrot.slane %v641, 4
    %v643 = vrot.slane %v604, 5
    %v644 = vrot.slane %v643, 4
    %v645 = vrot.slane %v605, 5
    %v646 = vrot.slane %v645, 4
    %v647 = vrot.slane %v606, 5
    %v648 = vrot.slane %v647, 4
    %v649 = vrot.slane %v607, 5
    %v650 = vrot.slane %v649, 4
    %v651 = vrot.slane %v608, 5
    %v652 = vrot.slane %v651, 4
    %v661 = vadd.f32 %v591, %v638
    %v662 = vadd.f32 %v592, %v640
    %v663 = vadd.f32 %v593, %v642
    %v664 = vadd.f32 %v594, %v644
    %v665 = vadd.f32 %v595, %v646
    %v666 = vadd.f32 %v596, %v648
    %v667 = vadd.f32 %v597, %v650
    %v668 = vadd.f32 %v598, %v652
    %v677 = vrot.slane %v621, 5
    %v678 = vrot.slane %v677, 4
    %v679 = vrot.slane %v622, 5
    %v680 = vrot.slane %v679, 4
    %v681 = vrot.slane %v623, 5
    %v682 = vrot.slane %v681, 4
    %v683 = vrot.slane %v624, 5
    %v684 = vrot.slane %v683, 4
    %v685 = vrot.slane %v625, 5
    %v686 = vrot.slane %v685, 4
    %v687 = vrot.slane %v626, 5
    %v688 = vrot.slane %v687, 4
    %v689 = vrot.slane %v627, 5
    %v690 = vrot.slane %v689, 4
    %v691 = vrot.slane %v628, 5
    %v692 = vrot.slane %v691, 4
    %v701 = vadd.f32 %v611, %v678
    %v702 = vadd.f32 %v612, %v680
    %v703 = vadd.f32 %v613, %v682
    %v704 = vadd.f32 %v614, %v684
    %v705 = vadd.f32 %v615, %v686
    %v706 = vadd.f32 %v616, %v688
    %v707 = vadd.f32 %v617, %v690
    %v708 = vadd.f32 %v618, %v692
    %v717 = vrot.slane %v701, 6
    %v718 = vrot.slane %v717, 4
    %v719 = vrot.slane %v702, 6
    %v720 = vrot.slane %v719, 4
    %v721 = vrot.slane %v703, 6
    %v722 = vrot.slane %v721, 4
    %v723 = vrot.slane %v704, 6
    %v724 = vrot.slane %v723, 4
    %v725 = vrot.slane %v705, 6
    %v726 = vrot.slane %v725, 4
    %v727 = vrot.slane %v706, 6
    %v728 = vrot.slane %v727, 4
    %v729 = vrot.slane %v707, 6
    %v730 = vrot.slane %v729, 4
    %v731 = vrot.slane %v708, 6
    %v732 = vrot.slane %v731, 4
    %v741 = vadd.f32 %v661, %v718
    %v742 = vadd.f32 %v662, %v720
    %v743 = vadd.f32 %v663, %v722
    %v744 = vadd.f32 %v664, %v724
    %v745 = vadd.f32 %v665, %v726
    %v746 = vadd.f32 %v666, %v728
    %v747 = vadd.f32 %v667, %v730
    %v748 = vadd.f32 %v668, %v732
    %s749 = sld [smem:[#allocation6 + $0x2]]
    %v750 = vstv %s749
    %v751 = vadd.f32 %v741, %v750
    %v752 = vadd.f32 %v742, %v750
    %v753 = vadd.f32 %v743, %v750
    %v754 = vadd.f32 %v744, %v750
    %v755 = vadd.f32 %v745, %v750
    %v756 = vadd.f32 %v746, %v750
    %v757 = vadd.f32 %v747, %v750
    %v758 = vadd.f32 %v748, %v750
    %v759 = vmax.f32 %v751, 0.0
    %v760 = vmax.f32 %v752, 0.0
    %v761 = vmax.f32 %v753, 0.0
    %v762 = vmax.f32 %v754, 0.0
    %v763 = vmax.f32 %v755, 0.0
    %v764 = vmax.f32 %v756, 0.0
    %v765 = vmax.f32 %v757, 0.0
    %v766 = vmax.f32 %v758, 0.0
    %s767 = sld [smem:[#allocation4 + $0x180]]
    %v768 = vstv %s767
    %v769 = vmul.f32 %v225, %v768
    %v770 = vmul.f32 %v226, %v768
    %v771 = vmul.f32 %v227, %v768
    %v772 = vmul.f32 %v228, %v768
    %v773 = vmul.f32 %v229, %v768
    %v774 = vmul.f32 %v230, %v768
    %v775 = vmul.f32 %v231, %v768
    %v776 = vmul.f32 %v232, %v768
    %s777 = sld [smem:[#allocation4 + $0x181]]
    %v778 = vstv %s777
    %v779 = vmul.f32 %v225, %v778
    %v780 = vmul.f32 %v226, %v778
    %v781 = vmul.f32 %v227, %v778
    %v782 = vmul.f32 %v228, %v778
    %v783 = vmul.f32 %v229, %v778
    %v784 = vmul.f32 %v230, %v778
    %v785 = vmul.f32 %v231, %v778
    %v786 = vmul.f32 %v232, %v778
    %s787 = sld [smem:[#allocation4 + $0x182]]
    %v788 = vstv %s787
    %v789 = vmul.f32 %v225, %v788
    %v790 = vmul.f32 %v226, %v788
    %v791 = vmul.f32 %v227, %v788
    %v792 = vmul.f32 %v228, %v788
    %v793 = vmul.f32 %v229, %v788
    %v794 = vmul.f32 %v230, %v788
    %v795 = vmul.f32 %v231, %v788
    %v796 = vmul.f32 %v232, %v788
    %s797 = sld [smem:[#allocation4 + $0x183]]
    %v798 = vstv %s797
    %v799 = vmul.f32 %v225, %v798
    %v800 = vmul.f32 %v226, %v798
    %v801 = vmul.f32 %v227, %v798
    %v802 = vmul.f32 %v228, %v798
    %v803 = vmul.f32 %v229, %v798
    %v804 = vmul.f32 %v230, %v798
    %v805 = vmul.f32 %v231, %v798
    %v806 = vmul.f32 %v232, %v798
    %v815 = vrot.slane %v779, 5
    %v816 = vrot.slane %v815, 4
    %v817 = vrot.slane %v780, 5
    %v818 = vrot.slane %v817, 4
    %v819 = vrot.slane %v781, 5
    %v820 = vrot.slane %v819, 4
    %v821 = vrot.slane %v782, 5
    %v822 = vrot.slane %v821, 4
    %v823 = vrot.slane %v783, 5
    %v824 = vrot.slane %v823, 4
    %v825 = vrot.slane %v784, 5
    %v826 = vrot.slane %v825, 4
    %v827 = vrot.slane %v785, 5
    %v828 = vrot.slane %v827, 4
    %v829 = vrot.slane %v786, 5
    %v830 = vrot.slane %v829, 4
    %v839 = vadd.f32 %v769, %v816
    %v840 = vadd.f32 %v770, %v818
    %v841 = vadd.f32 %v771, %v820
    %v842 = vadd.f32 %v772, %v822
    %v843 = vadd.f32 %v773, %v824
    %v844 = vadd.f32 %v774, %v826
    %v845 = vadd.f32 %v775, %v828
    %v846 = vadd.f32 %v776, %v830
    %v855 = vrot.slane %v799, 5
    %v856 = vrot.slane %v855, 4
    %v857 = vrot.slane %v800, 5
    %v858 = vrot.slane %v857, 4
    %v859 = vrot.slane %v801, 5
    %v860 = vrot.slane %v859, 4
    %v861 = vrot.slane %v802, 5
    %v862 = vrot.slane %v861, 4
    %v863 = vrot.slane %v803, 5
    %v864 = vrot.slane %v863, 4
    %v865 = vrot.slane %v804, 5
    %v866 = vrot.slane %v865, 4
    %v867 = vrot.slane %v805, 5
    %v868 = vrot.slane %v867, 4
    %v869 = vrot.slane %v806, 5
    %v870 = vrot.slane %v869, 4
    %v879 = vadd.f32 %v789, %v856
    %v880 = vadd.f32 %v790, %v858
    %v881 = vadd.f32 %v791, %v860
    %v882 = vadd.f32 %v792, %v862
    %v883 = vadd.f32 %v793, %v864
    %v884 = vadd.f32 %v794, %v866
    %v885 = vadd.f32 %v795, %v868
    %v886 = vadd.f32 %v796, %v870
    %v895 = vrot.slane %v879, 6
    %v896 = vrot.slane %v895, 4
    %v897 = vrot.slane %v880, 6
    %v898 = vrot.slane %v897, 4
    %v899 = vrot.slane %v881, 6
    %v900 = vrot.slane %v899, 4
    %v901 = vrot.slane %v882, 6
    %v902 = vrot.slane %v901, 4
    %v903 = vrot.slane %v883, 6
    %v904 = vrot.slane %v903, 4
    %v905 = vrot.slane %v884, 6
    %v906 = vrot.slane %v905, 4
    %v907 = vrot.slane %v885, 6
    %v908 = vrot.slane %v907, 4
    %v909 = vrot.slane %v886, 6
    %v910 = vrot.slane %v909, 4
    %v919 = vadd.f32 %v839, %v896
    %v920 = vadd.f32 %v840, %v898
    %v921 = vadd.f32 %v841, %v900
    %v922 = vadd.f32 %v842, %v902
    %v923 = vadd.f32 %v843, %v904
    %v924 = vadd.f32 %v844, %v906
    %v925 = vadd.f32 %v845, %v908
    %v926 = vadd.f32 %v846, %v910
    %s927 = sld [smem:[#allocation6 + $0x3]]
    %v928 = vstv %s927
    %v929 = vadd.f32 %v919, %v928
    %v930 = vadd.f32 %v920, %v928
    %v931 = vadd.f32 %v921, %v928
    %v932 = vadd.f32 %v922, %v928
    %v933 = vadd.f32 %v923, %v928
    %v934 = vadd.f32 %v924, %v928
    %v935 = vadd.f32 %v925, %v928
    %v936 = vadd.f32 %v926, %v928
    %v937 = vmax.f32 %v929, 0.0
    %v938 = vmax.f32 %v930, 0.0
    %v939 = vmax.f32 %v931, 0.0
    %v940 = vmax.f32 %v932, 0.0
    %v941 = vmax.f32 %v933, 0.0
    %v942 = vmax.f32 %v934, 0.0
    %v943 = vmax.f32 %v935, 0.0
    %v944 = vmax.f32 %v936, 0.0
    %s945 = sld [smem:[#allocation4 + $0x200]]
    %v946 = vstv %s945
    %v947 = vmul.f32 %v225, %v946
    %v948 = vmul.f32 %v226, %v946
    %v949 = vmul.f32 %v227, %v946
    %v950 = vmul.f32 %v228, %v946
    %v951 = vmul.f32 %v229, %v946
    %v952 = vmul.f32 %v230, %v946
    %v953 = vmul.f32 %v231, %v946
    %v954 = vmul.f32 %v232, %v946
    %s955 = sld [smem:[#allocation4 + $0x201]]
    %v956 = vstv %s955
    %v957 = vmul.f32 %v225, %v956
    %v958 = vmul.f32 %v226, %v956
    %v959 = vmul.f32 %v227, %v956
    %v960 = vmul.f32 %v228, %v956
    %v961 = vmul.f32 %v229, %v956
    %v962 = vmul.f32 %v230, %v956
    %v963 = vmul.f32 %v231, %v956
    %v964 = vmul.f32 %v232, %v956
    %s965 = sld [smem:[#allocation4 + $0x202]]
    %v966 = vstv %s965
    %v967 = vmul.f32 %v225, %v966
    %v968 = vmul.f32 %v226, %v966
    %v969 = vmul.f32 %v227, %v966
    %v970 = vmul.f32 %v228, %v966
    %v971 = vmul.f32 %v229, %v966
    %v972 = vmul.f32 %v230, %v966
    %v973 = vmul.f32 %v231, %v966
    %v974 = vmul.f32 %v232, %v966
    %s975 = sld [smem:[#allocation4 + $0x203]]
    %v976 = vstv %s975
    %v977 = vmul.f32 %v225, %v976
    %v978 = vmul.f32 %v226, %v976
    %v979 = vmul.f32 %v227, %v976
    %v980 = vmul.f32 %v228, %v976
    %v981 = vmul.f32 %v229, %v976
    %v982 = vmul.f32 %v230, %v976
    %v983 = vmul.f32 %v231, %v976
    %v984 = vmul.f32 %v232, %v976
    %v993 = vrot.slane %v957, 5
    %v994 = vrot.slane %v993, 4
    %v995 = vrot.slane %v958, 5
    %v996 = vrot.slane %v995, 4
    %v997 = vrot.slane %v959, 5
    %v998 = vrot.slane %v997, 4
    %v999 = vrot.slane %v960, 5
    %v1000 = vrot.slane %v999, 4
    %v1001 = vrot.slane %v961, 5
    %v1002 = vrot.slane %v1001, 4
    %v1003 = vrot.slane %v962, 5
    %v1004 = vrot.slane %v1003, 4
    %v1005 = vrot.slane %v963, 5
    %v1006 = vrot.slane %v1005, 4
    %v1007 = vrot.slane %v964, 5
    %v1008 = vrot.slane %v1007, 4
    %v1017 = vadd.f32 %v947, %v994
    %v1018 = vadd.f32 %v948, %v996
    %v1019 = vadd.f32 %v949, %v998
    %v1020 = vadd.f32 %v950, %v1000
    %v1021 = vadd.f32 %v951, %v1002
    %v1022 = vadd.f32 %v952, %v1004
    %v1023 = vadd.f32 %v953, %v1006
    %v1024 = vadd.f32 %v954, %v1008
    %v1033 = vrot.slane %v977, 5
    %v1034 = vrot.slane %v1033, 4
    %v1035 = vrot.slane %v978, 5
    %v1036 = vrot.slane %v1035, 4
    %v1037 = vrot.slane %v979, 5
    %v1038 = vrot.slane %v1037, 4
    %v1039 = vrot.slane %v980, 5
    %v1040 = vrot.slane %v1039, 4
    %v1041 = vrot.slane %v981, 5
    %v1042 = vrot.slane %v1041, 4
    %v1043 = vrot.slane %v982, 5
    %v1044 = vrot.slane %v1043, 4
    %v1045 = vrot.slane %v983, 5
    %v1046 = vrot.slane %v1045, 4
    %v1047 = vrot.slane %v984, 5
    %v1048 = vrot.slane %v1047, 4
    %v1057 = vadd.f32 %v967, %v1034
    %v1058 = vadd.f32 %v968, %v1036
    %v1059 = vadd.f32 %v969, %v1038
    %v1060 = vadd.f32 %v970, %v1040
    %v1061 = vadd.f32 %v971, %v1042
    %v1062 = vadd.f32 %v972, %v1044
    %v1063 = vadd.f32 %v973, %v1046
    %v1064 = vadd.f32 %v974, %v1048
    %v1073 = vrot.slane %v1057, 6
    %v1074 = vrot.slane %v1073, 4
    %v1075 = vrot.slane %v1058, 6
    %v1076 = vrot.slane %v1075, 4
    %v1077 = vrot.slane %v1059, 6
    %v1078 = vrot.slane %v1077, 4
    %v1079 = vrot.slane %v1060, 6
    %v1080 = vrot.slane %v1079, 4
    %v1081 = vrot.slane %v1061, 6
    %v1082 = vrot.slane %v1081, 4
    %v1083 = vrot.slane %v1062, 6
    %v1084 = vrot.slane %v1083, 4
    %v1085 = vrot.slane %v1063, 6
    %v1086 = vrot.slane %v1085, 4
    %v1087 = vrot.slane %v1064, 6
    %v1088 = vrot.slane %v1087, 4
    %v1097 = vadd.f32 %v1017, %v1074
    %v1098 = vadd.f32 %v1018, %v1076
    %v1099 = vadd.f32 %v1019, %v1078
    %v1100 = vadd.f32 %v1020, %v1080
    %v1101 = vadd.f32 %v1021, %v1082
    %v1102 = vadd.f32 %v1022, %v1084
    %v1103 = vadd.f32 %v1023, %v1086
    %v1104 = vadd.f32 %v1024, %v1088
    %s1105 = sld [smem:[#allocation6 + $0x4]]
    %v1106 = vstv %s1105
    %v1107 = vadd.f32 %v1097, %v1106
    %v1108 = vadd.f32 %v1098, %v1106
    %v1109 = vadd.f32 %v1099, %v1106
    %v1110 = vadd.f32 %v1100, %v1106
    %v1111 = vadd.f32 %v1101, %v1106
    %v1112 = vadd.f32 %v1102, %v1106
    %v1113 = vadd.f32 %v1103, %v1106
    %v1114 = vadd.f32 %v1104, %v1106
    %v1115 = vmax.f32 %v1107, 0.0
    %v1116 = vmax.f32 %v1108, 0.0
    %v1117 = vmax.f32 %v1109, 0.0
    %v1118 = vmax.f32 %v1110, 0.0
    %v1119 = vmax.f32 %v1111, 0.0
    %v1120 = vmax.f32 %v1112, 0.0
    %v1121 = vmax.f32 %v1113, 0.0
    %v1122 = vmax.f32 %v1114, 0.0
    %s1123 = sld [smem:[#allocation4 + $0x280]]
    %v1124 = vstv %s1123
    %v1125 = vmul.f32 %v225, %v1124
    %v1126 = vmul.f32 %v226, %v1124
    %v1127 = vmul.f32 %v227, %v1124
    %v1128 = vmul.f32 %v228, %v1124
    %v1129 = vmul.f32 %v229, %v1124
    %v1130 = vmul.f32 %v230, %v1124
    %v1131 = vmul.f32 %v231, %v1124
    %v1132 = vmul.f32 %v232, %v1124
    %s1133 = sld [smem:[#allocation4 + $0x281]]
    %v1134 = vstv %s1133
    %v1135 = vmul.f32 %v225, %v1134
    %v1136 = vmul.f32 %v226, %v1134
    %v1137 = vmul.f32 %v227, %v1134
    %v1138 = vmul.f32 %v228, %v1134
    %v1139 = vmul.f32 %v229, %v1134
    %v1140 = vmul.f32 %v230, %v1134
    %v1141 = vmul.f32 %v231, %v1134
    %v1142 = vmul.f32 %v232, %v1134
    %s1143 = sld [smem:[#allocation4 + $0x282]]
    %v1144 = vstv %s1143
    %v1145 = vmul.f32 %v225, %v1144
    %v1146 = vmul.f32 %v226, %v1144
    %v1147 = vmul.f32 %v227, %v1144
    %v1148 = vmul.f32 %v228, %v1144
    %v1149 = vmul.f32 %v229, %v1144
    %v1150 = vmul.f32 %v230, %v1144
    %v1151 = vmul.f32 %v231, %v1144
    %v1152 = vmul.f32 %v232, %v1144
    %s1153 = sld [smem:[#allocation4 + $0x283]]
    %v1154 = vstv %s1153
    %v1155 = vmul.f32 %v225, %v1154
    %v1156 = vmul.f32 %v226, %v1154
    %v1157 = vmul.f32 %v227, %v1154
    %v1158 = vmul.f32 %v228, %v1154
    %v1159 = vmul.f32 %v229, %v1154
    %v1160 = vmul.f32 %v230, %v1154
    %v1161 = vmul.f32 %v231, %v1154
    %v1162 = vmul.f32 %v232, %v1154
    %v1171 = vrot.slane %v1135, 5
    %v1172 = vrot.slane %v1171, 4
    %v1173 = vrot.slane %v1136, 5
    %v1174 = vrot.slane %v1173, 4
    %v1175 = vrot.slane %v1137, 5
    %v1176 = vrot.slane %v1175, 4
    %v1177 = vrot.slane %v1138, 5
    %v1178 = vrot.slane %v1177, 4
    %v1179 = vrot.slane %v1139, 5
    %v1180 = vrot.slane %v1179, 4
    %v1181 = vrot.slane %v1140, 5
    %v1182 = vrot.slane %v1181, 4
    %v1183 = vrot.slane %v1141, 5
    %v1184 = vrot.slane %v1183, 4
    %v1185 = vrot.slane %v1142, 5
    %v1186 = vrot.slane %v1185, 4
    %v1195 = vadd.f32 %v1125, %v1172
    %v1196 = vadd.f32 %v1126, %v1174
    %v1197 = vadd.f32 %v1127, %v1176
    %v1198 = vadd.f32 %v1128, %v1178
    %v1199 = vadd.f32 %v1129, %v1180
    %v1200 = vadd.f32 %v1130, %v1182
    %v1201 = vadd.f32 %v1131, %v1184
    %v1202 = vadd.f32 %v1132, %v1186
    %v1211 = vrot.slane %v1155, 5
    %v1212 = vrot.slane %v1211, 4
    %v1213 = vrot.slane %v1156, 5
    %v1214 = vrot.slane %v1213, 4
    %v1215 = vrot.slane %v1157, 5
    %v1216 = vrot.slane %v1215, 4
    %v1217 = vrot.slane %v1158, 5
    %v1218 = vrot.slane %v1217, 4
    %v1219 = vrot.slane %v1159, 5
    %v1220 = vrot.slane %v1219, 4
    %v1221 = vrot.slane %v1160, 5
    %v1222 = vrot.slane %v1221, 4
    %v1223 = vrot.slane %v1161, 5
    %v1224 = vrot.slane %v1223, 4
    %v1225 = vrot.slane %v1162, 5
    %v1226 = vrot.slane %v1225, 4
    %v1235 = vadd.f32 %v1145, %v1212
    %v1236 = vadd.f32 %v1146, %v1214
    %v1237 = vadd.f32 %v1147, %v1216
    %v1238 = vadd.f32 %v1148, %v1218
    %v1239 = vadd.f32 %v1149, %v1220
    %v1240 = vadd.f32 %v1150, %v1222
    %v1241 = vadd.f32 %v1151, %v1224
    %v1242 = vadd.f32 %v1152, %v1226
    %v1251 = vrot.slane %v1235, 6
    %v1252 = vrot.slane %v1251, 4
    %v1253 = vrot.slane %v1236, 6
    %v1254 = vrot.slane %v1253, 4
    %v1255 = vrot.slane %v1237, 6
    %v1256 = vrot.slane %v1255, 4
    %v1257 = vrot.slane %v1238, 6
    %v1258 = vrot.slane %v1257, 4
    %v1259 = vrot.slane %v1239, 6
    %v1260 = vrot.slane %v1259, 4
    %v1261 = vrot.slane %v1240, 6
    %v1262 = vrot.slane %v1261, 4
    %v1263 = vrot.slane %v1241, 6
    %v1264 = vrot.slane %v1263, 4
    %v1265 = vrot.slane %v1242, 6
    %v1266 = vrot.slane %v1265, 4
    %v1275 = vadd.f32 %v1195, %v1252
    %v1276 = vadd.f32 %v1196, %v1254
    %v1277 = vadd.f32 %v1197, %v1256
    %v1278 = vadd.f32 %v1198, %v1258
    %v1279 = vadd.f32 %v1199, %v1260
    %v1280 = vadd.f32 %v1200, %v1262
    %v1281 = vadd.f32 %v1201, %v1264
    %v1282 = vadd.f32 %v1202, %v1266
    %s1283 = sld [smem:[#allocation6 + $0x5]]
    %v1284 = vstv %s1283
    %v1285 = vadd.f32 %v1275, %v1284
    %v1286 = vadd.f32 %v1276, %v1284
    %v1287 = vadd.f32 %v1277, %v1284
    %v1288 = vadd.f32 %v1278, %v1284
    %v1289 = vadd.f32 %v1279, %v1284
    %v1290 = vadd.f32 %v1280, %v1284
    %v1291 = vadd.f32 %v1281, %v1284
    %v1292 = vadd.f32 %v1282, %v1284
    %v1293 = vmax.f32 %v1285, 0.0
    %v1294 = vmax.f32 %v1286, 0.0
    %v1295 = vmax.f32 %v1287, 0.0
    %v1296 = vmax.f32 %v1288, 0.0
    %v1297 = vmax.f32 %v1289, 0.0
    %v1298 = vmax.f32 %v1290, 0.0
    %v1299 = vmax.f32 %v1291, 0.0
    %v1300 = vmax.f32 %v1292, 0.0
    %s1301 = sld [smem:[#allocation4 + $0x300]]
    %v1302 = vstv %s1301
    %v1303 = vmul.f32 %v225, %v1302
    %v1304 = vmul.f32 %v226, %v1302
    %v1305 = vmul.f32 %v227, %v1302
    %v1306 = vmul.f32 %v228, %v1302
    %v1307 = vmul.f32 %v229, %v1302
    %v1308 = vmul.f32 %v230, %v1302
    %v1309 = vmul.f32 %v231, %v1302
    %v1310 = vmul.f32 %v232, %v1302
    %s1311 = sld [smem:[#allocation4 + $0x301]]
    %v1312 = vstv %s1311
    %v1313 = vmul.f32 %v225, %v1312
    %v1314 = vmul.f32 %v226, %v1312
    %v1315 = vmul.f32 %v227, %v1312
    %v1316 = vmul.f32 %v228, %v1312
    %v1317 = vmul.f32 %v229, %v1312
    %v1318 = vmul.f32 %v230, %v1312
    %v1319 = vmul.f32 %v231, %v1312
    %v1320 = vmul.f32 %v232, %v1312
    %s1321 = sld [smem:[#allocation4 + $0x302]]
    %v1322 = vstv %s1321
    %v1323 = vmul.f32 %v225, %v1322
    %v1324 = vmul.f32 %v226, %v1322
    %v1325 = vmul.f32 %v227, %v1322
    %v1326 = vmul.f32 %v228, %v1322
    %v1327 = vmul.f32 %v229, %v1322
    %v1328 = vmul.f32 %v230, %v1322
    %v1329 = vmul.f32 %v231, %v1322
    %v1330 = vmul.f32 %v232, %v1322
    %s1331 = sld [smem:[#allocation4 + $0x303]]
    %v1332 = vstv %s1331
    %v1333 = vmul.f32 %v225, %v1332
    %v1334 = vmul.f32 %v226, %v1332
    %v1335 = vmul.f32 %v227, %v1332
    %v1336 = vmul.f32 %v228, %v1332
    %v1337 = vmul.f32 %v229, %v1332
    %v1338 = vmul.f32 %v230, %v1332
    %v1339 = vmul.f32 %v231, %v1332
    %v1340 = vmul.f32 %v232, %v1332
    %v1349 = vrot.slane %v1313, 5
    %v1350 = vrot.slane %v1349, 4
    %v1351 = vrot.slane %v1314, 5
    %v1352 = vrot.slane %v1351, 4
    %v1353 = vrot.slane %v1315, 5
    %v1354 = vrot.slane %v1353, 4
    %v1355 = vrot.slane %v1316, 5
    %v1356 = vrot.slane %v1355, 4
    %v1357 = vrot.slane %v1317, 5
    %v1358 = vrot.slane %v1357, 4
    %v1359 = vrot.slane %v1318, 5
    %v1360 = vrot.slane %v1359, 4
    %v1361 = vrot.slane %v1319, 5
    %v1362 = vrot.slane %v1361, 4
    %v1363 = vrot.slane %v1320, 5
    %v1364 = vrot.slane %v1363, 4
    %v1373 = vadd.f32 %v1303, %v1350
    %v1374 = vadd.f32 %v1304, %v1352
    %v1375 = vadd.f32 %v1305, %v1354
    %v1376 = vadd.f32 %v1306, %v1356
    %v1377 = vadd.f32 %v1307, %v1358
    %v1378 = vadd.f32 %v1308, %v1360
    %v1379 = vadd.f32 %v1309, %v1362
    %v1380 = vadd.f32 %v1310, %v1364
    %v1389 = vrot.slane %v1333, 5
    %v1390 = vrot.slane %v1389, 4
    %v1391 = vrot.slane %v1334, 5
    %v1392 = vrot.slane %v1391, 4
    %v1393 = vrot.slane %v1335, 5
    %v1394 = vrot.slane %v1393, 4
    %v1395 = vrot.slane %v1336, 5
    %v1396 = vrot.slane %v1395, 4
    %v1397 = vrot.slane %v1337, 5
    %v1398 = vrot.slane %v1397, 4
    %v1399 = vrot.slane %v1338, 5
    %v1400 = vrot.slane %v1399, 4
    %v1401 = vrot.slane %v1339, 5
    %v1402 = vrot.slane %v1401, 4
    %v1403 = vrot.slane %v1340, 5
    %v1404 = vrot.slane %v1403, 4
    %v1413 = vadd.f32 %v1323, %v1390
    %v1414 = vadd.f32 %v1324, %v1392
    %v1415 = vadd.f32 %v1325, %v1394
    %v1416 = vadd.f32 %v1326, %v1396
    %v1417 = vadd.f32 %v1327, %v1398
    %v1418 = vadd.f32 %v1328, %v1400
    %v1419 = vadd.f32 %v1329, %v1402
    %v1420 = vadd.f32 %v1330, %v1404
    %v1429 = vrot.slane %v1413, 6
    %v1430 = vrot.slane %v1429, 4
    %v1431 = vrot.slane %v1414, 6
    %v1432 = vrot.slane %v1431, 4
    %v1433 = vrot.slane %v1415, 6
    %v1434 = vrot.slane %v1433, 4
    %v1435 = vrot.slane %v1416, 6
    %v1436 = vrot.slane %v1435, 4
    %v1437 = vrot.slane %v1417, 6
    %v1438 = vrot.slane %v1437, 4
    %v1439 = vrot.slane %v1418, 6
    %v1440 = vrot.slane %v1439, 4
    %v1441 = vrot.slane %v1419, 6
    %v1442 = vrot.slane %v1441, 4
    %v1443 = vrot.slane %v1420, 6
    %v1444 = vrot.slane %v1443, 4
    %v1453 = vadd.f32 %v1373, %v1430
    %v1454 = vadd.f32 %v1374, %v1432
    %v1455 = vadd.f32 %v1375, %v1434
    %v1456 = vadd.f32 %v1376, %v1436
    %v1457 = vadd.f32 %v1377, %v1438
    %v1458 = vadd.f32 %v1378, %v1440
    %v1459 = vadd.f32 %v1379, %v1442
    %v1460 = vadd.f32 %v1380, %v1444
    %s1461 = sld [smem:[#allocation6 + $0x6]]
    %v1462 = vstv %s1461
    %v1463 = vadd.f32 %v1453, %v1462
    %v1464 = vadd.f32 %v1454, %v1462
    %v1465 = vadd.f32 %v1455, %v1462
    %v1466 = vadd.f32 %v1456, %v1462
    %v1467 = vadd.f32 %v1457, %v1462
    %v1468 = vadd.f32 %v1458, %v1462
    %v1469 = vadd.f32 %v1459, %v1462
    %v1470 = vadd.f32 %v1460, %v1462
    %v1471 = vmax.f32 %v1463, 0.0
    %v1472 = vmax.f32 %v1464, 0.0
    %v1473 = vmax.f32 %v1465, 0.0
    %v1474 = vmax.f32 %v1466, 0.0
    %v1475 = vmax.f32 %v1467, 0.0
    %v1476 = vmax.f32 %v1468, 0.0
    %v1477 = vmax.f32 %v1469, 0.0
    %v1478 = vmax.f32 %v1470, 0.0
    %s1479 = sld [smem:[#allocation4 + $0x380]]
    %v1480 = vstv %s1479
    %v1481 = vmul.f32 %v225, %v1480
    %v1482 = vmul.f32 %v226, %v1480
    %v1483 = vmul.f32 %v227, %v1480
    %v1484 = vmul.f32 %v228, %v1480
    %v1485 = vmul.f32 %v229, %v1480
    %v1486 = vmul.f32 %v230, %v1480
    %v1487 = vmul.f32 %v231, %v1480
    %v1488 = vmul.f32 %v232, %v1480
    %s1489 = sld [smem:[#allocation4 + $0x381]]
    %v1490 = vstv %s1489
    %v1491 = vmul.f32 %v225, %v1490
    %v1492 = vmul.f32 %v226, %v1490
    %v1493 = vmul.f32 %v227, %v1490
    %v1494 = vmul.f32 %v228, %v1490
    %v1495 = vmul.f32 %v229, %v1490
    %v1496 = vmul.f32 %v230, %v1490
    %v1497 = vmul.f32 %v231, %v1490
    %v1498 = vmul.f32 %v232, %v1490
    %s1499 = sld [smem:[#allocation4 + $0x382]]
    %v1500 = vstv %s1499
    %v1501 = vmul.f32 %v225, %v1500
    %v1502 = vmul.f32 %v226, %v1500
    %v1503 = vmul.f32 %v227, %v1500
    %v1504 = vmul.f32 %v228, %v1500
    %v1505 = vmul.f32 %v229, %v1500
    %v1506 = vmul.f32 %v230, %v1500
    %v1507 = vmul.f32 %v231, %v1500
    %v1508 = vmul.f32 %v232, %v1500
    %s1509 = sld [smem:[#allocation4 + $0x383]]
    %v1510 = vstv %s1509
    %v1511 = vmul.f32 %v225, %v1510
    %v1512 = vmul.f32 %v226, %v1510
    %v1513 = vmul.f32 %v227, %v1510
    %v1514 = vmul.f32 %v228, %v1510
    %v1515 = vmul.f32 %v229, %v1510
    %v1516 = vmul.f32 %v230, %v1510
    %v1517 = vmul.f32 %v231, %v1510
    %v1518 = vmul.f32 %v232, %v1510
    %v1527 = vrot.slane %v1491, 5
    %v1528 = vrot.slane %v1527, 4
    %v1529 = vrot.slane %v1492, 5
    %v1530 = vrot.slane %v1529, 4
    %v1531 = vrot.slane %v1493, 5
    %v1532 = vrot.slane %v1531, 4
    %v1533 = vrot.slane %v1494, 5
    %v1534 = vrot.slane %v1533, 4
    %v1535 = vrot.slane %v1495, 5
    %v1536 = vrot.slane %v1535, 4
    %v1537 = vrot.slane %v1496, 5
    %v1538 = vrot.slane %v1537, 4
    %v1539 = vrot.slane %v1497, 5
    %v1540 = vrot.slane %v1539, 4
    %v1541 = vrot.slane %v1498, 5
    %v1542 = vrot.slane %v1541, 4
    %v1551 = vadd.f32 %v1481, %v1528
    %v1552 = vadd.f32 %v1482, %v1530
    %v1553 = vadd.f32 %v1483, %v1532
    %v1554 = vadd.f32 %v1484, %v1534
    %v1555 = vadd.f32 %v1485, %v1536
    %v1556 = vadd.f32 %v1486, %v1538
    %v1557 = vadd.f32 %v1487, %v1540
    %v1558 = vadd.f32 %v1488, %v1542
    %v1567 = vrot.slane %v1511, 5
    %v1568 = vrot.slane %v1567, 4
    %v1569 = vrot.slane %v1512, 5
    %v1570 = vrot.slane %v1569, 4
    %v1571 = vrot.slane %v1513, 5
    %v1572 = vrot.slane %v1571, 4
    %v1573 = vrot.slane %v1514, 5
    %v1574 = vrot.slane %v1573, 4
    %v1575 = vrot.slane %v1515, 5
    %v1576 = vrot.slane %v1575, 4
    %v1577 = vrot.slane %v1516, 5
    %v1578 = vrot.slane %v1577, 4
    %v1579 = vrot.slane %v1517, 5
    %v1580 = vrot.slane %v1579, 4
    %v1581 = vrot.slane %v1518, 5
    %v1582 = vrot.slane %v1581, 4
    %v1591 = vadd.f32 %v1501, %v1568
    %v1592 = vadd.f32 %v1502, %v1570
    %v1593 = vadd.f32 %v1503, %v1572
    %v1594 = vadd.f32 %v1504, %v1574
    %v1595 = vadd.f32 %v1505, %v1576
    %v1596 = vadd.f32 %v1506, %v1578
    %v1597 = vadd.f32 %v1507, %v1580
    %v1598 = vadd.f32 %v1508, %v1582
    %v1607 = vrot.slane %v1591, 6
    %v1608 = vrot.slane %v1607, 4
    %v1609 = vrot.slane %v1592, 6
    %v1610 = vrot.slane %v1609, 4
    %v1611 = vrot.slane %v1593, 6
    %v1612 = vrot.slane %v1611, 4
    %v1613 = vrot.slane %v1594, 6
    %v1614 = vrot.slane %v1613, 4
    %v1615 = vrot.slane %v1595, 6
    %v1616 = vrot.slane %v1615, 4
    %v1617 = vrot.slane %v1596, 6
    %v1618 = vrot.slane %v1617, 4
    %v1619 = vrot.slane %v1597, 6
    %v1620 = vrot.slane %v1619, 4
    %v1621 = vrot.slane %v1598, 6
    %v1622 = vrot.slane %v1621, 4
    %v1631 = vadd.f32 %v1551, %v1608
    %v1632 = vadd.f32 %v1552, %v1610
    %v1633 = vadd.f32 %v1553, %v1612
    %v1634 = vadd.f32 %v1554, %v1614
    %v1635 = vadd.f32 %v1555, %v1616
    %v1636 = vadd.f32 %v1556, %v1618
    %v1637 = vadd.f32 %v1557, %v1620
    %v1638 = vadd.f32 %v1558, %v1622
    %s1639 = sld [smem:[#allocation6 + $0x7]]
    %v1640 = vstv %s1639
    %v1641 = vadd.f32 %v1631, %v1640
    %v1642 = vadd.f32 %v1632, %v1640
    %v1643 = vadd.f32 %v1633, %v1640
    %v1644 = vadd.f32 %v1634, %v1640
    %v1645 = vadd.f32 %v1635, %v1640
    %v1646 = vadd.f32 %v1636, %v1640
    %v1647 = vadd.f32 %v1637, %v1640
    %v1648 = vadd.f32 %v1638, %v1640
    %v1649 = vmax.f32 %v1641, 0.0
    %v1650 = vmax.f32 %v1642, 0.0
    %v1651 = vmax.f32 %v1643, 0.0
    %v1652 = vmax.f32 %v1644, 0.0
    %v1653 = vmax.f32 %v1645, 0.0
    %v1654 = vmax.f32 %v1646, 0.0
    %v1655 = vmax.f32 %v1647, 0.0
    %v1656 = vmax.f32 %v1648, 0.0
    %s1657 = sld [smem:[#allocation8]]
    %v1658 = vstv %s1657
    %v1659 = vmul.f32 %v403, %v1658
    %v1660 = vmul.f32 %v404, %v1658
    %v1661 = vmul.f32 %v405, %v1658
    %v1662 = vmul.f32 %v406, %v1658
    %v1663 = vmul.f32 %v407, %v1658
    %v1664 = vmul.f32 %v408, %v1658
    %v1665 = vmul.f32 %v409, %v1658
    %v1666 = vmul.f32 %v410, %v1658
    %s1667 = sld [smem:[#allocation8 + $0x1]]
    %v1668 = vstv %s1667
    %v1669 = vmul.f32 %v581, %v1668
    %v1670 = vmul.f32 %v582, %v1668
    %v1671 = vmul.f32 %v583, %v1668
    %v1672 = vmul.f32 %v584, %v1668
    %v1673 = vmul.f32 %v585, %v1668
    %v1674 = vmul.f32 %v586, %v1668
    %v1675 = vmul.f32 %v587, %v1668
    %v1676 = vmul.f32 %v588, %v1668
    %s1677 = sld [smem:[#allocation8 + $0x2]]
    %v1678 = vstv %s1677
    %v1679 = vmul.f32 %v759, %v1678
    %v1680 = vmul.f32 %v760, %v1678
    %v1681 = vmul.f32 %v761, %v1678
    %v1682 = vmul.f32 %v762, %v1678
    %v1683 = vmul.f32 %v763, %v1678
    %v1684 = vmul.f32 %v764, %v1678
    %v1685 = vmul.f32 %v765, %v1678
    %v1686 = vmul.f32 %v766, %v1678
    %s1687 = sld [smem:[#allocation8 + $0x3]]
    %v1688 = vstv %s1687
    %v1689 = vmul.f32 %v937, %v1688
    %v1690 = vmul.f32 %v938, %v1688
    %v1691 = vmul.f32 %v939, %v1688
    %v1692 = vmul.f32 %v940, %v1688
    %v1693 = vmul.f32 %v941, %v1688
    %v1694 = vmul.f32 %v942, %v1688
    %v1695 = vmul.f32 %v943, %v1688
    %v1696 = vmul.f32 %v944, %v1688
    %s1697 = sld [smem:[#allocation8 + $0x4]]
    %v1698 = vstv %s1697
    %v1699 = vmul.f32 %v1115, %v1698
    %v1700 = vmul.f32 %v1116, %v1698
    %v1701 = vmul.f32 %v1117, %v1698
    %v1702 = vmul.f32 %v1118, %v1698
    %v1703 = vmul.f32 %v1119, %v1698
    %v1704 = vmul.f32 %v1120, %v1698
    %v1705 = vmul.f32 %v1121, %v1698
    %v1706 = vmul.f32 %v1122, %v1698
    %s1707 = sld [smem:[#allocation8 + $0x5]]
    %v1708 = vstv %s1707
    %v1709 = vmul.f32 %v1293, %v1708
    %v1710 = vmul.f32 %v1294, %v1708
    %v1711 = vmul.f32 %v1295, %v1708
    %v1712 = vmul.f32 %v1296, %v1708
    %v1713 = vmul.f32 %v1297, %v1708
    %v1714 = vmul.f32 %v1298, %v1708
    %v1715 = vmul.f32 %v1299, %v1708
    %v1716 = vmul.f32 %v1300, %v1708
    %s1717 = sld [smem:[#allocation8 + $0x6]]
    %v1718 = vstv %s1717
    %v1719 = vmul.f32 %v1471, %v1718
    %v1720 = vmul.f32 %v1472, %v1718
    %v1721 = vmul.f32 %v1473, %v1718
    %v1722 = vmul.f32 %v1474, %v1718
    %v1723 = vmul.f32 %v1475, %v1718
    %v1724 = vmul.f32 %v1476, %v1718
    %v1725 = vmul.f32 %v1477, %v1718
    %v1726 = vmul.f32 %v1478, %v1718
    %s1727 = sld [smem:[#allocation8 + $0x7]]
    %v1728 = vstv %s1727
    %v1729 = vmul.f32 %v1649, %v1728
    %v1730 = vmul.f32 %v1650, %v1728
    %v1731 = vmul.f32 %v1651, %v1728
    %v1732 = vmul.f32 %v1652, %v1728
    %v1733 = vmul.f32 %v1653, %v1728
    %v1734 = vmul.f32 %v1654, %v1728
    %v1735 = vmul.f32 %v1655, %v1728
    %v1736 = vmul.f32 %v1656, %v1728
    %v1737 = vadd.f32 %v1659, %v1669
    %v1738 = vadd.f32 %v1660, %v1670
    %v1739 = vadd.f32 %v1661, %v1671
    %v1740 = vadd.f32 %v1662, %v1672
    %v1741 = vadd.f32 %v1663, %v1673
    %v1742 = vadd.f32 %v1664, %v1674
    %v1743 = vadd.f32 %v1665, %v1675
    %v1744 = vadd.f32 %v1666, %v1676
    %v1745 = vadd.f32 %v1679, %v1689
    %v1746 = vadd.f32 %v1680, %v1690
    %v1747 = vadd.f32 %v1681, %v1691
    %v1748 = vadd.f32 %v1682, %v1692
    %v1749 = vadd.f32 %v1683, %v1693
    %v1750 = vadd.f32 %v1684, %v1694
    %v1751 = vadd.f32 %v1685, %v1695
    %v1752 = vadd.f32 %v1686, %v1696
    %v1753 = vadd.f32 %v1699, %v1709
    %v1754 = vadd.f32 %v1700, %v1710
    %v1755 = vadd.f32 %v1701, %v1711
    %v1756 = vadd.f32 %v1702, %v1712
    %v1757 = vadd.f32 %v1703, %v1713
    %v1758 = vadd.f32 %v1704, %v1714
    %v1759 = vadd.f32 %v1705, %v1715
    %v1760 = vadd.f32 %v1706, %v1716
    %v1761 = vadd.f32 %v1719, %v1729
    %v1762 = vadd.f32 %v1720, %v1730
    %v1763 = vadd.f32 %v1721, %v1731
    %v1764 = vadd.f32 %v1722, %v1732
    %v1765 = vadd.f32 %v1723, %v1733
    %v1766 = vadd.f32 %v1724, %v1734
    %v1767 = vadd.f32 %v1725, %v1735
    %v1768 = vadd.f32 %v1726, %v1736
    %v1769 = vadd.f32 %v1737, %v1745
    %v1770 = vadd.f32 %v1738, %v1746
    %v1771 = vadd.f32 %v1739, %v1747
    %v1772 = vadd.f32 %v1740, %v1748
    %v1773 = vadd.f32 %v1741, %v1749
    %v1774 = vadd.f32 %v1742, %v1750
    %v1775 = vadd.f32 %v1743, %v1751
    %v1776 = vadd.f32 %v1744, %v1752
    %v1777 = vadd.f32 %v1753, %v1761
    %v1778 = vadd.f32 %v1754, %v1762
    %v1779 = vadd.f32 %v1755, %v1763
    %v1780 = vadd.f32 %v1756, %v1764
    %v1781 = vadd.f32 %v1757, %v1765
    %v1782 = vadd.f32 %v1758, %v1766
    %v1783 = vadd.f32 %v1759, %v1767
    %v1784 = vadd.f32 %v1760, %v1768
    %v1785 = vadd.f32 %v1769, %v1777
    %v1786 = vadd.f32 %v1770, %v1778
    %v1787 = vadd.f32 %v1771, %v1779
    %v1788 = vadd.f32 %v1772, %v1780
    %v1789 = vadd.f32 %v1773, %v1781
    %v1790 = vadd.f32 %v1774, %v1782
    %v1791 = vadd.f32 %v1775, %v1783
    %v1792 = vadd.f32 %v1776, %v1784
    %s1793 = sld [smem:[#allocation9]]
    %v1794 = vstv %s1793
    %v1795 = vadd.f32 %v1785, %v1794
    %v1796 = vadd.f32 %v1786, %v1794
    %v1797 = vadd.f32 %v1787, %v1794
    %v1798 = vadd.f32 %v1788, %v1794
    %v1799 = vadd.f32 %v1789, %v1794
    %v1800 = vadd.f32 %v1790, %v1794
    %v1801 = vadd.f32 %v1791, %v1794
    %v1802 = vadd.f32 %v1792, %v1794
    %v1803 = vmax.f32 %v1795, 0.0
    %v1804 = vmax.f32 %v1796, 0.0
    %v1805 = vmax.f32 %v1797, 0.0
    %v1806 = vmax.f32 %v1798, 0.0
    %v1807 = vmax.f32 %v1799, 0.0
    %v1808 = vmax.f32 %v1800, 0.0
    %v1809 = vmax.f32 %v1801, 0.0
    %v1810 = vmax.f32 %v1802, 0.0
    %s1811 = sld [smem:[#allocation11]]
    %v1812 = vstv %s1811
    %v1813 = vmul.f32 %v1803, %v1812
    %v1814 = vmul.f32 %v1804, %v1812
    %v1815 = vmul.f32 %v1805, %v1812
    %v1816 = vmul.f32 %v1806, %v1812
    %v1817 = vmul.f32 %v1807, %v1812
    %v1818 = vmul.f32 %v1808, %v1812
    %v1819 = vmul.f32 %v1809, %v1812
    %v1820 = vmul.f32 %v1810, %v1812
    %s1821 = sld [smem:[#allocation8 + $0x80]]
    %v1822 = vstv %s1821
    %v1823 = vmul.f32 %v403, %v1822
    %v1824 = vmul.f32 %v404, %v1822
    %v1825 = vmul.f32 %v405, %v1822
    %v1826 = vmul.f32 %v406, %v1822
    %v1827 = vmul.f32 %v407, %v1822
    %v1828 = vmul.f32 %v408, %v1822
    %v1829 = vmul.f32 %v409, %v1822
    %v1830 = vmul.f32 %v410, %v1822
    %s1831 = sld [smem:[#allocation8 + $0x81]]
    %v1832 = vstv %s1831
    %v1833 = vmul.f32 %v581, %v1832
    %v1834 = vmul.f32 %v582, %v1832
    %v1835 = vmul.f32 %v583, %v1832
    %v1836 = vmul.f32 %v584, %v1832
    %v1837 = vmul.f32 %v585, %v1832
    %v1838 = vmul.f32 %v586, %v1832
    %v1839 = vmul.f32 %v587, %v1832
    %v1840 = vmul.f32 %v588, %v1832
    %s1841 = sld [smem:[#allocation8 + $0x82]]
    %v1842 = vstv %s1841
    %v1843 = vmul.f32 %v759, %v1842
    %v1844 = vmul.f32 %v760, %v1842
    %v1845 = vmul.f32 %v761, %v1842
    %v1846 = vmul.f32 %v762, %v1842
    %v1847 = vmul.f32 %v763, %v1842
    %v1848 = vmul.f32 %v764, %v1842
    %v1849 = vmul.f32 %v765, %v1842
    %v1850 = vmul.f32 %v766, %v1842
    %s1851 = sld [smem:[#allocation8 + $0x83]]
    %v1852 = vstv %s1851
    %v1853 = vmul.f32 %v937, %v1852
    %v1854 = vmul.f32 %v938, %v1852
    %v1855 = vmul.f32 %v939, %v1852
    %v1856 = vmul.f32 %v940, %v1852
    %v1857 = vmul.f32 %v941, %v1852
    %v1858 = vmul.f32 %v942, %v1852
    %v1859 = vmul.f32 %v943, %v1852
    %v1860 = vmul.f32 %v944, %v1852
    %s1861 = sld [smem:[#allocation8 + $0x84]]
    %v1862 = vstv %s1861
    %v1863 = vmul.f32 %v1115, %v1862
    %v1864 = vmul.f32 %v1116, %v1862
    %v1865 = vmul.f32 %v1117, %v1862
    %v1866 = vmul.f32 %v1118, %v1862
    %v1867 = vmul.f32 %v1119, %v1862
    %v1868 = vmul.f32 %v1120, %v1862
    %v1869 = vmul.f32 %v1121, %v1862
    %v1870 = vmul.f32 %v1122, %v1862
    %s1871 = sld [smem:[#allocation8 + $0x85]]
    %v1872 = vstv %s1871
    %v1873 = vmul.f32 %v1293, %v1872
    %v1874 = vmul.f32 %v1294, %v1872
    %v1875 = vmul.f32 %v1295, %v1872
    %v1876 = vmul.f32 %v1296, %v1872
    %v1877 = vmul.f32 %v1297, %v1872
    %v1878 = vmul.f32 %v1298, %v1872
    %v1879 = vmul.f32 %v1299, %v1872
    %v1880 = vmul.f32 %v1300, %v1872
    %s1881 = sld [smem:[#allocation8 + $0x86]]
    %v1882 = vstv %s1881
    %v1883 = vmul.f32 %v1471, %v1882
    %v1884 = vmul.f32 %v1472, %v1882
    %v1885 = vmul.f32 %v1473, %v1882
    %v1886 = vmul.f32 %v1474, %v1882
    %v1887 = vmul.f32 %v1475, %v1882
    %v1888 = vmul.f32 %v1476, %v1882
    %v1889 = vmul.f32 %v1477, %v1882
    %v1890 = vmul.f32 %v1478, %v1882
    %s1891 = sld [smem:[#allocation8 + $0x87]]
    %v1892 = vstv %s1891
    %v1893 = vmul.f32 %v1649, %v1892
    %v1894 = vmul.f32 %v1650, %v1892
    %v1895 = vmul.f32 %v1651, %v1892
    %v1896 = vmul.f32 %v1652, %v1892
    %v1897 = vmul.f32 %v1653, %v1892
    %v1898 = vmul.f32 %v1654, %v1892
    %v1899 = vmul.f32 %v1655, %v1892
    %v1900 = vmul.f32 %v1656, %v1892
    %v1901 = vadd.f32 %v1823, %v1833
    %v1902 = vadd.f32 %v1824, %v1834
    %v1903 = vadd.f32 %v1825, %v1835
    %v1904 = vadd.f32 %v1826, %v1836
    %v1905 = vadd.f32 %v1827, %v1837
    %v1906 = vadd.f32 %v1828, %v1838
    %v1907 = vadd.f32 %v1829, %v1839
    %v1908 = vadd.f32 %v1830, %v1840
    %v1909 = vadd.f32 %v1843, %v1853
    %v1910 = vadd.f32 %v1844, %v1854
    %v1911 = vadd.f32 %v1845, %v1855
    %v1912 = vadd.f32 %v1846, %v1856
    %v1913 = vadd.f32 %v1847, %v1857
    %v1914 = vadd.f32 %v1848, %v1858
    %v1915 = vadd.f32 %v1849, %v1859
    %v1916 = vadd.f32 %v1850, %v1860
    %v1917 = vadd.f32 %v1863, %v1873
    %v1918 = vadd.f32 %v1864, %v1874
    %v1919 = vadd.f32 %v1865, %v1875
    %v1920 = vadd.f32 %v1866, %v1876
    %v1921 = vadd.f32 %v1867, %v1877
    %v1922 = vadd.f32 %v1868, %v1878
    %v1923 = vadd.f32 %v1869, %v1879
    %v1924 = vadd.f32 %v1870, %v1880
    %v1925 = vadd.f32 %v1883, %v1893
    %v1926 = vadd.f32 %v1884, %v1894
    %v1927 = vadd.f32 %v1885, %v1895
    %v1928 = vadd.f32 %v1886, %v1896
    %v1929 = vadd.f32 %v1887, %v1897
    %v1930 = vadd.f32 %v1888, %v1898
    %v1931 = vadd.f32 %v1889, %v1899
    %v1932 = vadd.f32 %v1890, %v1900
    %v1933 = vadd.f32 %v1901, %v1909
    %v1934 = vadd.f32 %v1902, %v1910
    %v1935 = vadd.f32 %v1903, %v1911
    %v1936 = vadd.f32 %v1904, %v1912
    %v1937 = vadd.f32 %v1905, %v1913
    %v1938 = vadd.f32 %v1906, %v1914
    %v1939 = vadd.f32 %v1907, %v1915
    %v1940 = vadd.f32 %v1908, %v1916
    %v1941 = vadd.f32 %v1917, %v1925
    %v1942 = vadd.f32 %v1918, %v1926
    %v1943 = vadd.f32 %v1919, %v1927
    %v1944 = vadd.f32 %v1920, %v1928
    %v1945 = vadd.f32 %v1921, %v1929
    %v1946 = vadd.f32 %v1922, %v1930
    %v1947 = vadd.f32 %v1923, %v1931
    %v1948 = vadd.f32 %v1924, %v1932
    %v1949 = vadd.f32 %v1933, %v1941
    %v1950 = vadd.f32 %v1934, %v1942
    %v1951 = vadd.f32 %v1935, %v1943
    %v1952 = vadd.f32 %v1936, %v1944
    %v1953 = vadd.f32 %v1937, %v1945
    %v1954 = vadd.f32 %v1938, %v1946
    %v1955 = vadd.f32 %v1939, %v1947
    %v1956 = vadd.f32 %v1940, %v1948
    %s1957 = sld [smem:[#allocation9 + $0x1]]
    %v1958 = vstv %s1957
    %v1959 = vadd.f32 %v1949, %v1958
    %v1960 = vadd.f32 %v1950, %v1958
    %v1961 = vadd.f32 %v1951, %v1958
    %v1962 = vadd.f32 %v1952, %v1958
    %v1963 = vadd.f32 %v1953, %v1958
    %v1964 = vadd.f32 %v1954, %v1958
    %v1965 = vadd.f32 %v1955, %v1958
    %v1966 = vadd.f32 %v1956, %v1958
    %v1967 = vmax.f32 %v1959, 0.0
    %v1968 = vmax.f32 %v1960, 0.0
    %v1969 = vmax.f32 %v1961, 0.0
    %v1970 = vmax.f32 %v1962, 0.0
    %v1971 = vmax.f32 %v1963, 0.0
    %v1972 = vmax.f32 %v1964, 0.0
    %v1973 = vmax.f32 %v1965, 0.0
    %v1974 = vmax.f32 %v1966, 0.0
    %s1975 = sld [smem:[#allocation11 + $0x1]]
    %v1976 = vstv %s1975
    %v1977 = vmul.f32 %v1967, %v1976
    %v1978 = vmul.f32 %v1968, %v1976
    %v1979 = vmul.f32 %v1969, %v1976
    %v1980 = vmul.f32 %v1970, %v1976
    %v1981 = vmul.f32 %v1971, %v1976
    %v1982 = vmul.f32 %v1972, %v1976
    %v1983 = vmul.f32 %v1973, %v1976
    %v1984 = vmul.f32 %v1974, %v1976
    %s1985 = sld [smem:[#allocation8 + $0x100]]
    %v1986 = vstv %s1985
    %v1987 = vmul.f32 %v403, %v1986
    %v1988 = vmul.f32 %v404, %v1986
    %v1989 = vmul.f32 %v405, %v1986
    %v1990 = vmul.f32 %v406, %v1986
    %v1991 = vmul.f32 %v407, %v1986
    %v1992 = vmul.f32 %v408, %v1986
    %v1993 = vmul.f32 %v409, %v1986
    %v1994 = vmul.f32 %v410, %v1986
    %s1995 = sld [smem:[#allocation8 + $0x101]]
    %v1996 = vstv %s1995
    %v1997 = vmul.f32 %v581, %v1996
    %v1998 = vmul.f32 %v582, %v1996
    %v1999 = vmul.f32 %v583, %v1996
    %v2000 = vmul.f32 %v584, %v1996
    %v2001 = vmul.f32 %v585, %v1996
    %v2002 = vmul.f32 %v586, %v1996
    %v2003 = vmul.f32 %v587, %v1996
    %v2004 = vmul.f32 %v588, %v1996
    %s2005 = sld [smem:[#allocation8 + $0x102]]
    %v2006 = vstv %s2005
    %v2007 = vmul.f32 %v759, %v2006
    %v2008 = vmul.f32 %v760, %v2006
    %v2009 = vmul.f32 %v761, %v2006
    %v2010 = vmul.f32 %v762, %v2006
    %v2011 = vmul.f32 %v763, %v2006
    %v2012 = vmul.f32 %v764, %v2006
    %v2013 = vmul.f32 %v765, %v2006
    %v2014 = vmul.f32 %v766, %v2006
    %s2015 = sld [smem:[#allocation8 + $0x103]]
    %v2016 = vstv %s2015
    %v2017 = vmul.f32 %v937, %v2016
    %v2018 = vmul.f32 %v938, %v2016
    %v2019 = vmul.f32 %v939, %v2016
    %v2020 = vmul.f32 %v940, %v2016
    %v2021 = vmul.f32 %v941, %v2016
    %v2022 = vmul.f32 %v942, %v2016
    %v2023 = vmul.f32 %v943, %v2016
    %v2024 = vmul.f32 %v944, %v2016
    %s2025 = sld [smem:[#allocation8 + $0x104]]
    %v2026 = vstv %s2025
    %v2027 = vmul.f32 %v1115, %v2026
    %v2028 = vmul.f32 %v1116, %v2026
    %v2029 = vmul.f32 %v1117, %v2026
    %v2030 = vmul.f32 %v1118, %v2026
    %v2031 = vmul.f32 %v1119, %v2026
    %v2032 = vmul.f32 %v1120, %v2026
    %v2033 = vmul.f32 %v1121, %v2026
    %v2034 = vmul.f32 %v1122, %v2026
    %s2035 = sld [smem:[#allocation8 + $0x105]]
    %v2036 = vstv %s2035
    %v2037 = vmul.f32 %v1293, %v2036
    %v2038 = vmul.f32 %v1294, %v2036
    %v2039 = vmul.f32 %v1295, %v2036
    %v2040 = vmul.f32 %v1296, %v2036
    %v2041 = vmul.f32 %v1297, %v2036
    %v2042 = vmul.f32 %v1298, %v2036
    %v2043 = vmul.f32 %v1299, %v2036
    %v2044 = vmul.f32 %v1300, %v2036
    %s2045 = sld [smem:[#allocation8 + $0x106]]
    %v2046 = vstv %s2045
    %v2047 = vmul.f32 %v1471, %v2046
    %v2048 = vmul.f32 %v1472, %v2046
    %v2049 = vmul.f32 %v1473, %v2046
    %v2050 = vmul.f32 %v1474, %v2046
    %v2051 = vmul.f32 %v1475, %v2046
    %v2052 = vmul.f32 %v1476, %v2046
    %v2053 = vmul.f32 %v1477, %v2046
    %v2054 = vmul.f32 %v1478, %v2046
    %s2055 = sld [smem:[#allocation8 + $0x107]]
    %v2056 = vstv %s2055
    %v2057 = vmul.f32 %v1649, %v2056
    %v2058 = vmul.f32 %v1650, %v2056
    %v2059 = vmul.f32 %v1651, %v2056
    %v2060 = vmul.f32 %v1652, %v2056
    %v2061 = vmul.f32 %v1653, %v2056
    %v2062 = vmul.f32 %v1654, %v2056
    %v2063 = vmul.f32 %v1655, %v2056
    %v2064 = vmul.f32 %v1656, %v2056
    %v2065 = vadd.f32 %v1987, %v1997
    %v2066 = vadd.f32 %v1988, %v1998
    %v2067 = vadd.f32 %v1989, %v1999
    %v2068 = vadd.f32 %v1990, %v2000
    %v2069 = vadd.f32 %v1991, %v2001
    %v2070 = vadd.f32 %v1992, %v2002
    %v2071 = vadd.f32 %v1993, %v2003
    %v2072 = vadd.f32 %v1994, %v2004
    %v2073 = vadd.f32 %v2007, %v2017
    %v2074 = vadd.f32 %v2008, %v2018
    %v2075 = vadd.f32 %v2009, %v2019
    %v2076 = vadd.f32 %v2010, %v2020
    %v2077 = vadd.f32 %v2011, %v2021
    %v2078 = vadd.f32 %v2012, %v2022
    %v2079 = vadd.f32 %v2013, %v2023
    %v2080 = vadd.f32 %v2014, %v2024
    %v2081 = vadd.f32 %v2027, %v2037
    %v2082 = vadd.f32 %v2028, %v2038
    %v2083 = vadd.f32 %v2029, %v2039
    %v2084 = vadd.f32 %v2030, %v2040
    %v2085 = vadd.f32 %v2031, %v2041
    %v2086 = vadd.f32 %v2032, %v2042
    %v2087 = vadd.f32 %v2033, %v2043
    %v2088 = vadd.f32 %v2034, %v2044
    %v2089 = vadd.f32 %v2047, %v2057
    %v2090 = vadd.f32 %v2048, %v2058
    %v2091 = vadd.f32 %v2049, %v2059
    %v2092 = vadd.f32 %v2050, %v2060
    %v2093 = vadd.f32 %v2051, %v2061
    %v2094 = vadd.f32 %v2052, %v2062
    %v2095 = vadd.f32 %v2053, %v2063
    %v2096 = vadd.f32 %v2054, %v2064
    %v2097 = vadd.f32 %v2065, %v2073
    %v2098 = vadd.f32 %v2066, %v2074
    %v2099 = vadd.f32 %v2067, %v2075
    %v2100 = vadd.f32 %v2068, %v2076
    %v2101 = vadd.f32 %v2069, %v2077
    %v2102 = vadd.f32 %v2070, %v2078
    %v2103 = vadd.f32 %v2071, %v2079
    %v2104 = vadd.f32 %v2072, %v2080
    %v2105 = vadd.f32 %v2081, %v2089
    %v2106 = vadd.f32 %v2082, %v2090
    %v2107 = vadd.f32 %v2083, %v2091
    %v2108 = vadd.f32 %v2084, %v2092
    %v2109 = vadd.f32 %v2085, %v2093
    %v2110 = vadd.f32 %v2086, %v2094
    %v2111 = vadd.f32 %v2087, %v2095
    %v2112 = vadd.f32 %v2088, %v2096
    %v2113 = vadd.f32 %v2097, %v2105
    %v2114 = vadd.f32 %v2098, %v2106
    %v2115 = vadd.f32 %v2099, %v2107
    %v2116 = vadd.f32 %v2100, %v2108
    %v2117 = vadd.f32 %v2101, %v2109
    %v2118 = vadd.f32 %v2102, %v2110
    %v2119 = vadd.f32 %v2103, %v2111
    %v2120 = vadd.f32 %v2104, %v2112
    %s2121 = sld [smem:[#allocation9 + $0x2]]
    %v2122 = vstv %s2121
    %v2123 = vadd.f32 %v2113, %v2122
    %v2124 = vadd.f32 %v2114, %v2122
    %v2125 = vadd.f32 %v2115, %v2122
    %v2126 = vadd.f32 %v2116, %v2122
    %v2127 = vadd.f32 %v2117, %v2122
    %v2128 = vadd.f32 %v2118, %v2122
    %v2129 = vadd.f32 %v2119, %v2122
    %v2130 = vadd.f32 %v2120, %v2122
    %v2131 = vmax.f32 %v2123, 0.0
    %v2132 = vmax.f32 %v2124, 0.0
    %v2133 = vmax.f32 %v2125, 0.0
    %v2134 = vmax.f32 %v2126, 0.0
    %v2135 = vmax.f32 %v2127, 0.0
    %v2136 = vmax.f32 %v2128, 0.0
    %v2137 = vmax.f32 %v2129, 0.0
    %v2138 = vmax.f32 %v2130, 0.0
    %s2139 = sld [smem:[#allocation11 + $0x2]]
    %v2140 = vstv %s2139
    %v2141 = vmul.f32 %v2131, %v2140
    %v2142 = vmul.f32 %v2132, %v2140
    %v2143 = vmul.f32 %v2133, %v2140
    %v2144 = vmul.f32 %v2134, %v2140
    %v2145 = vmul.f32 %v2135, %v2140
    %v2146 = vmul.f32 %v2136, %v2140
    %v2147 = vmul.f32 %v2137, %v2140
    %v2148 = vmul.f32 %v2138, %v2140
    %s2149 = sld [smem:[#allocation8 + $0x180]]
    %v2150 = vstv %s2149
    %v2151 = vmul.f32 %v403, %v2150
    %v2152 = vmul.f32 %v404, %v2150
    %v2153 = vmul.f32 %v405, %v2150
    %v2154 = vmul.f32 %v406, %v2150
    %v2155 = vmul.f32 %v407, %v2150
    %v2156 = vmul.f32 %v408, %v2150
    %v2157 = vmul.f32 %v409, %v2150
    %v2158 = vmul.f32 %v410, %v2150
    %s2159 = sld [smem:[#allocation8 + $0x181]]
    %v2160 = vstv %s2159
    %v2161 = vmul.f32 %v581, %v2160
    %v2162 = vmul.f32 %v582, %v2160
    %v2163 = vmul.f32 %v583, %v2160
    %v2164 = vmul.f32 %v584, %v2160
    %v2165 = vmul.f32 %v585, %v2160
    %v2166 = vmul.f32 %v586, %v2160
    %v2167 = vmul.f32 %v587, %v2160
    %v2168 = vmul.f32 %v588, %v2160
    %s2169 = sld [smem:[#allocation8 + $0x182]]
    %v2170 = vstv %s2169
    %v2171 = vmul.f32 %v759, %v2170
    %v2172 = vmul.f32 %v760, %v2170
    %v2173 = vmul.f32 %v761, %v2170
    %v2174 = vmul.f32 %v762, %v2170
    %v2175 = vmul.f32 %v763, %v2170
    %v2176 = vmul.f32 %v764, %v2170
    %v2177 = vmul.f32 %v765, %v2170
    %v2178 = vmul.f32 %v766, %v2170
    %s2179 = sld [smem:[#allocation8 + $0x183]]
    %v2180 = vstv %s2179
    %v2181 = vmul.f32 %v937, %v2180
    %v2182 = vmul.f32 %v938, %v2180
    %v2183 = vmul.f32 %v939, %v2180
    %v2184 = vmul.f32 %v940, %v2180
    %v2185 = vmul.f32 %v941, %v2180
    %v2186 = vmul.f32 %v942, %v2180
    %v2187 = vmul.f32 %v943, %v2180
    %v2188 = vmul.f32 %v944, %v2180
    %s2189 = sld [smem:[#allocation8 + $0x184]]
    %v2190 = vstv %s2189
    %v2191 = vmul.f32 %v1115, %v2190
    %v2192 = vmul.f32 %v1116, %v2190
    %v2193 = vmul.f32 %v1117, %v2190
    %v2194 = vmul.f32 %v1118, %v2190
    %v2195 = vmul.f32 %v1119, %v2190
    %v2196 = vmul.f32 %v1120, %v2190
    %v2197 = vmul.f32 %v1121, %v2190
    %v2198 = vmul.f32 %v1122, %v2190
    %s2199 = sld [smem:[#allocation8 + $0x185]]
    %v2200 = vstv %s2199
    %v2201 = vmul.f32 %v1293, %v2200
    %v2202 = vmul.f32 %v1294, %v2200
    %v2203 = vmul.f32 %v1295, %v2200
    %v2204 = vmul.f32 %v1296, %v2200
    %v2205 = vmul.f32 %v1297, %v2200
    %v2206 = vmul.f32 %v1298, %v2200
    %v2207 = vmul.f32 %v1299, %v2200
    %v2208 = vmul.f32 %v1300, %v2200
    %s2209 = sld [smem:[#allocation8 + $0x186]]
    %v2210 = vstv %s2209
    %v2211 = vmul.f32 %v1471, %v2210
    %v2212 = vmul.f32 %v1472, %v2210
    %v2213 = vmul.f32 %v1473, %v2210
    %v2214 = vmul.f32 %v1474, %v2210
    %v2215 = vmul.f32 %v1475, %v2210
    %v2216 = vmul.f32 %v1476, %v2210
    %v2217 = vmul.f32 %v1477, %v2210
    %v2218 = vmul.f32 %v1478, %v2210
    %s2219 = sld [smem:[#allocation8 + $0x187]]
    %v2220 = vstv %s2219
    %v2221 = vmul.f32 %v1649, %v2220
    %v2222 = vmul.f32 %v1650, %v2220
    %v2223 = vmul.f32 %v1651, %v2220
    %v2224 = vmul.f32 %v1652, %v2220
    %v2225 = vmul.f32 %v1653, %v2220
    %v2226 = vmul.f32 %v1654, %v2220
    %v2227 = vmul.f32 %v1655, %v2220
    %v2228 = vmul.f32 %v1656, %v2220
    %v2229 = vadd.f32 %v2151, %v2161
    %v2230 = vadd.f32 %v2152, %v2162
    %v2231 = vadd.f32 %v2153, %v2163
    %v2232 = vadd.f32 %v2154, %v2164
    %v2233 = vadd.f32 %v2155, %v2165
    %v2234 = vadd.f32 %v2156, %v2166
    %v2235 = vadd.f32 %v2157, %v2167
    %v2236 = vadd.f32 %v2158, %v2168
    %v2237 = vadd.f32 %v2171, %v2181
    %v2238 = vadd.f32 %v2172, %v2182
    %v2239 = vadd.f32 %v2173, %v2183
    %v2240 = vadd.f32 %v2174, %v2184
    %v2241 = vadd.f32 %v2175, %v2185
    %v2242 = vadd.f32 %v2176, %v2186
    %v2243 = vadd.f32 %v2177, %v2187
    %v2244 = vadd.f32 %v2178, %v2188
    %v2245 = vadd.f32 %v2191, %v2201
    %v2246 = vadd.f32 %v2192, %v2202
    %v2247 = vadd.f32 %v2193, %v2203
    %v2248 = vadd.f32 %v2194, %v2204
    %v2249 = vadd.f32 %v2195, %v2205
    %v2250 = vadd.f32 %v2196, %v2206
    %v2251 = vadd.f32 %v2197, %v2207
    %v2252 = vadd.f32 %v2198, %v2208
    %v2253 = vadd.f32 %v2211, %v2221
    %v2254 = vadd.f32 %v2212, %v2222
    %v2255 = vadd.f32 %v2213, %v2223
    %v2256 = vadd.f32 %v2214, %v2224
    %v2257 = vadd.f32 %v2215, %v2225
    %v2258 = vadd.f32 %v2216, %v2226
    %v2259 = vadd.f32 %v2217, %v2227
    %v2260 = vadd.f32 %v2218, %v2228
    %v2261 = vadd.f32 %v2229, %v2237
    %v2262 = vadd.f32 %v2230, %v2238
    %v2263 = vadd.f32 %v2231, %v2239
    %v2264 = vadd.f32 %v2232, %v2240
    %v2265 = vadd.f32 %v2233, %v2241
    %v2266 = vadd.f32 %v2234, %v2242
    %v2267 = vadd.f32 %v2235, %v2243
    %v2268 = vadd.f32 %v2236, %v2244
    %v2269 = vadd.f32 %v2245, %v2253
    %v2270 = vadd.f32 %v2246, %v2254
    %v2271 = vadd.f32 %v2247, %v2255
    %v2272 = vadd.f32 %v2248, %v2256
    %v2273 = vadd.f32 %v2249, %v2257
    %v2274 = vadd.f32 %v2250, %v2258
    %v2275 = vadd.f32 %v2251, %v2259
    %v2276 = vadd.f32 %v2252, %v2260
    %v2277 = vadd.f32 %v2261, %v2269
    %v2278 = vadd.f32 %v2262, %v2270
    %v2279 = vadd.f32 %v2263, %v2271
    %v2280 = vadd.f32 %v2264, %v2272
    %v2281 = vadd.f32 %v2265, %v2273
    %v2282 = vadd.f32 %v2266, %v2274
    %v2283 = vadd.f32 %v2267, %v2275
    %v2284 = vadd.f32 %v2268, %v2276
    %s2285 = sld [smem:[#allocation9 + $0x3]]
    %v2286 = vstv %s2285
    %v2287 = vadd.f32 %v2277, %v2286
    %v2288 = vadd.f32 %v2278, %v2286
    %v2289 = vadd.f32 %v2279, %v2286
    %v2290 = vadd.f32 %v2280, %v2286
    %v2291 = vadd.f32 %v2281, %v2286
    %v2292 = vadd.f32 %v2282, %v2286
    %v2293 = vadd.f32 %v2283, %v2286
    %v2294 = vadd.f32 %v2284, %v2286
    %v2295 = vmax.f32 %v2287, 0.0
    %v2296 = vmax.f32 %v2288, 0.0
    %v2297 = vmax.f32 %v2289, 0.0
    %v2298 = vmax.f32 %v2290, 0.0
    %v2299 = vmax.f32 %v2291, 0.0
    %v2300 = vmax.f32 %v2292, 0.0
    %v2301 = vmax.f32 %v2293, 0.0
    %v2302 = vmax.f32 %v2294, 0.0
    %s2303 = sld [smem:[#allocation11 + $0x3]]
    %v2304 = vstv %s2303
    %v2305 = vmul.f32 %v2295, %v2304
    %v2306 = vmul.f32 %v2296, %v2304
    %v2307 = vmul.f32 %v2297, %v2304
    %v2308 = vmul.f32 %v2298, %v2304
    %v2309 = vmul.f32 %v2299, %v2304
    %v2310 = vmul.f32 %v2300, %v2304
    %v2311 = vmul.f32 %v2301, %v2304
    %v2312 = vmul.f32 %v2302, %v2304
    %s2313 = sld [smem:[#allocation8 + $0x200]]
    %v2314 = vstv %s2313
    %v2315 = vmul.f32 %v403, %v2314
    %v2316 = vmul.f32 %v404, %v2314
    %v2317 = vmul.f32 %v405, %v2314
    %v2318 = vmul.f32 %v406, %v2314
    %v2319 = vmul.f32 %v407, %v2314
    %v2320 = vmul.f32 %v408, %v2314
    %v2321 = vmul.f32 %v409, %v2314
    %v2322 = vmul.f32 %v410, %v2314
    %s2323 = sld [smem:[#allocation8 + $0x201]]
    %v2324 = vstv %s2323
    %v2325 = vmul.f32 %v581, %v2324
    %v2326 = vmul.f32 %v582, %v2324
    %v2327 = vmul.f32 %v583, %v2324
    %v2328 = vmul.f32 %v584, %v2324
    %v2329 = vmul.f32 %v585, %v2324
    %v2330 = vmul.f32 %v586, %v2324
    %v2331 = vmul.f32 %v587, %v2324
    %v2332 = vmul.f32 %v588, %v2324
    %s2333 = sld [smem:[#allocation8 + $0x202]]
    %v2334 = vstv %s2333
    %v2335 = vmul.f32 %v759, %v2334
    %v2336 = vmul.f32 %v760, %v2334
    %v2337 = vmul.f32 %v761, %v2334
    %v2338 = vmul.f32 %v762, %v2334
    %v2339 = vmul.f32 %v763, %v2334
    %v2340 = vmul.f32 %v764, %v2334
    %v2341 = vmul.f32 %v765, %v2334
    %v2342 = vmul.f32 %v766, %v2334
    %s2343 = sld [smem:[#allocation8 + $0x203]]
    %v2344 = vstv %s2343
    %v2345 = vmul.f32 %v937, %v2344
    %v2346 = vmul.f32 %v938, %v2344
    %v2347 = vmul.f32 %v939, %v2344
    %v2348 = vmul.f32 %v940, %v2344
    %v2349 = vmul.f32 %v941, %v2344
    %v2350 = vmul.f32 %v942, %v2344
    %v2351 = vmul.f32 %v943, %v2344
    %v2352 = vmul.f32 %v944, %v2344
    %s2353 = sld [smem:[#allocation8 + $0x204]]
    %v2354 = vstv %s2353
    %v2355 = vmul.f32 %v1115, %v2354
    %v2356 = vmul.f32 %v1116, %v2354
    %v2357 = vmul.f32 %v1117, %v2354
    %v2358 = vmul.f32 %v1118, %v2354
    %v2359 = vmul.f32 %v1119, %v2354
    %v2360 = vmul.f32 %v1120, %v2354
    %v2361 = vmul.f32 %v1121, %v2354
    %v2362 = vmul.f32 %v1122, %v2354
    %s2363 = sld [smem:[#allocation8 + $0x205]]
    %v2364 = vstv %s2363
    %v2365 = vmul.f32 %v1293, %v2364
    %v2366 = vmul.f32 %v1294, %v2364
    %v2367 = vmul.f32 %v1295, %v2364
    %v2368 = vmul.f32 %v1296, %v2364
    %v2369 = vmul.f32 %v1297, %v2364
    %v2370 = vmul.f32 %v1298, %v2364
    %v2371 = vmul.f32 %v1299, %v2364
    %v2372 = vmul.f32 %v1300, %v2364
    %s2373 = sld [smem:[#allocation8 + $0x206]]
    %v2374 = vstv %s2373
    %v2375 = vmul.f32 %v1471, %v2374
    %v2376 = vmul.f32 %v1472, %v2374
    %v2377 = vmul.f32 %v1473, %v2374
    %v2378 = vmul.f32 %v1474, %v2374
    %v2379 = vmul.f32 %v1475, %v2374
    %v2380 = vmul.f32 %v1476, %v2374
    %v2381 = vmul.f32 %v1477, %v2374
    %v2382 = vmul.f32 %v1478, %v2374
    %s2383 = sld [smem:[#allocation8 + $0x207]]
    %v2384 = vstv %s2383
    %v2385 = vmul.f32 %v1649, %v2384
    %v2386 = vmul.f32 %v1650, %v2384
    %v2387 = vmul.f32 %v1651, %v2384
    %v2388 = vmul.f32 %v1652, %v2384
    %v2389 = vmul.f32 %v1653, %v2384
    %v2390 = vmul.f32 %v1654, %v2384
    %v2391 = vmul.f32 %v1655, %v2384
    %v2392 = vmul.f32 %v1656, %v2384
    %v2393 = vadd.f32 %v2315, %v2325
    %v2394 = vadd.f32 %v2316, %v2326
    %v2395 = vadd.f32 %v2317, %v2327
    %v2396 = vadd.f32 %v2318, %v2328
    %v2397 = vadd.f32 %v2319, %v2329
    %v2398 = vadd.f32 %v2320, %v2330
    %v2399 = vadd.f32 %v2321, %v2331
    %v2400 = vadd.f32 %v2322, %v2332
    %v2401 = vadd.f32 %v2335, %v2345
    %v2402 = vadd.f32 %v2336, %v2346
    %v2403 = vadd.f32 %v2337, %v2347
    %v2404 = vadd.f32 %v2338, %v2348
    %v2405 = vadd.f32 %v2339, %v2349
    %v2406 = vadd.f32 %v2340, %v2350
    %v2407 = vadd.f32 %v2341, %v2351
    %v2408 = vadd.f32 %v2342, %v2352
    %v2409 = vadd.f32 %v2355, %v2365
    %v2410 = vadd.f32 %v2356, %v2366
    %v2411 = vadd.f32 %v2357, %v2367
    %v2412 = vadd.f32 %v2358, %v2368
    %v2413 = vadd.f32 %v2359, %v2369
    %v2414 = vadd.f32 %v2360, %v2370
    %v2415 = vadd.f32 %v2361, %v2371
    %v2416 = vadd.f32 %v2362, %v2372
    %v2417 = vadd.f32 %v2375, %v2385
    %v2418 = vadd.f32 %v2376, %v2386
    %v2419 = vadd.f32 %v2377, %v2387
    %v2420 = vadd.f32 %v2378, %v2388
    %v2421 = vadd.f32 %v2379, %v2389
    %v2422 = vadd.f32 %v2380, %v2390
    %v2423 = vadd.f32 %v2381, %v2391
    %v2424 = vadd.f32 %v2382, %v2392
    %v2425 = vadd.f32 %v2393, %v2401
    %v2426 = vadd.f32 %v2394, %v2402
    %v2427 = vadd.f32 %v2395, %v2403
    %v2428 = vadd.f32 %v2396, %v2404
    %v2429 = vadd.f32 %v2397, %v2405
    %v2430 = vadd.f32 %v2398, %v2406
    %v2431 = vadd.f32 %v2399, %v2407
    %v2432 = vadd.f32 %v2400, %v2408
    %v2433 = vadd.f32 %v2409, %v2417
    %v2434 = vadd.f32 %v2410, %v2418
    %v2435 = vadd.f32 %v2411, %v2419
    %v2436 = vadd.f32 %v2412, %v2420
    %v2437 = vadd.f32 %v2413, %v2421
    %v2438 = vadd.f32 %v2414, %v2422
    %v2439 = vadd.f32 %v2415, %v2423
    %v2440 = vadd.f32 %v2416, %v2424
    %v2441 = vadd.f32 %v2425, %v2433
    %v2442 = vadd.f32 %v2426, %v2434
    %v2443 = vadd.f32 %v2427, %v2435
    %v2444 = vadd.f32 %v2428, %v2436
    %v2445 = vadd.f32 %v2429, %v2437
    %v2446 = vadd.f32 %v2430, %v2438
    %v2447 = vadd.f32 %v2431, %v2439
    %v2448 = vadd.f32 %v2432, %v2440
    %s2449 = sld [smem:[#allocation9 + $0x4]]
    %v2450 = vstv %s2449
    %v2451 = vadd.f32 %v2441, %v2450
    %v2452 = vadd.f32 %v2442, %v2450
    %v2453 = vadd.f32 %v2443, %v2450
    %v2454 = vadd.f32 %v2444, %v2450
    %v2455 = vadd.f32 %v2445, %v2450
    %v2456 = vadd.f32 %v2446, %v2450
    %v2457 = vadd.f32 %v2447, %v2450
    %v2458 = vadd.f32 %v2448, %v2450
    %v2459 = vmax.f32 %v2451, 0.0
    %v2460 = vmax.f32 %v2452, 0.0
    %v2461 = vmax.f32 %v2453, 0.0
    %v2462 = vmax.f32 %v2454, 0.0
    %v2463 = vmax.f32 %v2455, 0.0
    %v2464 = vmax.f32 %v2456, 0.0
    %v2465 = vmax.f32 %v2457, 0.0
    %v2466 = vmax.f32 %v2458, 0.0
    %s2467 = sld [smem:[#allocation11 + $0x4]]
    %v2468 = vstv %s2467
    %v2469 = vmul.f32 %v2459, %v2468
    %v2470 = vmul.f32 %v2460, %v2468
    %v2471 = vmul.f32 %v2461, %v2468
    %v2472 = vmul.f32 %v2462, %v2468
    %v2473 = vmul.f32 %v2463, %v2468
    %v2474 = vmul.f32 %v2464, %v2468
    %v2475 = vmul.f32 %v2465, %v2468
    %v2476 = vmul.f32 %v2466, %v2468
    %v2477 = vadd.f32 %v1813, %v2469
    %v2478 = vadd.f32 %v1814, %v2470
    %v2479 = vadd.f32 %v1815, %v2471
    %v2480 = vadd.f32 %v1816, %v2472
    %v2481 = vadd.f32 %v1817, %v2473
    %v2482 = vadd.f32 %v1818, %v2474
    %v2483 = vadd.f32 %v1819, %v2475
    %v2484 = vadd.f32 %v1820, %v2476
    %s2485 = sld [smem:[#allocation8 + $0x280]]
    %v2486 = vstv %s2485
    %v2487 = vmul.f32 %v403, %v2486
    %v2488 = vmul.f32 %v404, %v2486
    %v2489 = vmul.f32 %v405, %v2486
    %v2490 = vmul.f32 %v406, %v2486
    %v2491 = vmul.f32 %v407, %v2486
    %v2492 = vmul.f32 %v408, %v2486
    %v2493 = vmul.f32 %v409, %v2486
    %v2494 = vmul.f32 %v410, %v2486
    %s2495 = sld [smem:[#allocation8 + $0x281]]
    %v2496 = vstv %s2495
    %v2497 = vmul.f32 %v581, %v2496
    %v2498 = vmul.f32 %v582, %v2496
    %v2499 = vmul.f32 %v583, %v2496
    %v2500 = vmul.f32 %v584, %v2496
    %v2501 = vmul.f32 %v585, %v2496
    %v2502 = vmul.f32 %v586, %v2496
    %v2503 = vmul.f32 %v587, %v2496
    %v2504 = vmul.f32 %v588, %v2496
    %s2505 = sld [smem:[#allocation8 + $0x282]]
    %v2506 = vstv %s2505
    %v2507 = vmul.f32 %v759, %v2506
    %v2508 = vmul.f32 %v760, %v2506
    %v2509 = vmul.f32 %v761, %v2506
    %v2510 = vmul.f32 %v762, %v2506
    %v2511 = vmul.f32 %v763, %v2506
    %v2512 = vmul.f32 %v764, %v2506
    %v2513 = vmul.f32 %v765, %v2506
    %v2514 = vmul.f32 %v766, %v2506
    %s2515 = sld [smem:[#allocation8 + $0x283]]
    %v2516 = vstv %s2515
    %v2517 = vmul.f32 %v937, %v2516
    %v2518 = vmul.f32 %v938, %v2516
    %v2519 = vmul.f32 %v939, %v2516
    %v2520 = vmul.f32 %v940, %v2516
    %v2521 = vmul.f32 %v941, %v2516
    %v2522 = vmul.f32 %v942, %v2516
    %v2523 = vmul.f32 %v943, %v2516
    %v2524 = vmul.f32 %v944, %v2516
    %s2525 = sld [smem:[#allocation8 + $0x284]]
    %v2526 = vstv %s2525
    %v2527 = vmul.f32 %v1115, %v2526
    %v2528 = vmul.f32 %v1116, %v2526
    %v2529 = vmul.f32 %v1117, %v2526
    %v2530 = vmul.f32 %v1118, %v2526
    %v2531 = vmul.f32 %v1119, %v2526
    %v2532 = vmul.f32 %v1120, %v2526
    %v2533 = vmul.f32 %v1121, %v2526
    %v2534 = vmul.f32 %v1122, %v2526
    %s2535 = sld [smem:[#allocation8 + $0x285]]
    %v2536 = vstv %s2535
    %v2537 = vmul.f32 %v1293, %v2536
    %v2538 = vmul.f32 %v1294, %v2536
    %v2539 = vmul.f32 %v1295, %v2536
    %v2540 = vmul.f32 %v1296, %v2536
    %v2541 = vmul.f32 %v1297, %v2536
    %v2542 = vmul.f32 %v1298, %v2536
    %v2543 = vmul.f32 %v1299, %v2536
    %v2544 = vmul.f32 %v1300, %v2536
    %s2545 = sld [smem:[#allocation8 + $0x286]]
    %v2546 = vstv %s2545
    %v2547 = vmul.f32 %v1471, %v2546
    %v2548 = vmul.f32 %v1472, %v2546
    %v2549 = vmul.f32 %v1473, %v2546
    %v2550 = vmul.f32 %v1474, %v2546
    %v2551 = vmul.f32 %v1475, %v2546
    %v2552 = vmul.f32 %v1476, %v2546
    %v2553 = vmul.f32 %v1477, %v2546
    %v2554 = vmul.f32 %v1478, %v2546
    %s2555 = sld [smem:[#allocation8 + $0x287]]
    %v2556 = vstv %s2555
    %v2557 = vmul.f32 %v1649, %v2556
    %v2558 = vmul.f32 %v1650, %v2556
    %v2559 = vmul.f32 %v1651, %v2556
    %v2560 = vmul.f32 %v1652, %v2556
    %v2561 = vmul.f32 %v1653, %v2556
    %v2562 = vmul.f32 %v1654, %v2556
    %v2563 = vmul.f32 %v1655, %v2556
    %v2564 = vmul.f32 %v1656, %v2556
    %v2565 = vadd.f32 %v2487, %v2497
    %v2566 = vadd.f32 %v2488, %v2498
    %v2567 = vadd.f32 %v2489, %v2499
    %v2568 = vadd.f32 %v2490, %v2500
    %v2569 = vadd.f32 %v2491, %v2501
    %v2570 = vadd.f32 %v2492, %v2502
    %v2571 = vadd.f32 %v2493, %v2503
    %v2572 = vadd.f32 %v2494, %v2504
    %v2573 = vadd.f32 %v2507, %v2517
    %v2574 = vadd.f32 %v2508, %v2518
    %v2575 = vadd.f32 %v2509, %v2519
    %v2576 = vadd.f32 %v2510, %v2520
    %v2577 = vadd.f32 %v2511, %v2521
    %v2578 = vadd.f32 %v2512, %v2522
    %v2579 = vadd.f32 %v2513, %v2523
    %v2580 = vadd.f32 %v2514, %v2524
    %v2581 = vadd.f32 %v2527, %v2537
    %v2582 = vadd.f32 %v2528, %v2538
    %v2583 = vadd.f32 %v2529, %v2539
    %v2584 = vadd.f32 %v2530, %v2540
    %v2585 = vadd.f32 %v2531, %v2541
    %v2586 = vadd.f32 %v2532, %v2542
    %v2587 = vadd.f32 %v2533, %v2543
    %v2588 = vadd.f32 %v2534, %v2544
    %v2589 = vadd.f32 %v2547, %v2557
    %v2590 = vadd.f32 %v2548, %v2558
    %v2591 = vadd.f32 %v2549, %v2559
    %v2592 = vadd.f32 %v2550, %v2560
    %v2593 = vadd.f32 %v2551, %v2561
    %v2594 = vadd.f32 %v2552, %v2562
    %v2595 = vadd.f32 %v2553, %v2563
    %v2596 = vadd.f32 %v2554, %v2564
    %v2597 = vadd.f32 %v2565, %v2573
    %v2598 = vadd.f32 %v2566, %v2574
    %v2599 = vadd.f32 %v2567, %v2575
    %v2600 = vadd.f32 %v2568, %v2576
    %v2601 = vadd.f32 %v2569, %v2577
    %v2602 = vadd.f32 %v2570, %v2578
    %v2603 = vadd.f32 %v2571, %v2579
    %v2604 = vadd.f32 %v2572, %v2580
    %v2605 = vadd.f32 %v2581, %v2589
    %v2606 = vadd.f32 %v2582, %v2590
    %v2607 = vadd.f32 %v2583, %v2591
    %v2608 = vadd.f32 %v2584, %v2592
    %v2609 = vadd.f32 %v2585, %v2593
    %v2610 = vadd.f32 %v2586, %v2594
    %v2611 = vadd.f32 %v2587, %v2595
    %v2612 = vadd.f32 %v2588, %v2596
    %v2613 = vadd.f32 %v2597, %v2605
    %v2614 = vadd.f32 %v2598, %v2606
    %v2615 = vadd.f32 %v2599, %v2607
    %v2616 = vadd.f32 %v2600, %v2608
    %v2617 = vadd.f32 %v2601, %v2609
    %v2618 = vadd.f32 %v2602, %v2610
    %v2619 = vadd.f32 %v2603, %v2611
    %v2620 = vadd.f32 %v2604, %v2612
    %s2621 = sld [smem:[#allocation9 + $0x5]]
    %v2622 = vstv %s2621
    %v2623 = vadd.f32 %v2613, %v2622
    %v2624 = vadd.f32 %v2614, %v2622
    %v2625 = vadd.f32 %v2615, %v2622
    %v2626 = vadd.f32 %v2616, %v2622
    %v2627 = vadd.f32 %v2617, %v2622
    %v2628 = vadd.f32 %v2618, %v2622
    %v2629 = vadd.f32 %v2619, %v2622
    %v2630 = vadd.f32 %v2620, %v2622
    %v2631 = vmax.f32 %v2623, 0.0
    %v2632 = vmax.f32 %v2624, 0.0
    %v2633 = vmax.f32 %v2625, 0.0
    %v2634 = vmax.f32 %v2626, 0.0
    %v2635 = vmax.f32 %v2627, 0.0
    %v2636 = vmax.f32 %v2628, 0.0
    %v2637 = vmax.f32 %v2629, 0.0
    %v2638 = vmax.f32 %v2630, 0.0
    %s2639 = sld [smem:[#allocation11 + $0x5]]
    %v2640 = vstv %s2639
    %v2641 = vmul.f32 %v2631, %v2640
    %v2642 = vmul.f32 %v2632, %v2640
    %v2643 = vmul.f32 %v2633, %v2640
    %v2644 = vmul.f32 %v2634, %v2640
    %v2645 = vmul.f32 %v2635, %v2640
    %v2646 = vmul.f32 %v2636, %v2640
    %v2647 = vmul.f32 %v2637, %v2640
    %v2648 = vmul.f32 %v2638, %v2640
    %v2649 = vadd.f32 %v1977, %v2641
    %v2650 = vadd.f32 %v1978, %v2642
    %v2651 = vadd.f32 %v1979, %v2643
    %v2652 = vadd.f32 %v1980, %v2644
    %v2653 = vadd.f32 %v1981, %v2645
    %v2654 = vadd.f32 %v1982, %v2646
    %v2655 = vadd.f32 %v1983, %v2647
    %v2656 = vadd.f32 %v1984, %v2648
    %s2657 = sld [smem:[#allocation8 + $0x300]]
    %v2658 = vstv %s2657
    %v2659 = vmul.f32 %v403, %v2658
    %v2660 = vmul.f32 %v404, %v2658
    %v2661 = vmul.f32 %v405, %v2658
    %v2662 = vmul.f32 %v406, %v2658
    %v2663 = vmul.f32 %v407, %v2658
    %v2664 = vmul.f32 %v408, %v2658
    %v2665 = vmul.f32 %v409, %v2658
    %v2666 = vmul.f32 %v410, %v2658
    %s2667 = sld [smem:[#allocation8 + $0x301]]
    %v2668 = vstv %s2667
    %v2669 = vmul.f32 %v581, %v2668
    %v2670 = vmul.f32 %v582, %v2668
    %v2671 = vmul.f32 %v583, %v2668
    %v2672 = vmul.f32 %v584, %v2668
    %v2673 = vmul.f32 %v585, %v2668
    %v2674 = vmul.f32 %v586, %v2668
    %v2675 = vmul.f32 %v587, %v2668
    %v2676 = vmul.f32 %v588, %v2668
    %s2677 = sld [smem:[#allocation8 + $0x302]]
    %v2678 = vstv %s2677
    %v2679 = vmul.f32 %v759, %v2678
    %v2680 = vmul.f32 %v760, %v2678
    %v2681 = vmul.f32 %v761, %v2678
    %v2682 = vmul.f32 %v762, %v2678
    %v2683 = vmul.f32 %v763, %v2678
    %v2684 = vmul.f32 %v764, %v2678
    %v2685 = vmul.f32 %v765, %v2678
    %v2686 = vmul.f32 %v766, %v2678
    %s2687 = sld [smem:[#allocation8 + $0x303]]
    %v2688 = vstv %s2687
    %v2689 = vmul.f32 %v937, %v2688
    %v2690 = vmul.f32 %v938, %v2688
    %v2691 = vmul.f32 %v939, %v2688
    %v2692 = vmul.f32 %v940, %v2688
    %v2693 = vmul.f32 %v941, %v2688
    %v2694 = vmul.f32 %v942, %v2688
    %v2695 = vmul.f32 %v943, %v2688
    %v2696 = vmul.f32 %v944, %v2688
    %s2697 = sld [smem:[#allocation8 + $0x304]]
    %v2698 = vstv %s2697
    %v2699 = vmul.f32 %v1115, %v2698
    %v2700 = vmul.f32 %v1116, %v2698
    %v2701 = vmul.f32 %v1117, %v2698
    %v2702 = vmul.f32 %v1118, %v2698
    %v2703 = vmul.f32 %v1119, %v2698
    %v2704 = vmul.f32 %v1120, %v2698
    %v2705 = vmul.f32 %v1121, %v2698
    %v2706 = vmul.f32 %v1122, %v2698
    %s2707 = sld [smem:[#allocation8 + $0x305]]
    %v2708 = vstv %s2707
    %v2709 = vmul.f32 %v1293, %v2708
    %v2710 = vmul.f32 %v1294, %v2708
    %v2711 = vmul.f32 %v1295, %v2708
    %v2712 = vmul.f32 %v1296, %v2708
    %v2713 = vmul.f32 %v1297, %v2708
    %v2714 = vmul.f32 %v1298, %v2708
    %v2715 = vmul.f32 %v1299, %v2708
    %v2716 = vmul.f32 %v1300, %v2708
    %s2717 = sld [smem:[#allocation8 + $0x306]]
    %v2718 = vstv %s2717
    %v2719 = vmul.f32 %v1471, %v2718
    %v2720 = vmul.f32 %v1472, %v2718
    %v2721 = vmul.f32 %v1473, %v2718
    %v2722 = vmul.f32 %v1474, %v2718
    %v2723 = vmul.f32 %v1475, %v2718
    %v2724 = vmul.f32 %v1476, %v2718
    %v2725 = vmul.f32 %v1477, %v2718
    %v2726 = vmul.f32 %v1478, %v2718
    %s2727 = sld [smem:[#allocation8 + $0x307]]
    %v2728 = vstv %s2727
    %v2729 = vmul.f32 %v1649, %v2728
    %v2730 = vmul.f32 %v1650, %v2728
    %v2731 = vmul.f32 %v1651, %v2728
    %v2732 = vmul.f32 %v1652, %v2728
    %v2733 = vmul.f32 %v1653, %v2728
    %v2734 = vmul.f32 %v1654, %v2728
    %v2735 = vmul.f32 %v1655, %v2728
    %v2736 = vmul.f32 %v1656, %v2728
    %v2737 = vadd.f32 %v2659, %v2669
    %v2738 = vadd.f32 %v2660, %v2670
    %v2739 = vadd.f32 %v2661, %v2671
    %v2740 = vadd.f32 %v2662, %v2672
    %v2741 = vadd.f32 %v2663, %v2673
    %v2742 = vadd.f32 %v2664, %v2674
    %v2743 = vadd.f32 %v2665, %v2675
    %v2744 = vadd.f32 %v2666, %v2676
    %v2745 = vadd.f32 %v2679, %v2689
    %v2746 = vadd.f32 %v2680, %v2690
    %v2747 = vadd.f32 %v2681, %v2691
    %v2748 = vadd.f32 %v2682, %v2692
    %v2749 = vadd.f32 %v2683, %v2693
    %v2750 = vadd.f32 %v2684, %v2694
    %v2751 = vadd.f32 %v2685, %v2695
    %v2752 = vadd.f32 %v2686, %v2696
    %v2753 = vadd.f32 %v2699, %v2709
    %v2754 = vadd.f32 %v2700, %v2710
    %v2755 = vadd.f32 %v2701, %v2711
    %v2756 = vadd.f32 %v2702, %v2712
    %v2757 = vadd.f32 %v2703, %v2713
    %v2758 = vadd.f32 %v2704, %v2714
    %v2759 = vadd.f32 %v2705, %v2715
    %v2760 = vadd.f32 %v2706, %v2716
    %v2761 = vadd.f32 %v2719, %v2729
    %v2762 = vadd.f32 %v2720, %v2730
    %v2763 = vadd.f32 %v2721, %v2731
    %v2764 = vadd.f32 %v2722, %v2732
    %v2765 = vadd.f32 %v2723, %v2733
    %v2766 = vadd.f32 %v2724, %v2734
    %v2767 = vadd.f32 %v2725, %v2735
    %v2768 = vadd.f32 %v2726, %v2736
    %v2769 = vadd.f32 %v2737, %v2745
    %v2770 = vadd.f32 %v2738, %v2746
    %v2771 = vadd.f32 %v2739, %v2747
    %v2772 = vadd.f32 %v2740, %v2748
    %v2773 = vadd.f32 %v2741, %v2749
    %v2774 = vadd.f32 %v2742, %v2750
    %v2775 = vadd.f32 %v2743, %v2751
    %v2776 = vadd.f32 %v2744, %v2752
    %v2777 = vadd.f32 %v2753, %v2761
    %v2778 = vadd.f32 %v2754, %v2762
    %v2779 = vadd.f32 %v2755, %v2763
    %v2780 = vadd.f32 %v2756, %v2764
    %v2781 = vadd.f32 %v2757, %v2765
    %v2782 = vadd.f32 %v2758, %v2766
    %v2783 = vadd.f32 %v2759, %v2767
    %v2784 = vadd.f32 %v2760, %v2768
    %v2785 = vadd.f32 %v2769, %v2777
    %v2786 = vadd.f32 %v2770, %v2778
    %v2787 = vadd.f32 %v2771, %v2779
    %v2788 = vadd.f32 %v2772, %v2780
    %v2789 = vadd.f32 %v2773, %v2781
    %v2790 = vadd.f32 %v2774, %v2782
    %v2791 = vadd.f32 %v2775, %v2783
    %v2792 = vadd.f32 %v2776, %v2784
    %s2793 = sld [smem:[#allocation9 + $0x6]]
    %v2794 = vstv %s2793
    %v2795 = vadd.f32 %v2785, %v2794
    %v2796 = vadd.f32 %v2786, %v2794
    %v2797 = vadd.f32 %v2787, %v2794
    %v2798 = vadd.f32 %v2788, %v2794
    %v2799 = vadd.f32 %v2789, %v2794
    %v2800 = vadd.f32 %v2790, %v2794
    %v2801 = vadd.f32 %v2791, %v2794
    %v2802 = vadd.f32 %v2792, %v2794
    %v2803 = vmax.f32 %v2795, 0.0
    %v2804 = vmax.f32 %v2796, 0.0
    %v2805 = vmax.f32 %v2797, 0.0
    %v2806 = vmax.f32 %v2798, 0.0
    %v2807 = vmax.f32 %v2799, 0.0
    %v2808 = vmax.f32 %v2800, 0.0
    %v2809 = vmax.f32 %v2801, 0.0
    %v2810 = vmax.f32 %v2802, 0.0
    %s2811 = sld [smem:[#allocation11 + $0x6]]
    %v2812 = vstv %s2811
    %v2813 = vmul.f32 %v2803, %v2812
    %v2814 = vmul.f32 %v2804, %v2812
    %v2815 = vmul.f32 %v2805, %v2812
    %v2816 = vmul.f32 %v2806, %v2812
    %v2817 = vmul.f32 %v2807, %v2812
    %v2818 = vmul.f32 %v2808, %v2812
    %v2819 = vmul.f32 %v2809, %v2812
    %v2820 = vmul.f32 %v2810, %v2812
    %v2821 = vadd.f32 %v2141, %v2813
    %v2822 = vadd.f32 %v2142, %v2814
    %v2823 = vadd.f32 %v2143, %v2815
    %v2824 = vadd.f32 %v2144, %v2816
    %v2825 = vadd.f32 %v2145, %v2817
    %v2826 = vadd.f32 %v2146, %v2818
    %v2827 = vadd.f32 %v2147, %v2819
    %v2828 = vadd.f32 %v2148, %v2820
    %s2829 = sld [smem:[#allocation8 + $0x380]]
    %v2830 = vstv %s2829
    %v2831 = vmul.f32 %v403, %v2830
    %v2832 = vmul.f32 %v404, %v2830
    %v2833 = vmul.f32 %v405, %v2830
    %v2834 = vmul.f32 %v406, %v2830
    %v2835 = vmul.f32 %v407, %v2830
    %v2836 = vmul.f32 %v408, %v2830
    %v2837 = vmul.f32 %v409, %v2830
    %v2838 = vmul.f32 %v410, %v2830
    %s2839 = sld [smem:[#allocation8 + $0x381]]
    %v2840 = vstv %s2839
    %v2841 = vmul.f32 %v581, %v2840
    %v2842 = vmul.f32 %v582, %v2840
    %v2843 = vmul.f32 %v583, %v2840
    %v2844 = vmul.f32 %v584, %v2840
    %v2845 = vmul.f32 %v585, %v2840
    %v2846 = vmul.f32 %v586, %v2840
    %v2847 = vmul.f32 %v587, %v2840
    %v2848 = vmul.f32 %v588, %v2840
    %s2849 = sld [smem:[#allocation8 + $0x382]]
    %v2850 = vstv %s2849
    %v2851 = vmul.f32 %v759, %v2850
    %v2852 = vmul.f32 %v760, %v2850
    %v2853 = vmul.f32 %v761, %v2850
    %v2854 = vmul.f32 %v762, %v2850
    %v2855 = vmul.f32 %v763, %v2850
    %v2856 = vmul.f32 %v764, %v2850
    %v2857 = vmul.f32 %v765, %v2850
    %v2858 = vmul.f32 %v766, %v2850
    %s2859 = sld [smem:[#allocation8 + $0x383]]
    %v2860 = vstv %s2859
    %v2861 = vmul.f32 %v937, %v2860
    %v2862 = vmul.f32 %v938, %v2860
    %v2863 = vmul.f32 %v939, %v2860
    %v2864 = vmul.f32 %v940, %v2860
    %v2865 = vmul.f32 %v941, %v2860
    %v2866 = vmul.f32 %v942, %v2860
    %v2867 = vmul.f32 %v943, %v2860
    %v2868 = vmul.f32 %v944, %v2860
    %s2869 = sld [smem:[#allocation8 + $0x384]]
    %v2870 = vstv %s2869
    %v2871 = vmul.f32 %v1115, %v2870
    %v2872 = vmul.f32 %v1116, %v2870
    %v2873 = vmul.f32 %v1117, %v2870
    %v2874 = vmul.f32 %v1118, %v2870
    %v2875 = vmul.f32 %v1119, %v2870
    %v2876 = vmul.f32 %v1120, %v2870
    %v2877 = vmul.f32 %v1121, %v2870
    %v2878 = vmul.f32 %v1122, %v2870
    %s2879 = sld [smem:[#allocation8 + $0x385]]
    %v2880 = vstv %s2879
    %v2881 = vmul.f32 %v1293, %v2880
    %v2882 = vmul.f32 %v1294, %v2880
    %v2883 = vmul.f32 %v1295, %v2880
    %v2884 = vmul.f32 %v1296, %v2880
    %v2885 = vmul.f32 %v1297, %v2880
    %v2886 = vmul.f32 %v1298, %v2880
    %v2887 = vmul.f32 %v1299, %v2880
    %v2888 = vmul.f32 %v1300, %v2880
    %s2889 = sld [smem:[#allocation8 + $0x386]]
    %v2890 = vstv %s2889
    %v2891 = vmul.f32 %v1471, %v2890
    %v2892 = vmul.f32 %v1472, %v2890
    %v2893 = vmul.f32 %v1473, %v2890
    %v2894 = vmul.f32 %v1474, %v2890
    %v2895 = vmul.f32 %v1475, %v2890
    %v2896 = vmul.f32 %v1476, %v2890
    %v2897 = vmul.f32 %v1477, %v2890
    %v2898 = vmul.f32 %v1478, %v2890
    %s2899 = sld [smem:[#allocation8 + $0x387]]
    %v2900 = vstv %s2899
    %v2901 = vmul.f32 %v1649, %v2900
    %v2902 = vmul.f32 %v1650, %v2900
    %v2903 = vmul.f32 %v1651, %v2900
    %v2904 = vmul.f32 %v1652, %v2900
    %v2905 = vmul.f32 %v1653, %v2900
    %v2906 = vmul.f32 %v1654, %v2900
    %v2907 = vmul.f32 %v1655, %v2900
    %v2908 = vmul.f32 %v1656, %v2900
    %v2909 = vadd.f32 %v2831, %v2841
    %v2910 = vadd.f32 %v2832, %v2842
    %v2911 = vadd.f32 %v2833, %v2843
    %v2912 = vadd.f32 %v2834, %v2844
    %v2913 = vadd.f32 %v2835, %v2845
    %v2914 = vadd.f32 %v2836, %v2846
    %v2915 = vadd.f32 %v2837, %v2847
    %v2916 = vadd.f32 %v2838, %v2848
    %v2917 = vadd.f32 %v2851, %v2861
    %v2918 = vadd.f32 %v2852, %v2862
    %v2919 = vadd.f32 %v2853, %v2863
    %v2920 = vadd.f32 %v2854, %v2864
    %v2921 = vadd.f32 %v2855, %v2865
    %v2922 = vadd.f32 %v2856, %v2866
    %v2923 = vadd.f32 %v2857, %v2867
    %v2924 = vadd.f32 %v2858, %v2868
    %v2925 = vadd.f32 %v2871, %v2881
    %v2926 = vadd.f32 %v2872, %v2882
    %v2927 = vadd.f32 %v2873, %v2883
    %v2928 = vadd.f32 %v2874, %v2884
    %v2929 = vadd.f32 %v2875, %v2885
    %v2930 = vadd.f32 %v2876, %v2886
    %v2931 = vadd.f32 %v2877, %v2887
    %v2932 = vadd.f32 %v2878, %v2888
    %v2933 = vadd.f32 %v2891, %v2901
    %v2934 = vadd.f32 %v2892, %v2902
    %v2935 = vadd.f32 %v2893, %v2903
    %v2936 = vadd.f32 %v2894, %v2904
    %v2937 = vadd.f32 %v2895, %v2905
    %v2938 = vadd.f32 %v2896, %v2906
    %v2939 = vadd.f32 %v2897, %v2907
    %v2940 = vadd.f32 %v2898, %v2908
    %v2941 = vadd.f32 %v2909, %v2917
    %v2942 = vadd.f32 %v2910, %v2918
    %v2943 = vadd.f32 %v2911, %v2919
    %v2944 = vadd.f32 %v2912, %v2920
    %v2945 = vadd.f32 %v2913, %v2921
    %v2946 = vadd.f32 %v2914, %v2922
    %v2947 = vadd.f32 %v2915, %v2923
    %v2948 = vadd.f32 %v2916, %v2924
    %v2949 = vadd.f32 %v2925, %v2933
    %v2950 = vadd.f32 %v2926, %v2934
    %v2951 = vadd.f32 %v2927, %v2935
    %v2952 = vadd.f32 %v2928, %v2936
    %v2953 = vadd.f32 %v2929, %v2937
    %v2954 = vadd.f32 %v2930, %v2938
    %v2955 = vadd.f32 %v2931, %v2939
    %v2956 = vadd.f32 %v2932, %v2940
    %v2957 = vadd.f32 %v2941, %v2949
    %v2958 = vadd.f32 %v2942, %v2950
    %v2959 = vadd.f32 %v2943, %v2951
    %v2960 = vadd.f32 %v2944, %v2952
    %v2961 = vadd.f32 %v2945, %v2953
    %v2962 = vadd.f32 %v2946, %v2954
    %v2963 = vadd.f32 %v2947, %v2955
    %v2964 = vadd.f32 %v2948, %v2956
    %s2965 = sld [smem:[#allocation9 + $0x7]]
    %v2966 = vstv %s2965
    %v2967 = vadd.f32 %v2957, %v2966
    %v2968 = vadd.f32 %v2958, %v2966
    %v2969 = vadd.f32 %v2959, %v2966
    %v2970 = vadd.f32 %v2960, %v2966
    %v2971 = vadd.f32 %v2961, %v2966
    %v2972 = vadd.f32 %v2962, %v2966
    %v2973 = vadd.f32 %v2963, %v2966
    %v2974 = vadd.f32 %v2964, %v2966
    %v2975 = vmax.f32 %v2967, 0.0
    %v2976 = vmax.f32 %v2968, 0.0
    %v2977 = vmax.f32 %v2969, 0.0
    %v2978 = vmax.f32 %v2970, 0.0
    %v2979 = vmax.f32 %v2971, 0.0
    %v2980 = vmax.f32 %v2972, 0.0
    %v2981 = vmax.f32 %v2973, 0.0
    %v2982 = vmax.f32 %v2974, 0.0
    %s2983 = sld [smem:[#allocation11 + $0x7]]
    %v2984 = vstv %s2983
    %v2985 = vmul.f32 %v2975, %v2984
    %v2986 = vmul.f32 %v2976, %v2984
    %v2987 = vmul.f32 %v2977, %v2984
    %v2988 = vmul.f32 %v2978, %v2984
    %v2989 = vmul.f32 %v2979, %v2984
    %v2990 = vmul.f32 %v2980, %v2984
    %v2991 = vmul.f32 %v2981, %v2984
    %v2992 = vmul.f32 %v2982, %v2984
    %v2993 = vadd.f32 %v2305, %v2985
    %v2994 = vadd.f32 %v2306, %v2986
    %v2995 = vadd.f32 %v2307, %v2987
    %v2996 = vadd.f32 %v2308, %v2988
    %v2997 = vadd.f32 %v2309, %v2989
    %v2998 = vadd.f32 %v2310, %v2990
    %v2999 = vadd.f32 %v2311, %v2991
    %v3000 = vadd.f32 %v2312, %v2992
    %s3001 = sld [smem:[#allocation8 + $0x400]]
    %v3002 = vstv %s3001
    %v3003 = vmul.f32 %v403, %v3002
    %v3004 = vmul.f32 %v404, %v3002
    %v3005 = vmul.f32 %v405, %v3002
    %v3006 = vmul.f32 %v406, %v3002
    %v3007 = vmul.f32 %v407, %v3002
    %v3008 = vmul.f32 %v408, %v3002
    %v3009 = vmul.f32 %v409, %v3002
    %v3010 = vmul.f32 %v410, %v3002
    %s3011 = sld [smem:[#allocation8 + $0x401]]
    %v3012 = vstv %s3011
    %v3013 = vmul.f32 %v581, %v3012
    %v3014 = vmul.f32 %v582, %v3012
    %v3015 = vmul.f32 %v583, %v3012
    %v3016 = vmul.f32 %v584, %v3012
    %v3017 = vmul.f32 %v585, %v3012
    %v3018 = vmul.f32 %v586, %v3012
    %v3019 = vmul.f32 %v587, %v3012
    %v3020 = vmul.f32 %v588, %v3012
    %s3021 = sld [smem:[#allocation8 + $0x402]]
    %v3022 = vstv %s3021
    %v3023 = vmul.f32 %v759, %v3022
    %v3024 = vmul.f32 %v760, %v3022
    %v3025 = vmul.f32 %v761, %v3022
    %v3026 = vmul.f32 %v762, %v3022
    %v3027 = vmul.f32 %v763, %v3022
    %v3028 = vmul.f32 %v764, %v3022
    %v3029 = vmul.f32 %v765, %v3022
    %v3030 = vmul.f32 %v766, %v3022
    %s3031 = sld [smem:[#allocation8 + $0x403]]
    %v3032 = vstv %s3031
    %v3033 = vmul.f32 %v937, %v3032
    %v3034 = vmul.f32 %v938, %v3032
    %v3035 = vmul.f32 %v939, %v3032
    %v3036 = vmul.f32 %v940, %v3032
    %v3037 = vmul.f32 %v941, %v3032
    %v3038 = vmul.f32 %v942, %v3032
    %v3039 = vmul.f32 %v943, %v3032
    %v3040 = vmul.f32 %v944, %v3032
    %s3041 = sld [smem:[#allocation8 + $0x404]]
    %v3042 = vstv %s3041
    %v3043 = vmul.f32 %v1115, %v3042
    %v3044 = vmul.f32 %v1116, %v3042
    %v3045 = vmul.f32 %v1117, %v3042
    %v3046 = vmul.f32 %v1118, %v3042
    %v3047 = vmul.f32 %v1119, %v3042
    %v3048 = vmul.f32 %v1120, %v3042
    %v3049 = vmul.f32 %v1121, %v3042
    %v3050 = vmul.f32 %v1122, %v3042
    %s3051 = sld [smem:[#allocation8 + $0x405]]
    %v3052 = vstv %s3051
    %v3053 = vmul.f32 %v1293, %v3052
    %v3054 = vmul.f32 %v1294, %v3052
    %v3055 = vmul.f32 %v1295, %v3052
    %v3056 = vmul.f32 %v1296, %v3052
    %v3057 = vmul.f32 %v1297, %v3052
    %v3058 = vmul.f32 %v1298, %v3052
    %v3059 = vmul.f32 %v1299, %v3052
    %v3060 = vmul.f32 %v1300, %v3052
    %s3061 = sld [smem:[#allocation8 + $0x406]]
    %v3062 = vstv %s3061
    %v3063 = vmul.f32 %v1471, %v3062
    %v3064 = vmul.f32 %v1472, %v3062
    %v3065 = vmul.f32 %v1473, %v3062
    %v3066 = vmul.f32 %v1474, %v3062
    %v3067 = vmul.f32 %v1475, %v3062
    %v3068 = vmul.f32 %v1476, %v3062
    %v3069 = vmul.f32 %v1477, %v3062
    %v3070 = vmul.f32 %v1478, %v3062
    %s3071 = sld [smem:[#allocation8 + $0x407]]
    %v3072 = vstv %s3071
    %v3073 = vmul.f32 %v1649, %v3072
    %v3074 = vmul.f32 %v1650, %v3072
    %v3075 = vmul.f32 %v1651, %v3072
    %v3076 = vmul.f32 %v1652, %v3072
    %v3077 = vmul.f32 %v1653, %v3072
    %v3078 = vmul.f32 %v1654, %v3072
    %v3079 = vmul.f32 %v1655, %v3072
    %v3080 = vmul.f32 %v1656, %v3072
    %v3081 = vadd.f32 %v3003, %v3013
    %v3082 = vadd.f32 %v3004, %v3014
    %v3083 = vadd.f32 %v3005, %v3015
    %v3084 = vadd.f32 %v3006, %v3016
    %v3085 = vadd.f32 %v3007, %v3017
    %v3086 = vadd.f32 %v3008, %v3018
    %v3087 = vadd.f32 %v3009, %v3019
    %v3088 = vadd.f32 %v3010, %v3020
    %v3089 = vadd.f32 %v3023, %v3033
    %v3090 = vadd.f32 %v3024, %v3034
    %v3091 = vadd.f32 %v3025, %v3035
    %v3092 = vadd.f32 %v3026, %v3036
    %v3093 = vadd.f32 %v3027, %v3037
    %v3094 = vadd.f32 %v3028, %v3038
    %v3095 = vadd.f32 %v3029, %v3039
    %v3096 = vadd.f32 %v3030, %v3040
    %v3097 = vadd.f32 %v3043, %v3053
    %v3098 = vadd.f32 %v3044, %v3054
    %v3099 = vadd.f32 %v3045, %v3055
    %v3100 = vadd.f32 %v3046, %v3056
    %v3101 = vadd.f32 %v3047, %v3057
    %v3102 = vadd.f32 %v3048, %v3058
    %v3103 = vadd.f32 %v3049, %v3059
    %v3104 = vadd.f32 %v3050, %v3060
    %v3105 = vadd.f32 %v3063, %v3073
    %v3106 = vadd.f32 %v3064, %v3074
    %v3107 = vadd.f32 %v3065, %v3075
    %v3108 = vadd.f32 %v3066, %v3076
    %v3109 = vadd.f32 %v3067, %v3077
    %v3110 = vadd.f32 %v3068, %v3078
    %v3111 = vadd.f32 %v3069, %v3079
    %v3112 = vadd.f32 %v3070, %v3080
    %v3113 = vadd.f32 %v3081, %v3089
    %v3114 = vadd.f32 %v3082, %v3090
    %v3115 = vadd.f32 %v3083, %v3091
    %v3116 = vadd.f32 %v3084, %v3092
    %v3117 = vadd.f32 %v3085, %v3093
    %v3118 = vadd.f32 %v3086, %v3094
    %v3119 = vadd.f32 %v3087, %v3095
    %v3120 = vadd.f32 %v3088, %v3096
    %v3121 = vadd.f32 %v3097, %v3105
    %v3122 = vadd.f32 %v3098, %v3106
    %v3123 = vadd.f32 %v3099, %v3107
    %v3124 = vadd.f32 %v3100, %v3108
    %v3125 = vadd.f32 %v3101, %v3109
    %v3126 = vadd.f32 %v3102, %v3110
    %v3127 = vadd.f32 %v3103, %v3111
    %v3128 = vadd.f32 %v3104, %v3112
    %v3129 = vadd.f32 %v3113, %v3121
    %v3130 = vadd.f32 %v3114, %v3122
    %v3131 = vadd.f32 %v3115, %v3123
    %v3132 = vadd.f32 %v3116, %v3124
    %v3133 = vadd.f32 %v3117, %v3125
    %v3134 = vadd.f32 %v3118, %v3126
    %v3135 = vadd.f32 %v3119, %v3127
    %v3136 = vadd.f32 %v3120, %v3128
    %s3137 = sld [smem:[#allocation9 + $0x8]]
    %v3138 = vstv %s3137
    %v3139 = vadd.f32 %v3129, %v3138
    %v3140 = vadd.f32 %v3130, %v3138
    %v3141 = vadd.f32 %v3131, %v3138
    %v3142 = vadd.f32 %v3132, %v3138
    %v3143 = vadd.f32 %v3133, %v3138
    %v3144 = vadd.f32 %v3134, %v3138
    %v3145 = vadd.f32 %v3135, %v3138
    %v3146 = vadd.f32 %v3136, %v3138
    %v3147 = vmax.f32 %v3139, 0.0
    %v3148 = vmax.f32 %v3140, 0.0
    %v3149 = vmax.f32 %v3141, 0.0
    %v3150 = vmax.f32 %v3142, 0.0
    %v3151 = vmax.f32 %v3143, 0.0
    %v3152 = vmax.f32 %v3144, 0.0
    %v3153 = vmax.f32 %v3145, 0.0
    %v3154 = vmax.f32 %v3146, 0.0
    %s3155 = sld [smem:[#allocation11 + $0x8]]
    %v3156 = vstv %s3155
    %v3157 = vmul.f32 %v3147, %v3156
    %v3158 = vmul.f32 %v3148, %v3156
    %v3159 = vmul.f32 %v3149, %v3156
    %v3160 = vmul.f32 %v3150, %v3156
    %v3161 = vmul.f32 %v3151, %v3156
    %v3162 = vmul.f32 %v3152, %v3156
    %v3163 = vmul.f32 %v3153, %v3156
    %v3164 = vmul.f32 %v3154, %v3156
    %v3165 = vadd.f32 %v2477, %v3157
    %v3166 = vadd.f32 %v2478, %v3158
    %v3167 = vadd.f32 %v2479, %v3159
    %v3168 = vadd.f32 %v2480, %v3160
    %v3169 = vadd.f32 %v2481, %v3161
    %v3170 = vadd.f32 %v2482, %v3162
    %v3171 = vadd.f32 %v2483, %v3163
    %v3172 = vadd.f32 %v2484, %v3164
    %s3173 = sld [smem:[#allocation8 + $0x480]]
    %v3174 = vstv %s3173
    %v3175 = vmul.f32 %v403, %v3174
    %v3176 = vmul.f32 %v404, %v3174
    %v3177 = vmul.f32 %v405, %v3174
    %v3178 = vmul.f32 %v406, %v3174
    %v3179 = vmul.f32 %v407, %v3174
    %v3180 = vmul.f32 %v408, %v3174
    %v3181 = vmul.f32 %v409, %v3174
    %v3182 = vmul.f32 %v410, %v3174
    %s3183 = sld [smem:[#allocation8 + $0x481]]
    %v3184 = vstv %s3183
    %v3185 = vmul.f32 %v581, %v3184
    %v3186 = vmul.f32 %v582, %v3184
    %v3187 = vmul.f32 %v583, %v3184
    %v3188 = vmul.f32 %v584, %v3184
    %v3189 = vmul.f32 %v585, %v3184
    %v3190 = vmul.f32 %v586, %v3184
    %v3191 = vmul.f32 %v587, %v3184
    %v3192 = vmul.f32 %v588, %v3184
    %s3193 = sld [smem:[#allocation8 + $0x482]]
    %v3194 = vstv %s3193
    %v3195 = vmul.f32 %v759, %v3194
    %v3196 = vmul.f32 %v760, %v3194
    %v3197 = vmul.f32 %v761, %v3194
    %v3198 = vmul.f32 %v762, %v3194
    %v3199 = vmul.f32 %v763, %v3194
    %v3200 = vmul.f32 %v764, %v3194
    %v3201 = vmul.f32 %v765, %v3194
    %v3202 = vmul.f32 %v766, %v3194
    %s3203 = sld [smem:[#allocation8 + $0x483]]
    %v3204 = vstv %s3203
    %v3205 = vmul.f32 %v937, %v3204
    %v3206 = vmul.f32 %v938, %v3204
    %v3207 = vmul.f32 %v939, %v3204
    %v3208 = vmul.f32 %v940, %v3204
    %v3209 = vmul.f32 %v941, %v3204
    %v3210 = vmul.f32 %v942, %v3204
    %v3211 = vmul.f32 %v943, %v3204
    %v3212 = vmul.f32 %v944, %v3204
    %s3213 = sld [smem:[#allocation8 + $0x484]]
    %v3214 = vstv %s3213
    %v3215 = vmul.f32 %v1115, %v3214
    %v3216 = vmul.f32 %v1116, %v3214
    %v3217 = vmul.f32 %v1117, %v3214
    %v3218 = vmul.f32 %v1118, %v3214
    %v3219 = vmul.f32 %v1119, %v3214
    %v3220 = vmul.f32 %v1120, %v3214
    %v3221 = vmul.f32 %v1121, %v3214
    %v3222 = vmul.f32 %v1122, %v3214
    %s3223 = sld [smem:[#allocation8 + $0x485]]
    %v3224 = vstv %s3223
    %v3225 = vmul.f32 %v1293, %v3224
    %v3226 = vmul.f32 %v1294, %v3224
    %v3227 = vmul.f32 %v1295, %v3224
    %v3228 = vmul.f32 %v1296, %v3224
    %v3229 = vmul.f32 %v1297, %v3224
    %v3230 = vmul.f32 %v1298, %v3224
    %v3231 = vmul.f32 %v1299, %v3224
    %v3232 = vmul.f32 %v1300, %v3224
    %s3233 = sld [smem:[#allocation8 + $0x486]]
    %v3234 = vstv %s3233
    %v3235 = vmul.f32 %v1471, %v3234
    %v3236 = vmul.f32 %v1472, %v3234
    %v3237 = vmul.f32 %v1473, %v3234
    %v3238 = vmul.f32 %v1474, %v3234
    %v3239 = vmul.f32 %v1475, %v3234
    %v3240 = vmul.f32 %v1476, %v3234
    %v3241 = vmul.f32 %v1477, %v3234
    %v3242 = vmul.f32 %v1478, %v3234
    %s3243 = sld [smem:[#allocation8 + $0x487]]
    %v3244 = vstv %s3243
    %v3245 = vmul.f32 %v1649, %v3244
    %v3246 = vmul.f32 %v1650, %v3244
    %v3247 = vmul.f32 %v1651, %v3244
    %v3248 = vmul.f32 %v1652, %v3244
    %v3249 = vmul.f32 %v1653, %v3244
    %v3250 = vmul.f32 %v1654, %v3244
    %v3251 = vmul.f32 %v1655, %v3244
    %v3252 = vmul.f32 %v1656, %v3244
    %v3253 = vadd.f32 %v3175, %v3185
    %v3254 = vadd.f32 %v3176, %v3186
    %v3255 = vadd.f32 %v3177, %v3187
    %v3256 = vadd.f32 %v3178, %v3188
    %v3257 = vadd.f32 %v3179, %v3189
    %v3258 = vadd.f32 %v3180, %v3190
    %v3259 = vadd.f32 %v3181, %v3191
    %v3260 = vadd.f32 %v3182, %v3192
    %v3261 = vadd.f32 %v3195, %v3205
    %v3262 = vadd.f32 %v3196, %v3206
    %v3263 = vadd.f32 %v3197, %v3207
    %v3264 = vadd.f32 %v3198, %v3208
    %v3265 = vadd.f32 %v3199, %v3209
    %v3266 = vadd.f32 %v3200, %v3210
    %v3267 = vadd.f32 %v3201, %v3211
    %v3268 = vadd.f32 %v3202, %v3212
    %v3269 = vadd.f32 %v3215, %v3225
    %v3270 = vadd.f32 %v3216, %v3226
    %v3271 = vadd.f32 %v3217, %v3227
    %v3272 = vadd.f32 %v3218, %v3228
    %v3273 = vadd.f32 %v3219, %v3229
    %v3274 = vadd.f32 %v3220, %v3230
    %v3275 = vadd.f32 %v3221, %v3231
    %v3276 = vadd.f32 %v3222, %v3232
    %v3277 = vadd.f32 %v3235, %v3245
    %v3278 = vadd.f32 %v3236, %v3246
    %v3279 = vadd.f32 %v3237, %v3247
    %v3280 = vadd.f32 %v3238, %v3248
    %v3281 = vadd.f32 %v3239, %v3249
    %v3282 = vadd.f32 %v3240, %v3250
    %v3283 = vadd.f32 %v3241, %v3251
    %v3284 = vadd.f32 %v3242, %v3252
    %v3285 = vadd.f32 %v3253, %v3261
    %v3286 = vadd.f32 %v3254, %v3262
    %v3287 = vadd.f32 %v3255, %v3263
    %v3288 = vadd.f32 %v3256, %v3264
    %v3289 = vadd.f32 %v3257, %v3265
    %v3290 = vadd.f32 %v3258, %v3266
    %v3291 = vadd.f32 %v3259, %v3267
    %v3292 = vadd.f32 %v3260, %v3268
    %v3293 = vadd.f32 %v3269, %v3277
    %v3294 = vadd.f32 %v3270, %v3278
    %v3295 = vadd.f32 %v3271, %v3279
    %v3296 = vadd.f32 %v3272, %v3280
    %v3297 = vadd.f32 %v3273, %v3281
    %v3298 = vadd.f32 %v3274, %v3282
    %v3299 = vadd.f32 %v3275, %v3283
    %v3300 = vadd.f32 %v3276, %v3284
    %v3301 = vadd.f32 %v3285, %v3293
    %v3302 = vadd.f32 %v3286, %v3294
    %v3303 = vadd.f32 %v3287, %v3295
    %v3304 = vadd.f32 %v3288, %v3296
    %v3305 = vadd.f32 %v3289, %v3297
    %v3306 = vadd.f32 %v3290, %v3298
    %v3307 = vadd.f32 %v3291, %v3299
    %v3308 = vadd.f32 %v3292, %v3300
    %s3309 = sld [smem:[#allocation9 + $0x9]]
    %v3310 = vstv %s3309
    %v3311 = vadd.f32 %v3301, %v3310
    %v3312 = vadd.f32 %v3302, %v3310
    %v3313 = vadd.f32 %v3303, %v3310
    %v3314 = vadd.f32 %v3304, %v3310
    %v3315 = vadd.f32 %v3305, %v3310
    %v3316 = vadd.f32 %v3306, %v3310
    %v3317 = vadd.f32 %v3307, %v3310
    %v3318 = vadd.f32 %v3308, %v3310
    %v3319 = vmax.f32 %v3311, 0.0
    %v3320 = vmax.f32 %v3312, 0.0
    %v3321 = vmax.f32 %v3313, 0.0
    %v3322 = vmax.f32 %v3314, 0.0
    %v3323 = vmax.f32 %v3315, 0.0
    %v3324 = vmax.f32 %v3316, 0.0
    %v3325 = vmax.f32 %v3317, 0.0
    %v3326 = vmax.f32 %v3318, 0.0
    %s3327 = sld [smem:[#allocation11 + $0x9]]
    %v3328 = vstv %s3327
    %v3329 = vmul.f32 %v3319, %v3328
    %v3330 = vmul.f32 %v3320, %v3328
    %v3331 = vmul.f32 %v3321, %v3328
    %v3332 = vmul.f32 %v3322, %v3328
    %v3333 = vmul.f32 %v3323, %v3328
    %v3334 = vmul.f32 %v3324, %v3328
    %v3335 = vmul.f32 %v3325, %v3328
    %v3336 = vmul.f32 %v3326, %v3328
    %v3337 = vadd.f32 %v2649, %v3329
    %v3338 = vadd.f32 %v2650, %v3330
    %v3339 = vadd.f32 %v2651, %v3331
    %v3340 = vadd.f32 %v2652, %v3332
    %v3341 = vadd.f32 %v2653, %v3333
    %v3342 = vadd.f32 %v2654, %v3334
    %v3343 = vadd.f32 %v2655, %v3335
    %v3344 = vadd.f32 %v2656, %v3336
    %s3345 = sld [smem:[#allocation8 + $0x500]]
    %v3346 = vstv %s3345
    %v3347 = vmul.f32 %v403, %v3346
    %v3348 = vmul.f32 %v404, %v3346
    %v3349 = vmul.f32 %v405, %v3346
    %v3350 = vmul.f32 %v406, %v3346
    %v3351 = vmul.f32 %v407, %v3346
    %v3352 = vmul.f32 %v408, %v3346
    %v3353 = vmul.f32 %v409, %v3346
    %v3354 = vmul.f32 %v410, %v3346
    %s3355 = sld [smem:[#allocation8 + $0x501]]
    %v3356 = vstv %s3355
    %v3357 = vmul.f32 %v581, %v3356
    %v3358 = vmul.f32 %v582, %v3356
    %v3359 = vmul.f32 %v583, %v3356
    %v3360 = vmul.f32 %v584, %v3356
    %v3361 = vmul.f32 %v585, %v3356
    %v3362 = vmul.f32 %v586, %v3356
    %v3363 = vmul.f32 %v587, %v3356
    %v3364 = vmul.f32 %v588, %v3356
    %s3365 = sld [smem:[#allocation8 + $0x502]]
    %v3366 = vstv %s3365
    %v3367 = vmul.f32 %v759, %v3366
    %v3368 = vmul.f32 %v760, %v3366
    %v3369 = vmul.f32 %v761, %v3366
    %v3370 = vmul.f32 %v762, %v3366
    %v3371 = vmul.f32 %v763, %v3366
    %v3372 = vmul.f32 %v764, %v3366
    %v3373 = vmul.f32 %v765, %v3366
    %v3374 = vmul.f32 %v766, %v3366
    %s3375 = sld [smem:[#allocation8 + $0x503]]
    %v3376 = vstv %s3375
    %v3377 = vmul.f32 %v937, %v3376
    %v3378 = vmul.f32 %v938, %v3376
    %v3379 = vmul.f32 %v939, %v3376
    %v3380 = vmul.f32 %v940, %v3376
    %v3381 = vmul.f32 %v941, %v3376
    %v3382 = vmul.f32 %v942, %v3376
    %v3383 = vmul.f32 %v943, %v3376
    %v3384 = vmul.f32 %v944, %v3376
    %s3385 = sld [smem:[#allocation8 + $0x504]]
    %v3386 = vstv %s3385
    %v3387 = vmul.f32 %v1115, %v3386
    %v3388 = vmul.f32 %v1116, %v3386
    %v3389 = vmul.f32 %v1117, %v3386
    %v3390 = vmul.f32 %v1118, %v3386
    %v3391 = vmul.f32 %v1119, %v3386
    %v3392 = vmul.f32 %v1120, %v3386
    %v3393 = vmul.f32 %v1121, %v3386
    %v3394 = vmul.f32 %v1122, %v3386
    %s3395 = sld [smem:[#allocation8 + $0x505]]
    %v3396 = vstv %s3395
    %v3397 = vmul.f32 %v1293, %v3396
    %v3398 = vmul.f32 %v1294, %v3396
    %v3399 = vmul.f32 %v1295, %v3396
    %v3400 = vmul.f32 %v1296, %v3396
    %v3401 = vmul.f32 %v1297, %v3396
    %v3402 = vmul.f32 %v1298, %v3396
    %v3403 = vmul.f32 %v1299, %v3396
    %v3404 = vmul.f32 %v1300, %v3396
    %s3405 = sld [smem:[#allocation8 + $0x506]]
    %v3406 = vstv %s3405
    %v3407 = vmul.f32 %v1471, %v3406
    %v3408 = vmul.f32 %v1472, %v3406
    %v3409 = vmul.f32 %v1473, %v3406
    %v3410 = vmul.f32 %v1474, %v3406
    %v3411 = vmul.f32 %v1475, %v3406
    %v3412 = vmul.f32 %v1476, %v3406
    %v3413 = vmul.f32 %v1477, %v3406
    %v3414 = vmul.f32 %v1478, %v3406
    %s3415 = sld [smem:[#allocation8 + $0x507]]
    %v3416 = vstv %s3415
    %v3417 = vmul.f32 %v1649, %v3416
    %v3418 = vmul.f32 %v1650, %v3416
    %v3419 = vmul.f32 %v1651, %v3416
    %v3420 = vmul.f32 %v1652, %v3416
    %v3421 = vmul.f32 %v1653, %v3416
    %v3422 = vmul.f32 %v1654, %v3416
    %v3423 = vmul.f32 %v1655, %v3416
    %v3424 = vmul.f32 %v1656, %v3416
    %v3425 = vadd.f32 %v3347, %v3357
    %v3426 = vadd.f32 %v3348, %v3358
    %v3427 = vadd.f32 %v3349, %v3359
    %v3428 = vadd.f32 %v3350, %v3360
    %v3429 = vadd.f32 %v3351, %v3361
    %v3430 = vadd.f32 %v3352, %v3362
    %v3431 = vadd.f32 %v3353, %v3363
    %v3432 = vadd.f32 %v3354, %v3364
    %v3433 = vadd.f32 %v3367, %v3377
    %v3434 = vadd.f32 %v3368, %v3378
    %v3435 = vadd.f32 %v3369, %v3379
    %v3436 = vadd.f32 %v3370, %v3380
    %v3437 = vadd.f32 %v3371, %v3381
    %v3438 = vadd.f32 %v3372, %v3382
    %v3439 = vadd.f32 %v3373, %v3383
    %v3440 = vadd.f32 %v3374, %v3384
    %v3441 = vadd.f32 %v3387, %v3397
    %v3442 = vadd.f32 %v3388, %v3398
    %v3443 = vadd.f32 %v3389, %v3399
    %v3444 = vadd.f32 %v3390, %v3400
    %v3445 = vadd.f32 %v3391, %v3401
    %v3446 = vadd.f32 %v3392, %v3402
    %v3447 = vadd.f32 %v3393, %v3403
    %v3448 = vadd.f32 %v3394, %v3404
    %v3449 = vadd.f32 %v3407, %v3417
    %v3450 = vadd.f32 %v3408, %v3418
    %v3451 = vadd.f32 %v3409, %v3419
    %v3452 = vadd.f32 %v3410, %v3420
    %v3453 = vadd.f32 %v3411, %v3421
    %v3454 = vadd.f32 %v3412, %v3422
    %v3455 = vadd.f32 %v3413, %v3423
    %v3456 = vadd.f32 %v3414, %v3424
    %v3457 = vadd.f32 %v3425, %v3433
    %v3458 = vadd.f32 %v3426, %v3434
    %v3459 = vadd.f32 %v3427, %v3435
    %v3460 = vadd.f32 %v3428, %v3436
    %v3461 = vadd.f32 %v3429, %v3437
    %v3462 = vadd.f32 %v3430, %v3438
    %v3463 = vadd.f32 %v3431, %v3439
    %v3464 = vadd.f32 %v3432, %v3440
    %v3465 = vadd.f32 %v3441, %v3449
    %v3466 = vadd.f32 %v3442, %v3450
    %v3467 = vadd.f32 %v3443, %v3451
    %v3468 = vadd.f32 %v3444, %v3452
    %v3469 = vadd.f32 %v3445, %v3453
    %v3470 = vadd.f32 %v3446, %v3454
    %v3471 = vadd.f32 %v3447, %v3455
    %v3472 = vadd.f32 %v3448, %v3456
    %v3473 = vadd.f32 %v3457, %v3465
    %v3474 = vadd.f32 %v3458, %v3466
    %v3475 = vadd.f32 %v3459, %v3467
    %v3476 = vadd.f32 %v3460, %v3468
    %v3477 = vadd.f32 %v3461, %v3469
    %v3478 = vadd.f32 %v3462, %v3470
    %v3479 = vadd.f32 %v3463, %v3471
    %v3480 = vadd.f32 %v3464, %v3472
    %s3481 = sld [smem:[#allocation9 + $0xa]]
    %v3482 = vstv %s3481
    %v3483 = vadd.f32 %v3473, %v3482
    %v3484 = vadd.f32 %v3474, %v3482
    %v3485 = vadd.f32 %v3475, %v3482
    %v3486 = vadd.f32 %v3476, %v3482
    %v3487 = vadd.f32 %v3477, %v3482
    %v3488 = vadd.f32 %v3478, %v3482
    %v3489 = vadd.f32 %v3479, %v3482
    %v3490 = vadd.f32 %v3480, %v3482
    %v3491 = vmax.f32 %v3483, 0.0
    %v3492 = vmax.f32 %v3484, 0.0
    %v3493 = vmax.f32 %v3485, 0.0
    %v3494 = vmax.f32 %v3486, 0.0
    %v3495 = vmax.f32 %v3487, 0.0
    %v3496 = vmax.f32 %v3488, 0.0
    %v3497 = vmax.f32 %v3489, 0.0
    %v3498 = vmax.f32 %v3490, 0.0
    %s3499 = sld [smem:[#allocation11 + $0xa]]
    %v3500 = vstv %s3499
    %v3501 = vmul.f32 %v3491, %v3500
    %v3502 = vmul.f32 %v3492, %v3500
    %v3503 = vmul.f32 %v3493, %v3500
    %v3504 = vmul.f32 %v3494, %v3500
    %v3505 = vmul.f32 %v3495, %v3500
    %v3506 = vmul.f32 %v3496, %v3500
    %v3507 = vmul.f32 %v3497, %v3500
    %v3508 = vmul.f32 %v3498, %v3500
    %v3509 = vadd.f32 %v2821, %v3501
    %v3510 = vadd.f32 %v2822, %v3502
    %v3511 = vadd.f32 %v2823, %v3503
    %v3512 = vadd.f32 %v2824, %v3504
    %v3513 = vadd.f32 %v2825, %v3505
    %v3514 = vadd.f32 %v2826, %v3506
    %v3515 = vadd.f32 %v2827, %v3507
    %v3516 = vadd.f32 %v2828, %v3508
    %s3517 = sld [smem:[#allocation8 + $0x580]]
    %v3518 = vstv %s3517
    %v3519 = vmul.f32 %v403, %v3518
    %v3520 = vmul.f32 %v404, %v3518
    %v3521 = vmul.f32 %v405, %v3518
    %v3522 = vmul.f32 %v406, %v3518
    %v3523 = vmul.f32 %v407, %v3518
    %v3524 = vmul.f32 %v408, %v3518
    %v3525 = vmul.f32 %v409, %v3518
    %v3526 = vmul.f32 %v410, %v3518
    %s3527 = sld [smem:[#allocation8 + $0x581]]
    %v3528 = vstv %s3527
    %v3529 = vmul.f32 %v581, %v3528
    %v3530 = vmul.f32 %v582, %v3528
    %v3531 = vmul.f32 %v583, %v3528
    %v3532 = vmul.f32 %v584, %v3528
    %v3533 = vmul.f32 %v585, %v3528
    %v3534 = vmul.f32 %v586, %v3528
    %v3535 = vmul.f32 %v587, %v3528
    %v3536 = vmul.f32 %v588, %v3528
    %s3537 = sld [smem:[#allocation8 + $0x582]]
    %v3538 = vstv %s3537
    %v3539 = vmul.f32 %v759, %v3538
    %v3540 = vmul.f32 %v760, %v3538
    %v3541 = vmul.f32 %v761, %v3538
    %v3542 = vmul.f32 %v762, %v3538
    %v3543 = vmul.f32 %v763, %v3538
    %v3544 = vmul.f32 %v764, %v3538
    %v3545 = vmul.f32 %v765, %v3538
    %v3546 = vmul.f32 %v766, %v3538
    %s3547 = sld [smem:[#allocation8 + $0x583]]
    %v3548 = vstv %s3547
    %v3549 = vmul.f32 %v937, %v3548
    %v3550 = vmul.f32 %v938, %v3548
    %v3551 = vmul.f32 %v939, %v3548
    %v3552 = vmul.f32 %v940, %v3548
    %v3553 = vmul.f32 %v941, %v3548
    %v3554 = vmul.f32 %v942, %v3548
    %v3555 = vmul.f32 %v943, %v3548
    %v3556 = vmul.f32 %v944, %v3548
    %s3557 = sld [smem:[#allocation8 + $0x584]]
    %v3558 = vstv %s3557
    %v3559 = vmul.f32 %v1115, %v3558
    %v3560 = vmul.f32 %v1116, %v3558
    %v3561 = vmul.f32 %v1117, %v3558
    %v3562 = vmul.f32 %v1118, %v3558
    %v3563 = vmul.f32 %v1119, %v3558
    %v3564 = vmul.f32 %v1120, %v3558
    %v3565 = vmul.f32 %v1121, %v3558
    %v3566 = vmul.f32 %v1122, %v3558
    %s3567 = sld [smem:[#allocation8 + $0x585]]
    %v3568 = vstv %s3567
    %v3569 = vmul.f32 %v1293, %v3568
    %v3570 = vmul.f32 %v1294, %v3568
    %v3571 = vmul.f32 %v1295, %v3568
    %v3572 = vmul.f32 %v1296, %v3568
    %v3573 = vmul.f32 %v1297, %v3568
    %v3574 = vmul.f32 %v1298, %v3568
    %v3575 = vmul.f32 %v1299, %v3568
    %v3576 = vmul.f32 %v1300, %v3568
    %s3577 = sld [smem:[#allocation8 + $0x586]]
    %v3578 = vstv %s3577
    %v3579 = vmul.f32 %v1471, %v3578
    %v3580 = vmul.f32 %v1472, %v3578
    %v3581 = vmul.f32 %v1473, %v3578
    %v3582 = vmul.f32 %v1474, %v3578
    %v3583 = vmul.f32 %v1475, %v3578
    %v3584 = vmul.f32 %v1476, %v3578
    %v3585 = vmul.f32 %v1477, %v3578
    %v3586 = vmul.f32 %v1478, %v3578
    %s3587 = sld [smem:[#allocation8 + $0x587]]
    %v3588 = vstv %s3587
    %v3589 = vmul.f32 %v1649, %v3588
    %v3590 = vmul.f32 %v1650, %v3588
    %v3591 = vmul.f32 %v1651, %v3588
    %v3592 = vmul.f32 %v1652, %v3588
    %v3593 = vmul.f32 %v1653, %v3588
    %v3594 = vmul.f32 %v1654, %v3588
    %v3595 = vmul.f32 %v1655, %v3588
    %v3596 = vmul.f32 %v1656, %v3588
    %v3597 = vadd.f32 %v3519, %v3529
    %v3598 = vadd.f32 %v3520, %v3530
    %v3599 = vadd.f32 %v3521, %v3531
    %v3600 = vadd.f32 %v3522, %v3532
    %v3601 = vadd.f32 %v3523, %v3533
    %v3602 = vadd.f32 %v3524, %v3534
    %v3603 = vadd.f32 %v3525, %v3535
    %v3604 = vadd.f32 %v3526, %v3536
    %v3605 = vadd.f32 %v3539, %v3549
    %v3606 = vadd.f32 %v3540, %v3550
    %v3607 = vadd.f32 %v3541, %v3551
    %v3608 = vadd.f32 %v3542, %v3552
    %v3609 = vadd.f32 %v3543, %v3553
    %v3610 = vadd.f32 %v3544, %v3554
    %v3611 = vadd.f32 %v3545, %v3555
    %v3612 = vadd.f32 %v3546, %v3556
    %v3613 = vadd.f32 %v3559, %v3569
    %v3614 = vadd.f32 %v3560, %v3570
    %v3615 = vadd.f32 %v3561, %v3571
    %v3616 = vadd.f32 %v3562, %v3572
    %v3617 = vadd.f32 %v3563, %v3573
    %v3618 = vadd.f32 %v3564, %v3574
    %v3619 = vadd.f32 %v3565, %v3575
    %v3620 = vadd.f32 %v3566, %v3576
    %v3621 = vadd.f32 %v3579, %v3589
    %v3622 = vadd.f32 %v3580, %v3590
    %v3623 = vadd.f32 %v3581, %v3591
    %v3624 = vadd.f32 %v3582, %v3592
    %v3625 = vadd.f32 %v3583, %v3593
    %v3626 = vadd.f32 %v3584, %v3594
    %v3627 = vadd.f32 %v3585, %v3595
    %v3628 = vadd.f32 %v3586, %v3596
    %v3629 = vadd.f32 %v3597, %v3605
    %v3630 = vadd.f32 %v3598, %v3606
    %v3631 = vadd.f32 %v3599, %v3607
    %v3632 = vadd.f32 %v3600, %v3608
    %v3633 = vadd.f32 %v3601, %v3609
    %v3634 = vadd.f32 %v3602, %v3610
    %v3635 = vadd.f32 %v3603, %v3611
    %v3636 = vadd.f32 %v3604, %v3612
    %v3637 = vadd.f32 %v3613, %v3621
    %v3638 = vadd.f32 %v3614, %v3622
    %v3639 = vadd.f32 %v3615, %v3623
    %v3640 = vadd.f32 %v3616, %v3624
    %v3641 = vadd.f32 %v3617, %v3625
    %v3642 = vadd.f32 %v3618, %v3626
    %v3643 = vadd.f32 %v3619, %v3627
    %v3644 = vadd.f32 %v3620, %v3628
    %v3645 = vadd.f32 %v3629, %v3637
    %v3646 = vadd.f32 %v3630, %v3638
    %v3647 = vadd.f32 %v3631, %v3639
    %v3648 = vadd.f32 %v3632, %v3640
    %v3649 = vadd.f32 %v3633, %v3641
    %v3650 = vadd.f32 %v3634, %v3642
    %v3651 = vadd.f32 %v3635, %v3643
    %v3652 = vadd.f32 %v3636, %v3644
    %s3653 = sld [smem:[#allocation9 + $0xb]]
    %v3654 = vstv %s3653
    %v3655 = vadd.f32 %v3645, %v3654
    %v3656 = vadd.f32 %v3646, %v3654
    %v3657 = vadd.f32 %v3647, %v3654
    %v3658 = vadd.f32 %v3648, %v3654
    %v3659 = vadd.f32 %v3649, %v3654
    %v3660 = vadd.f32 %v3650, %v3654
    %v3661 = vadd.f32 %v3651, %v3654
    %v3662 = vadd.f32 %v3652, %v3654
    %v3663 = vmax.f32 %v3655, 0.0
    %v3664 = vmax.f32 %v3656, 0.0
    %v3665 = vmax.f32 %v3657, 0.0
    %v3666 = vmax.f32 %v3658, 0.0
    %v3667 = vmax.f32 %v3659, 0.0
    %v3668 = vmax.f32 %v3660, 0.0
    %v3669 = vmax.f32 %v3661, 0.0
    %v3670 = vmax.f32 %v3662, 0.0
    %s3671 = sld [smem:[#allocation11 + $0xb]]
    %v3672 = vstv %s3671
    %v3673 = vmul.f32 %v3663, %v3672
    %v3674 = vmul.f32 %v3664, %v3672
    %v3675 = vmul.f32 %v3665, %v3672
    %v3676 = vmul.f32 %v3666, %v3672
    %v3677 = vmul.f32 %v3667, %v3672
    %v3678 = vmul.f32 %v3668, %v3672
    %v3679 = vmul.f32 %v3669, %v3672
    %v3680 = vmul.f32 %v3670, %v3672
    %v3681 = vadd.f32 %v2993, %v3673
    %v3682 = vadd.f32 %v2994, %v3674
    %v3683 = vadd.f32 %v2995, %v3675
    %v3684 = vadd.f32 %v2996, %v3676
    %v3685 = vadd.f32 %v2997, %v3677
    %v3686 = vadd.f32 %v2998, %v3678
    %v3687 = vadd.f32 %v2999, %v3679
    %v3688 = vadd.f32 %v3000, %v3680
    %s3689 = sld [smem:[#allocation8 + $0x600]]
    %v3690 = vstv %s3689
    %v3691 = vmul.f32 %v403, %v3690
    %v3692 = vmul.f32 %v404, %v3690
    %v3693 = vmul.f32 %v405, %v3690
    %v3694 = vmul.f32 %v406, %v3690
    %v3695 = vmul.f32 %v407, %v3690
    %v3696 = vmul.f32 %v408, %v3690
    %v3697 = vmul.f32 %v409, %v3690
    %v3698 = vmul.f32 %v410, %v3690
    %s3699 = sld [smem:[#allocation8 + $0x601]]
    %v3700 = vstv %s3699
    %v3701 = vmul.f32 %v581, %v3700
    %v3702 = vmul.f32 %v582, %v3700
    %v3703 = vmul.f32 %v583, %v3700
    %v3704 = vmul.f32 %v584, %v3700
    %v3705 = vmul.f32 %v585, %v3700
    %v3706 = vmul.f32 %v586, %v3700
    %v3707 = vmul.f32 %v587, %v3700
    %v3708 = vmul.f32 %v588, %v3700
    %s3709 = sld [smem:[#allocation8 + $0x602]]
    %v3710 = vstv %s3709
    %v3711 = vmul.f32 %v759, %v3710
    %v3712 = vmul.f32 %v760, %v3710
    %v3713 = vmul.f32 %v761, %v3710
    %v3714 = vmul.f32 %v762, %v3710
    %v3715 = vmul.f32 %v763, %v3710
    %v3716 = vmul.f32 %v764, %v3710
    %v3717 = vmul.f32 %v765, %v3710
    %v3718 = vmul.f32 %v766, %v3710
    %s3719 = sld [smem:[#allocation8 + $0x603]]
    %v3720 = vstv %s3719
    %v3721 = vmul.f32 %v937, %v3720
    %v3722 = vmul.f32 %v938, %v3720
    %v3723 = vmul.f32 %v939, %v3720
    %v3724 = vmul.f32 %v940, %v3720
    %v3725 = vmul.f32 %v941, %v3720
    %v3726 = vmul.f32 %v942, %v3720
    %v3727 = vmul.f32 %v943, %v3720
    %v3728 = vmul.f32 %v944, %v3720
    %s3729 = sld [smem:[#allocation8 + $0x604]]
    %v3730 = vstv %s3729
    %v3731 = vmul.f32 %v1115, %v3730
    %v3732 = vmul.f32 %v1116, %v3730
    %v3733 = vmul.f32 %v1117, %v3730
    %v3734 = vmul.f32 %v1118, %v3730
    %v3735 = vmul.f32 %v1119, %v3730
    %v3736 = vmul.f32 %v1120, %v3730
    %v3737 = vmul.f32 %v1121, %v3730
    %v3738 = vmul.f32 %v1122, %v3730
    %s3739 = sld [smem:[#allocation8 + $0x605]]
    %v3740 = vstv %s3739
    %v3741 = vmul.f32 %v1293, %v3740
    %v3742 = vmul.f32 %v1294, %v3740
    %v3743 = vmul.f32 %v1295, %v3740
    %v3744 = vmul.f32 %v1296, %v3740
    %v3745 = vmul.f32 %v1297, %v3740
    %v3746 = vmul.f32 %v1298, %v3740
    %v3747 = vmul.f32 %v1299, %v3740
    %v3748 = vmul.f32 %v1300, %v3740
    %s3749 = sld [smem:[#allocation8 + $0x606]]
    %v3750 = vstv %s3749
    %v3751 = vmul.f32 %v1471, %v3750
    %v3752 = vmul.f32 %v1472, %v3750
    %v3753 = vmul.f32 %v1473, %v3750
    %v3754 = vmul.f32 %v1474, %v3750
    %v3755 = vmul.f32 %v1475, %v3750
    %v3756 = vmul.f32 %v1476, %v3750
    %v3757 = vmul.f32 %v1477, %v3750
    %v3758 = vmul.f32 %v1478, %v3750
    %s3759 = sld [smem:[#allocation8 + $0x607]]
    %v3760 = vstv %s3759
    %v3761 = vmul.f32 %v1649, %v3760
    %v3762 = vmul.f32 %v1650, %v3760
    %v3763 = vmul.f32 %v1651, %v3760
    %v3764 = vmul.f32 %v1652, %v3760
    %v3765 = vmul.f32 %v1653, %v3760
    %v3766 = vmul.f32 %v1654, %v3760
    %v3767 = vmul.f32 %v1655, %v3760
    %v3768 = vmul.f32 %v1656, %v3760
    %v3769 = vadd.f32 %v3691, %v3701
    %v3770 = vadd.f32 %v3692, %v3702
    %v3771 = vadd.f32 %v3693, %v3703
    %v3772 = vadd.f32 %v3694, %v3704
    %v3773 = vadd.f32 %v3695, %v3705
    %v3774 = vadd.f32 %v3696, %v3706
    %v3775 = vadd.f32 %v3697, %v3707
    %v3776 = vadd.f32 %v3698, %v3708
    %v3777 = vadd.f32 %v3711, %v3721
    %v3778 = vadd.f32 %v3712, %v3722
    %v3779 = vadd.f32 %v3713, %v3723
    %v3780 = vadd.f32 %v3714, %v3724
    %v3781 = vadd.f32 %v3715, %v3725
    %v3782 = vadd.f32 %v3716, %v3726
    %v3783 = vadd.f32 %v3717, %v3727
    %v3784 = vadd.f32 %v3718, %v3728
    %v3785 = vadd.f32 %v3731, %v3741
    %v3786 = vadd.f32 %v3732, %v3742
    %v3787 = vadd.f32 %v3733, %v3743
    %v3788 = vadd.f32 %v3734, %v3744
    %v3789 = vadd.f32 %v3735, %v3745
    %v3790 = vadd.f32 %v3736, %v3746
    %v3791 = vadd.f32 %v3737, %v3747
    %v3792 = vadd.f32 %v3738, %v3748
    %v3793 = vadd.f32 %v3751, %v3761
    %v3794 = vadd.f32 %v3752, %v3762
    %v3795 = vadd.f32 %v3753, %v3763
    %v3796 = vadd.f32 %v3754, %v3764
    %v3797 = vadd.f32 %v3755, %v3765
    %v3798 = vadd.f32 %v3756, %v3766
    %v3799 = vadd.f32 %v3757, %v3767
    %v3800 = vadd.f32 %v3758, %v3768
    %v3801 = vadd.f32 %v3769, %v3777
    %v3802 = vadd.f32 %v3770, %v3778
    %v3803 = vadd.f32 %v3771, %v3779
    %v3804 = vadd.f32 %v3772, %v3780
    %v3805 = vadd.f32 %v3773, %v3781
    %v3806 = vadd.f32 %v3774, %v3782
    %v3807 = vadd.f32 %v3775, %v3783
    %v3808 = vadd.f32 %v3776, %v3784
    %v3809 = vadd.f32 %v3785, %v3793
    %v3810 = vadd.f32 %v3786, %v3794
    %v3811 = vadd.f32 %v3787, %v3795
    %v3812 = vadd.f32 %v3788, %v3796
    %v3813 = vadd.f32 %v3789, %v3797
    %v3814 = vadd.f32 %v3790, %v3798
    %v3815 = vadd.f32 %v3791, %v3799
    %v3816 = vadd.f32 %v3792, %v3800
    %v3817 = vadd.f32 %v3801, %v3809
    %v3818 = vadd.f32 %v3802, %v3810
    %v3819 = vadd.f32 %v3803, %v3811
    %v3820 = vadd.f32 %v3804, %v3812
    %v3821 = vadd.f32 %v3805, %v3813
    %v3822 = vadd.f32 %v3806, %v3814
    %v3823 = vadd.f32 %v3807, %v3815
    %v3824 = vadd.f32 %v3808, %v3816
    %s3825 = sld [smem:[#allocation9 + $0xc]]
    %v3826 = vstv %s3825
    %v3827 = vadd.f32 %v3817, %v3826
    %v3828 = vadd.f32 %v3818, %v3826
    %v3829 = vadd.f32 %v3819, %v3826
    %v3830 = vadd.f32 %v3820, %v3826
    %v3831 = vadd.f32 %v3821, %v3826
    %v3832 = vadd.f32 %v3822, %v3826
    %v3833 = vadd.f32 %v3823, %v3826
    %v3834 = vadd.f32 %v3824, %v3826
    %v3835 = vmax.f32 %v3827, 0.0
    %v3836 = vmax.f32 %v3828, 0.0
    %v3837 = vmax.f32 %v3829, 0.0
    %v3838 = vmax.f32 %v3830, 0.0
    %v3839 = vmax.f32 %v3831, 0.0
    %v3840 = vmax.f32 %v3832, 0.0
    %v3841 = vmax.f32 %v3833, 0.0
    %v3842 = vmax.f32 %v3834, 0.0
    %s3843 = sld [smem:[#allocation11 + $0xc]]
    %v3844 = vstv %s3843
    %v3845 = vmul.f32 %v3835, %v3844
    %v3846 = vmul.f32 %v3836, %v3844
    %v3847 = vmul.f32 %v3837, %v3844
    %v3848 = vmul.f32 %v3838, %v3844
    %v3849 = vmul.f32 %v3839, %v3844
    %v3850 = vmul.f32 %v3840, %v3844
    %v3851 = vmul.f32 %v3841, %v3844
    %v3852 = vmul.f32 %v3842, %v3844
    %v3853 = vadd.f32 %v3165, %v3845
    %v3854 = vadd.f32 %v3166, %v3846
    %v3855 = vadd.f32 %v3167, %v3847
    %v3856 = vadd.f32 %v3168, %v3848
    %v3857 = vadd.f32 %v3169, %v3849
    %v3858 = vadd.f32 %v3170, %v3850
    %v3859 = vadd.f32 %v3171, %v3851
    %v3860 = vadd.f32 %v3172, %v3852
    %s3861 = sld [smem:[#allocation8 + $0x680]]
    %v3862 = vstv %s3861
    %v3863 = vmul.f32 %v403, %v3862
    %v3864 = vmul.f32 %v404, %v3862
    %v3865 = vmul.f32 %v405, %v3862
    %v3866 = vmul.f32 %v406, %v3862
    %v3867 = vmul.f32 %v407, %v3862
    %v3868 = vmul.f32 %v408, %v3862
    %v3869 = vmul.f32 %v409, %v3862
    %v3870 = vmul.f32 %v410, %v3862
    %s3871 = sld [smem:[#allocation8 + $0x681]]
    %v3872 = vstv %s3871
    %v3873 = vmul.f32 %v581, %v3872
    %v3874 = vmul.f32 %v582, %v3872
    %v3875 = vmul.f32 %v583, %v3872
    %v3876 = vmul.f32 %v584, %v3872
    %v3877 = vmul.f32 %v585, %v3872
    %v3878 = vmul.f32 %v586, %v3872
    %v3879 = vmul.f32 %v587, %v3872
    %v3880 = vmul.f32 %v588, %v3872
    %s3881 = sld [smem:[#allocation8 + $0x682]]
    %v3882 = vstv %s3881
    %v3883 = vmul.f32 %v759, %v3882
    %v3884 = vmul.f32 %v760, %v3882
    %v3885 = vmul.f32 %v761, %v3882
    %v3886 = vmul.f32 %v762, %v3882
    %v3887 = vmul.f32 %v763, %v3882
    %v3888 = vmul.f32 %v764, %v3882
    %v3889 = vmul.f32 %v765, %v3882
    %v3890 = vmul.f32 %v766, %v3882
    %s3891 = sld [smem:[#allocation8 + $0x683]]
    %v3892 = vstv %s3891
    %v3893 = vmul.f32 %v937, %v3892
    %v3894 = vmul.f32 %v938, %v3892
    %v3895 = vmul.f32 %v939, %v3892
    %v3896 = vmul.f32 %v940, %v3892
    %v3897 = vmul.f32 %v941, %v3892
    %v3898 = vmul.f32 %v942, %v3892
    %v3899 = vmul.f32 %v943, %v3892
    %v3900 = vmul.f32 %v944, %v3892
    %s3901 = sld [smem:[#allocation8 + $0x684]]
    %v3902 = vstv %s3901
    %v3903 = vmul.f32 %v1115, %v3902
    %v3904 = vmul.f32 %v1116, %v3902
    %v3905 = vmul.f32 %v1117, %v3902
    %v3906 = vmul.f32 %v1118, %v3902
    %v3907 = vmul.f32 %v1119, %v3902
    %v3908 = vmul.f32 %v1120, %v3902
    %v3909 = vmul.f32 %v1121, %v3902
    %v3910 = vmul.f32 %v1122, %v3902
    %s3911 = sld [smem:[#allocation8 + $0x685]]
    %v3912 = vstv %s3911
    %v3913 = vmul.f32 %v1293, %v3912
    %v3914 = vmul.f32 %v1294, %v3912
    %v3915 = vmul.f32 %v1295, %v3912
    %v3916 = vmul.f32 %v1296, %v3912
    %v3917 = vmul.f32 %v1297, %v3912
    %v3918 = vmul.f32 %v1298, %v3912
    %v3919 = vmul.f32 %v1299, %v3912
    %v3920 = vmul.f32 %v1300, %v3912
    %s3921 = sld [smem:[#allocation8 + $0x686]]
    %v3922 = vstv %s3921
    %v3923 = vmul.f32 %v1471, %v3922
    %v3924 = vmul.f32 %v1472, %v3922
    %v3925 = vmul.f32 %v1473, %v3922
    %v3926 = vmul.f32 %v1474, %v3922
    %v3927 = vmul.f32 %v1475, %v3922
    %v3928 = vmul.f32 %v1476, %v3922
    %v3929 = vmul.f32 %v1477, %v3922
    %v3930 = vmul.f32 %v1478, %v3922
    %s3931 = sld [smem:[#allocation8 + $0x687]]
    %v3932 = vstv %s3931
    %v3933 = vmul.f32 %v1649, %v3932
    %v3934 = vmul.f32 %v1650, %v3932
    %v3935 = vmul.f32 %v1651, %v3932
    %v3936 = vmul.f32 %v1652, %v3932
    %v3937 = vmul.f32 %v1653, %v3932
    %v3938 = vmul.f32 %v1654, %v3932
    %v3939 = vmul.f32 %v1655, %v3932
    %v3940 = vmul.f32 %v1656, %v3932
    %v3941 = vadd.f32 %v3863, %v3873
    %v3942 = vadd.f32 %v3864, %v3874
    %v3943 = vadd.f32 %v3865, %v3875
    %v3944 = vadd.f32 %v3866, %v3876
    %v3945 = vadd.f32 %v3867, %v3877
    %v3946 = vadd.f32 %v3868, %v3878
    %v3947 = vadd.f32 %v3869, %v3879
    %v3948 = vadd.f32 %v3870, %v3880
    %v3949 = vadd.f32 %v3883, %v3893
    %v3950 = vadd.f32 %v3884, %v3894
    %v3951 = vadd.f32 %v3885, %v3895
    %v3952 = vadd.f32 %v3886, %v3896
    %v3953 = vadd.f32 %v3887, %v3897
    %v3954 = vadd.f32 %v3888, %v3898
    %v3955 = vadd.f32 %v3889, %v3899
    %v3956 = vadd.f32 %v3890, %v3900
    %v3957 = vadd.f32 %v3903, %v3913
    %v3958 = vadd.f32 %v3904, %v3914
    %v3959 = vadd.f32 %v3905, %v3915
    %v3960 = vadd.f32 %v3906, %v3916
    %v3961 = vadd.f32 %v3907, %v3917
    %v3962 = vadd.f32 %v3908, %v3918
    %v3963 = vadd.f32 %v3909, %v3919
    %v3964 = vadd.f32 %v3910, %v3920
    %v3965 = vadd.f32 %v3923, %v3933
    %v3966 = vadd.f32 %v3924, %v3934
    %v3967 = vadd.f32 %v3925, %v3935
    %v3968 = vadd.f32 %v3926, %v3936
    %v3969 = vadd.f32 %v3927, %v3937
    %v3970 = vadd.f32 %v3928, %v3938
    %v3971 = vadd.f32 %v3929, %v3939
    %v3972 = vadd.f32 %v3930, %v3940
    %v3973 = vadd.f32 %v3941, %v3949
    %v3974 = vadd.f32 %v3942, %v3950
    %v3975 = vadd.f32 %v3943, %v3951
    %v3976 = vadd.f32 %v3944, %v3952
    %v3977 = vadd.f32 %v3945, %v3953
    %v3978 = vadd.f32 %v3946, %v3954
    %v3979 = vadd.f32 %v3947, %v3955
    %v3980 = vadd.f32 %v3948, %v3956
    %v3981 = vadd.f32 %v3957, %v3965
    %v3982 = vadd.f32 %v3958, %v3966
    %v3983 = vadd.f32 %v3959, %v3967
    %v3984 = vadd.f32 %v3960, %v3968
    %v3985 = vadd.f32 %v3961, %v3969
    %v3986 = vadd.f32 %v3962, %v3970
    %v3987 = vadd.f32 %v3963, %v3971
    %v3988 = vadd.f32 %v3964, %v3972
    %v3989 = vadd.f32 %v3973, %v3981
    %v3990 = vadd.f32 %v3974, %v3982
    %v3991 = vadd.f32 %v3975, %v3983
    %v3992 = vadd.f32 %v3976, %v3984
    %v3993 = vadd.f32 %v3977, %v3985
    %v3994 = vadd.f32 %v3978, %v3986
    %v3995 = vadd.f32 %v3979, %v3987
    %v3996 = vadd.f32 %v3980, %v3988
    %s3997 = sld [smem:[#allocation9 + $0xd]]
    %v3998 = vstv %s3997
    %v3999 = vadd.f32 %v3989, %v3998
    %v4000 = vadd.f32 %v3990, %v3998
    %v4001 = vadd.f32 %v3991, %v3998
    %v4002 = vadd.f32 %v3992, %v3998
    %v4003 = vadd.f32 %v3993, %v3998
    %v4004 = vadd.f32 %v3994, %v3998
    %v4005 = vadd.f32 %v3995, %v3998
    %v4006 = vadd.f32 %v3996, %v3998
    %v4007 = vmax.f32 %v3999, 0.0
    %v4008 = vmax.f32 %v4000, 0.0
    %v4009 = vmax.f32 %v4001, 0.0
    %v4010 = vmax.f32 %v4002, 0.0
    %v4011 = vmax.f32 %v4003, 0.0
    %v4012 = vmax.f32 %v4004, 0.0
    %v4013 = vmax.f32 %v4005, 0.0
    %v4014 = vmax.f32 %v4006, 0.0
    %s4015 = sld [smem:[#allocation11 + $0xd]]
    %v4016 = vstv %s4015
    %v4017 = vmul.f32 %v4007, %v4016
    %v4018 = vmul.f32 %v4008, %v4016
    %v4019 = vmul.f32 %v4009, %v4016
    %v4020 = vmul.f32 %v4010, %v4016
    %v4021 = vmul.f32 %v4011, %v4016
    %v4022 = vmul.f32 %v4012, %v4016
    %v4023 = vmul.f32 %v4013, %v4016
    %v4024 = vmul.f32 %v4014, %v4016
    %v4025 = vadd.f32 %v3337, %v4017
    %v4026 = vadd.f32 %v3338, %v4018
    %v4027 = vadd.f32 %v3339, %v4019
    %v4028 = vadd.f32 %v3340, %v4020
    %v4029 = vadd.f32 %v3341, %v4021
    %v4030 = vadd.f32 %v3342, %v4022
    %v4031 = vadd.f32 %v3343, %v4023
    %v4032 = vadd.f32 %v3344, %v4024
    %s4033 = sld [smem:[#allocation8 + $0x700]]
    %v4034 = vstv %s4033
    %v4035 = vmul.f32 %v403, %v4034
    %v4036 = vmul.f32 %v404, %v4034
    %v4037 = vmul.f32 %v405, %v4034
    %v4038 = vmul.f32 %v406, %v4034
    %v4039 = vmul.f32 %v407, %v4034
    %v4040 = vmul.f32 %v408, %v4034
    %v4041 = vmul.f32 %v409, %v4034
    %v4042 = vmul.f32 %v410, %v4034
    %s4043 = sld [smem:[#allocation8 + $0x701]]
    %v4044 = vstv %s4043
    %v4045 = vmul.f32 %v581, %v4044
    %v4046 = vmul.f32 %v582, %v4044
    %v4047 = vmul.f32 %v583, %v4044
    %v4048 = vmul.f32 %v584, %v4044
    %v4049 = vmul.f32 %v585, %v4044
    %v4050 = vmul.f32 %v586, %v4044
    %v4051 = vmul.f32 %v587, %v4044
    %v4052 = vmul.f32 %v588, %v4044
    %s4053 = sld [smem:[#allocation8 + $0x702]]
    %v4054 = vstv %s4053
    %v4055 = vmul.f32 %v759, %v4054
    %v4056 = vmul.f32 %v760, %v4054
    %v4057 = vmul.f32 %v761, %v4054
    %v4058 = vmul.f32 %v762, %v4054
    %v4059 = vmul.f32 %v763, %v4054
    %v4060 = vmul.f32 %v764, %v4054
    %v4061 = vmul.f32 %v765, %v4054
    %v4062 = vmul.f32 %v766, %v4054
    %s4063 = sld [smem:[#allocation8 + $0x703]]
    %v4064 = vstv %s4063
    %v4065 = vmul.f32 %v937, %v4064
    %v4066 = vmul.f32 %v938, %v4064
    %v4067 = vmul.f32 %v939, %v4064
    %v4068 = vmul.f32 %v940, %v4064
    %v4069 = vmul.f32 %v941, %v4064
    %v4070 = vmul.f32 %v942, %v4064
    %v4071 = vmul.f32 %v943, %v4064
    %v4072 = vmul.f32 %v944, %v4064
    %s4073 = sld [smem:[#allocation8 + $0x704]]
    %v4074 = vstv %s4073
    %v4075 = vmul.f32 %v1115, %v4074
    %v4076 = vmul.f32 %v1116, %v4074
    %v4077 = vmul.f32 %v1117, %v4074
    %v4078 = vmul.f32 %v1118, %v4074
    %v4079 = vmul.f32 %v1119, %v4074
    %v4080 = vmul.f32 %v1120, %v4074
    %v4081 = vmul.f32 %v1121, %v4074
    %v4082 = vmul.f32 %v1122, %v4074
    %s4083 = sld [smem:[#allocation8 + $0x705]]
    %v4084 = vstv %s4083
    %v4085 = vmul.f32 %v1293, %v4084
    %v4086 = vmul.f32 %v1294, %v4084
    %v4087 = vmul.f32 %v1295, %v4084
    %v4088 = vmul.f32 %v1296, %v4084
    %v4089 = vmul.f32 %v1297, %v4084
    %v4090 = vmul.f32 %v1298, %v4084
    %v4091 = vmul.f32 %v1299, %v4084
    %v4092 = vmul.f32 %v1300, %v4084
    %s4093 = sld [smem:[#allocation8 + $0x706]]
    %v4094 = vstv %s4093
    %v4095 = vmul.f32 %v1471, %v4094
    %v4096 = vmul.f32 %v1472, %v4094
    %v4097 = vmul.f32 %v1473, %v4094
    %v4098 = vmul.f32 %v1474, %v4094
    %v4099 = vmul.f32 %v1475, %v4094
    %v4100 = vmul.f32 %v1476, %v4094
    %v4101 = vmul.f32 %v1477, %v4094
    %v4102 = vmul.f32 %v1478, %v4094
    %s4103 = sld [smem:[#allocation8 + $0x707]]
    %v4104 = vstv %s4103
    %v4105 = vmul.f32 %v1649, %v4104
    %v4106 = vmul.f32 %v1650, %v4104
    %v4107 = vmul.f32 %v1651, %v4104
    %v4108 = vmul.f32 %v1652, %v4104
    %v4109 = vmul.f32 %v1653, %v4104
    %v4110 = vmul.f32 %v1654, %v4104
    %v4111 = vmul.f32 %v1655, %v4104
    %v4112 = vmul.f32 %v1656, %v4104
    %v4113 = vadd.f32 %v4035, %v4045
    %v4114 = vadd.f32 %v4036, %v4046
    %v4115 = vadd.f32 %v4037, %v4047
    %v4116 = vadd.f32 %v4038, %v4048
    %v4117 = vadd.f32 %v4039, %v4049
    %v4118 = vadd.f32 %v4040, %v4050
    %v4119 = vadd.f32 %v4041, %v4051
    %v4120 = vadd.f32 %v4042, %v4052
    %v4121 = vadd.f32 %v4055, %v4065
    %v4122 = vadd.f32 %v4056, %v4066
    %v4123 = vadd.f32 %v4057, %v4067
    %v4124 = vadd.f32 %v4058, %v4068
    %v4125 = vadd.f32 %v4059, %v4069
    %v4126 = vadd.f32 %v4060, %v4070
    %v4127 = vadd.f32 %v4061, %v4071
    %v4128 = vadd.f32 %v4062, %v4072
    %v4129 = vadd.f32 %v4075, %v4085
    %v4130 = vadd.f32 %v4076, %v4086
    %v4131 = vadd.f32 %v4077, %v4087
    %v4132 = vadd.f32 %v4078, %v4088
    %v4133 = vadd.f32 %v4079, %v4089
    %v4134 = vadd.f32 %v4080, %v4090
    %v4135 = vadd.f32 %v4081, %v4091
    %v4136 = vadd.f32 %v4082, %v4092
    %v4137 = vadd.f32 %v4095, %v4105
    %v4138 = vadd.f32 %v4096, %v4106
    %v4139 = vadd.f32 %v4097, %v4107
    %v4140 = vadd.f32 %v4098, %v4108
    %v4141 = vadd.f32 %v4099, %v4109
    %v4142 = vadd.f32 %v4100, %v4110
    %v4143 = vadd.f32 %v4101, %v4111
    %v4144 = vadd.f32 %v4102, %v4112
    %v4145 = vadd.f32 %v4113, %v4121
    %v4146 = vadd.f32 %v4114, %v4122
    %v4147 = vadd.f32 %v4115, %v4123
    %v4148 = vadd.f32 %v4116, %v4124
    %v4149 = vadd.f32 %v4117, %v4125
    %v4150 = vadd.f32 %v4118, %v4126
    %v4151 = vadd.f32 %v4119, %v4127
    %v4152 = vadd.f32 %v4120, %v4128
    %v4153 = vadd.f32 %v4129, %v4137
    %v4154 = vadd.f32 %v4130, %v4138
    %v4155 = vadd.f32 %v4131, %v4139
    %v4156 = vadd.f32 %v4132, %v4140
    %v4157 = vadd.f32 %v4133, %v4141
    %v4158 = vadd.f32 %v4134, %v4142
    %v4159 = vadd.f32 %v4135, %v4143
    %v4160 = vadd.f32 %v4136, %v4144
    %v4161 = vadd.f32 %v4145, %v4153
    %v4162 = vadd.f32 %v4146, %v4154
    %v4163 = vadd.f32 %v4147, %v4155
    %v4164 = vadd.f32 %v4148, %v4156
    %v4165 = vadd.f32 %v4149, %v4157
    %v4166 = vadd.f32 %v4150, %v4158
    %v4167 = vadd.f32 %v4151, %v4159
    %v4168 = vadd.f32 %v4152, %v4160
    %s4169 = sld [smem:[#allocation9 + $0xe]]
    %v4170 = vstv %s4169
    %v4171 = vadd.f32 %v4161, %v4170
    %v4172 = vadd.f32 %v4162, %v4170
    %v4173 = vadd.f32 %v4163, %v4170
    %v4174 = vadd.f32 %v4164, %v4170
    %v4175 = vadd.f32 %v4165, %v4170
    %v4176 = vadd.f32 %v4166, %v4170
    %v4177 = vadd.f32 %v4167, %v4170
    %v4178 = vadd.f32 %v4168, %v4170
    %v4179 = vmax.f32 %v4171, 0.0
    %v4180 = vmax.f32 %v4172, 0.0
    %v4181 = vmax.f32 %v4173, 0.0
    %v4182 = vmax.f32 %v4174, 0.0
    %v4183 = vmax.f32 %v4175, 0.0
    %v4184 = vmax.f32 %v4176, 0.0
    %v4185 = vmax.f32 %v4177, 0.0
    %v4186 = vmax.f32 %v4178, 0.0
    %s4187 = sld [smem:[#allocation11 + $0xe]]
    %v4188 = vstv %s4187
    %v4189 = vmul.f32 %v4179, %v4188
    %v4190 = vmul.f32 %v4180, %v4188
    %v4191 = vmul.f32 %v4181, %v4188
    %v4192 = vmul.f32 %v4182, %v4188
    %v4193 = vmul.f32 %v4183, %v4188
    %v4194 = vmul.f32 %v4184, %v4188
    %v4195 = vmul.f32 %v4185, %v4188
    %v4196 = vmul.f32 %v4186, %v4188
    %v4197 = vadd.f32 %v3509, %v4189
    %v4198 = vadd.f32 %v3510, %v4190
    %v4199 = vadd.f32 %v3511, %v4191
    %v4200 = vadd.f32 %v3512, %v4192
    %v4201 = vadd.f32 %v3513, %v4193
    %v4202 = vadd.f32 %v3514, %v4194
    %v4203 = vadd.f32 %v3515, %v4195
    %v4204 = vadd.f32 %v3516, %v4196
    %s4205 = sld [smem:[#allocation8 + $0x780]]
    %v4206 = vstv %s4205
    %v4207 = vmul.f32 %v403, %v4206
    %v4208 = vmul.f32 %v404, %v4206
    %v4209 = vmul.f32 %v405, %v4206
    %v4210 = vmul.f32 %v406, %v4206
    %v4211 = vmul.f32 %v407, %v4206
    %v4212 = vmul.f32 %v408, %v4206
    %v4213 = vmul.f32 %v409, %v4206
    %v4214 = vmul.f32 %v410, %v4206
    %s4215 = sld [smem:[#allocation8 + $0x781]]
    %v4216 = vstv %s4215
    %v4217 = vmul.f32 %v581, %v4216
    %v4218 = vmul.f32 %v582, %v4216
    %v4219 = vmul.f32 %v583, %v4216
    %v4220 = vmul.f32 %v584, %v4216
    %v4221 = vmul.f32 %v585, %v4216
    %v4222 = vmul.f32 %v586, %v4216
    %v4223 = vmul.f32 %v587, %v4216
    %v4224 = vmul.f32 %v588, %v4216
    %s4225 = sld [smem:[#allocation8 + $0x782]]
    %v4226 = vstv %s4225
    %v4227 = vmul.f32 %v759, %v4226
    %v4228 = vmul.f32 %v760, %v4226
    %v4229 = vmul.f32 %v761, %v4226
    %v4230 = vmul.f32 %v762, %v4226
    %v4231 = vmul.f32 %v763, %v4226
    %v4232 = vmul.f32 %v764, %v4226
    %v4233 = vmul.f32 %v765, %v4226
    %v4234 = vmul.f32 %v766, %v4226
    %s4235 = sld [smem:[#allocation8 + $0x783]]
    %v4236 = vstv %s4235
    %v4237 = vmul.f32 %v937, %v4236
    %v4238 = vmul.f32 %v938, %v4236
    %v4239 = vmul.f32 %v939, %v4236
    %v4240 = vmul.f32 %v940, %v4236
    %v4241 = vmul.f32 %v941, %v4236
    %v4242 = vmul.f32 %v942, %v4236
    %v4243 = vmul.f32 %v943, %v4236
    %v4244 = vmul.f32 %v944, %v4236
    %s4245 = sld [smem:[#allocation8 + $0x784]]
    %v4246 = vstv %s4245
    %v4247 = vmul.f32 %v1115, %v4246
    %v4248 = vmul.f32 %v1116, %v4246
    %v4249 = vmul.f32 %v1117, %v4246
    %v4250 = vmul.f32 %v1118, %v4246
    %v4251 = vmul.f32 %v1119, %v4246
    %v4252 = vmul.f32 %v1120, %v4246
    %v4253 = vmul.f32 %v1121, %v4246
    %v4254 = vmul.f32 %v1122, %v4246
    %s4255 = sld [smem:[#allocation8 + $0x785]]
    %v4256 = vstv %s4255
    %v4257 = vmul.f32 %v1293, %v4256
    %v4258 = vmul.f32 %v1294, %v4256
    %v4259 = vmul.f32 %v1295, %v4256
    %v4260 = vmul.f32 %v1296, %v4256
    %v4261 = vmul.f32 %v1297, %v4256
    %v4262 = vmul.f32 %v1298, %v4256
    %v4263 = vmul.f32 %v1299, %v4256
    %v4264 = vmul.f32 %v1300, %v4256
    %s4265 = sld [smem:[#allocation8 + $0x786]]
    %v4266 = vstv %s4265
    %v4267 = vmul.f32 %v1471, %v4266
    %v4268 = vmul.f32 %v1472, %v4266
    %v4269 = vmul.f32 %v1473, %v4266
    %v4270 = vmul.f32 %v1474, %v4266
    %v4271 = vmul.f32 %v1475, %v4266
    %v4272 = vmul.f32 %v1476, %v4266
    %v4273 = vmul.f32 %v1477, %v4266
    %v4274 = vmul.f32 %v1478, %v4266
    %s4275 = sld [smem:[#allocation8 + $0x787]]
    %v4276 = vstv %s4275
    %v4277 = vmul.f32 %v1649, %v4276
    %v4278 = vmul.f32 %v1650, %v4276
    %v4279 = vmul.f32 %v1651, %v4276
    %v4280 = vmul.f32 %v1652, %v4276
    %v4281 = vmul.f32 %v1653, %v4276
    %v4282 = vmul.f32 %v1654, %v4276
    %v4283 = vmul.f32 %v1655, %v4276
    %v4284 = vmul.f32 %v1656, %v4276
    %v4285 = vadd.f32 %v4207, %v4217
    %v4286 = vadd.f32 %v4208, %v4218
    %v4287 = vadd.f32 %v4209, %v4219
    %v4288 = vadd.f32 %v4210, %v4220
    %v4289 = vadd.f32 %v4211, %v4221
    %v4290 = vadd.f32 %v4212, %v4222
    %v4291 = vadd.f32 %v4213, %v4223
    %v4292 = vadd.f32 %v4214, %v4224
    %v4293 = vadd.f32 %v4227, %v4237
    %v4294 = vadd.f32 %v4228, %v4238
    %v4295 = vadd.f32 %v4229, %v4239
    %v4296 = vadd.f32 %v4230, %v4240
    %v4297 = vadd.f32 %v4231, %v4241
    %v4298 = vadd.f32 %v4232, %v4242
    %v4299 = vadd.f32 %v4233, %v4243
    %v4300 = vadd.f32 %v4234, %v4244
    %v4301 = vadd.f32 %v4247, %v4257
    %v4302 = vadd.f32 %v4248, %v4258
    %v4303 = vadd.f32 %v4249, %v4259
    %v4304 = vadd.f32 %v4250, %v4260
    %v4305 = vadd.f32 %v4251, %v4261
    %v4306 = vadd.f32 %v4252, %v4262
    %v4307 = vadd.f32 %v4253, %v4263
    %v4308 = vadd.f32 %v4254, %v4264
    %v4309 = vadd.f32 %v4267, %v4277
    %v4310 = vadd.f32 %v4268, %v4278
    %v4311 = vadd.f32 %v4269, %v4279
    %v4312 = vadd.f32 %v4270, %v4280
    %v4313 = vadd.f32 %v4271, %v4281
    %v4314 = vadd.f32 %v4272, %v4282
    %v4315 = vadd.f32 %v4273, %v4283
    %v4316 = vadd.f32 %v4274, %v4284
    %v4317 = vadd.f32 %v4285, %v4293
    %v4318 = vadd.f32 %v4286, %v4294
    %v4319 = vadd.f32 %v4287, %v4295
    %v4320 = vadd.f32 %v4288, %v4296
    %v4321 = vadd.f32 %v4289, %v4297
    %v4322 = vadd.f32 %v4290, %v4298
    %v4323 = vadd.f32 %v4291, %v4299
    %v4324 = vadd.f32 %v4292, %v4300
    %v4325 = vadd.f32 %v4301, %v4309
    %v4326 = vadd.f32 %v4302, %v4310
    %v4327 = vadd.f32 %v4303, %v4311
    %v4328 = vadd.f32 %v4304, %v4312
    %v4329 = vadd.f32 %v4305, %v4313
    %v4330 = vadd.f32 %v4306, %v4314
    %v4331 = vadd.f32 %v4307, %v4315
    %v4332 = vadd.f32 %v4308, %v4316
    %v4333 = vadd.f32 %v4317, %v4325
    %v4334 = vadd.f32 %v4318, %v4326
    %v4335 = vadd.f32 %v4319, %v4327
    %v4336 = vadd.f32 %v4320, %v4328
    %v4337 = vadd.f32 %v4321, %v4329
    %v4338 = vadd.f32 %v4322, %v4330
    %v4339 = vadd.f32 %v4323, %v4331
    %v4340 = vadd.f32 %v4324, %v4332
    %s4341 = sld [smem:[#allocation9 + $0xf]]
    %v4342 = vstv %s4341
    %v4343 = vadd.f32 %v4333, %v4342
    %v4344 = vadd.f32 %v4334, %v4342
    %v4345 = vadd.f32 %v4335, %v4342
    %v4346 = vadd.f32 %v4336, %v4342
    %v4347 = vadd.f32 %v4337, %v4342
    %v4348 = vadd.f32 %v4338, %v4342
    %v4349 = vadd.f32 %v4339, %v4342
    %v4350 = vadd.f32 %v4340, %v4342
    %v4351 = vmax.f32 %v4343, 0.0
    %v4352 = vmax.f32 %v4344, 0.0
    %v4353 = vmax.f32 %v4345, 0.0
    %v4354 = vmax.f32 %v4346, 0.0
    %v4355 = vmax.f32 %v4347, 0.0
    %v4356 = vmax.f32 %v4348, 0.0
    %v4357 = vmax.f32 %v4349, 0.0
    %v4358 = vmax.f32 %v4350, 0.0
    %s4359 = sld [smem:[#allocation11 + $0xf]]
    %v4360 = vstv %s4359
    %v4361 = vmul.f32 %v4351, %v4360
    %v4362 = vmul.f32 %v4352, %v4360
    %v4363 = vmul.f32 %v4353, %v4360
    %v4364 = vmul.f32 %v4354, %v4360
    %v4365 = vmul.f32 %v4355, %v4360
    %v4366 = vmul.f32 %v4356, %v4360
    %v4367 = vmul.f32 %v4357, %v4360
    %v4368 = vmul.f32 %v4358, %v4360
    %v4369 = vadd.f32 %v3681, %v4361
    %v4370 = vadd.f32 %v3682, %v4362
    %v4371 = vadd.f32 %v3683, %v4363
    %v4372 = vadd.f32 %v3684, %v4364
    %v4373 = vadd.f32 %v3685, %v4365
    %v4374 = vadd.f32 %v3686, %v4366
    %v4375 = vadd.f32 %v3687, %v4367
    %v4376 = vadd.f32 %v3688, %v4368
    %v4377 = vadd.f32 %v3853, %v4025
    %v4378 = vadd.f32 %v3854, %v4026
    %v4379 = vadd.f32 %v3855, %v4027
    %v4380 = vadd.f32 %v3856, %v4028
    %v4381 = vadd.f32 %v3857, %v4029
    %v4382 = vadd.f32 %v3858, %v4030
    %v4383 = vadd.f32 %v3859, %v4031
    %v4384 = vadd.f32 %v3860, %v4032
    %v4385 = vadd.f32 %v4197, %v4369
    %v4386 = vadd.f32 %v4198, %v4370
    %v4387 = vadd.f32 %v4199, %v4371
    %v4388 = vadd.f32 %v4200, %v4372
    %v4389 = vadd.f32 %v4201, %v4373
    %v4390 = vadd.f32 %v4202, %v4374
    %v4391 = vadd.f32 %v4203, %v4375
    %v4392 = vadd.f32 %v4204, %v4376
    %v4393 = vadd.f32 %v4377, %v4385
    %v4394 = vadd.f32 %v4378, %v4386
    %v4395 = vadd.f32 %v4379, %v4387
    %v4396 = vadd.f32 %v4380, %v4388
    %v4397 = vadd.f32 %v4381, %v4389
    %v4398 = vadd.f32 %v4382, %v4390
    %v4399 = vadd.f32 %v4383, %v4391
    %v4400 = vadd.f32 %v4384, %v4392
    %s4401 = sld [smem:[#allocation2]]
    %v4402 = vstv %s4401
    %v4403 = vadd.f32 %v4393, %v4402
    %v4404 = vadd.f32 %v4394, %v4402
    %v4405 = vadd.f32 %v4395, %v4402
    %v4406 = vadd.f32 %v4396, %v4402
    %v4407 = vadd.f32 %v4397, %v4402
    %v4408 = vadd.f32 %v4398, %v4402
    %v4409 = vadd.f32 %v4399, %v4402
    %v4410 = vadd.f32 %v4400, %v4402
    %v4411 = vmax.f32 %v4403, 0.0
    %v4412 = vmax.f32 %v4404, 0.0
    %v4413 = vmax.f32 %v4405, 0.0
    %v4414 = vmax.f32 %v4406, 0.0
    %v4415 = vmax.f32 %v4407, 0.0
    %v4416 = vmax.f32 %v4408, 0.0
    %v4417 = vmax.f32 %v4409, 0.0
    %v4418 = vmax.f32 %v4410, 0.0
    %v4427 = vperm.slane %v4411, 0
    %v4428 = vperm.slane %v4411, 4
    %v4429 = vperm.slane %v4412, 0
    %v4430 = vperm.slane %v4412, 4
    %v4431 = vperm.slane %v4413, 0
    %v4432 = vperm.slane %v4413, 4
    %v4433 = vperm.slane %v4414, 0
    %v4434 = vperm.slane %v4414, 4
    %v4435 = vperm.slane %v4415, 0
    %v4436 = vperm.slane %v4415, 4
    %v4437 = vperm.slane %v4416, 0
    %v4438 = vperm.slane %v4416, 4
    %v4439 = vperm.slane %v4417, 0
    %v4440 = vperm.slane %v4417, 4
    %v4441 = vperm.slane %v4418, 0
    %v4442 = vperm.slane %v4418, 4
    %vm4443 = vcmask 1041409
    %v4444 = vsel %vm4443, %v4429, %v4427
    %vm4445 = vcmask 1042434
    %v4446 = vsel %vm4445, %v4431, %v4444
    %vm4447 = vcmask 1043459
    %v4448 = vsel %vm4447, %v4433, %v4446
    %vm4449 = vcmask 1044484
    %v4450 = vsel %vm4449, %v4435, %v4448
    %vm4451 = vcmask 1045509
    %v4452 = vsel %vm4451, %v4437, %v4450
    %vm4453 = vcmask 1046534
    %v4454 = vsel %vm4453, %v4439, %v4452
    %vm4455 = vcmask 1047559
    %v4456 = vsel %vm4455, %v4441, %v4454
    %v4457 = vsel %vm4443, %v4430, %v4428
    %v4458 = vsel %vm4445, %v4432, %v4457
    %v4459 = vsel %vm4447, %v4434, %v4458
    %v4460 = vsel %vm4449, %v4436, %v4459
    %v4461 = vsel %vm4451, %v4438, %v4460
    %v4462 = vsel %vm4453, %v4440, %v4461
    %v4463 = vsel %vm4455, %v4442, %v4462
    %4466 = vst [vmem:[%s12] sm:$0xff] %v4456
    %4467 = vst [vmem:[%s12 + $0x8] sm:$0xff] %v4463
    %v4484 = vpack.c.bf16 %v4427, %v4427
    %v4485 = vpack.c.bf16 %v4428, %v4428
    %v4486 = vpack.c.bf16 %v4429, %v4429
    %v4487 = vpack.c.bf16 %v4430, %v4430
    %v4488 = vpack.c.bf16 %v4431, %v4431
    %v4489 = vpack.c.bf16 %v4432, %v4432
    %v4490 = vpack.c.bf16 %v4433, %v4433
    %v4491 = vpack.c.bf16 %v4434, %v4434
    %v4492 = vpack.c.bf16 %v4435, %v4435
    %v4493 = vpack.c.bf16 %v4436, %v4436
    %v4494 = vpack.c.bf16 %v4437, %v4437
    %v4495 = vpack.c.bf16 %v4438, %v4438
    %v4496 = vpack.c.bf16 %v4439, %v4439
    %v4497 = vpack.c.bf16 %v4440, %v4440
    %v4498 = vpack.c.bf16 %v4441, %v4441
    %v4499 = vpack.c.bf16 %v4442, %v4442
    %v4500 = vld [vmem:[%s8] sm:$0xf]
    %v4501 = vld [vmem:[%s8 + $0x4] sm:$0xf]
    %v4502 = vld [vmem:[%s8 + $0x8] sm:$0xf]
    %v4503 = vld [vmem:[%s8 + $0xc] sm:$0xf]
    %v4504 = vld [vmem:[%s8 + $0x10] sm:$0xf]
    %v4505 = vld [vmem:[%s8 + $0x14] sm:$0xf]
    %v4506 = vld [vmem:[%s8 + $0x18] sm:$0xf]
    %v4507 = vld [vmem:[%s8 + $0x1c] sm:$0xf]
    %v4508 = vld [vmem:[%s8 + $0x20] sm:$0xf]
    %v4509 = vld [vmem:[%s8 + $0x24] sm:$0xf]
    %v4510 = vld [vmem:[%s8 + $0x28] sm:$0xf]
    %v4511 = vld [vmem:[%s8 + $0x2c] sm:$0xf]
    %v4512 = vld [vmem:[%s8 + $0x30] sm:$0xf]
    %v4513 = vld [vmem:[%s8 + $0x34] sm:$0xf]
    %v4514 = vld [vmem:[%s8 + $0x38] sm:$0xf]
    %v4515 = vld [vmem:[%s8 + $0x3c] sm:$0xf]
    %v4516 = vld [vmem:[%s8 + $0x40] sm:$0xf]
    %v4517 = vld [vmem:[%s8 + $0x44] sm:$0xf]
    %v4518 = vld [vmem:[%s8 + $0x48] sm:$0xf]
    %v4519 = vld [vmem:[%s8 + $0x4c] sm:$0xf]
    %v4520 = vld [vmem:[%s8 + $0x50] sm:$0xf]
    %v4521 = vld [vmem:[%s8 + $0x54] sm:$0xf]
    %v4522 = vld [vmem:[%s8 + $0x58] sm:$0xf]
    %v4523 = vld [vmem:[%s8 + $0x5c] sm:$0xf]
    %v4524 = vld [vmem:[%s8 + $0x60] sm:$0xf]
    %v4525 = vld [vmem:[%s8 + $0x64] sm:$0xf]
    %v4526 = vld [vmem:[%s8 + $0x68] sm:$0xf]
    %v4527 = vld [vmem:[%s8 + $0x6c] sm:$0xf]
    %v4528 = vld [vmem:[%s8 + $0x70] sm:$0xf]
    %v4529 = vld [vmem:[%s8 + $0x74] sm:$0xf]
    %v4530 = vld [vmem:[%s8 + $0x78] sm:$0xf]
    %v4531 = vld [vmem:[%s8 + $0x7c] sm:$0xf]
    %v4532 = vld [vmem:[%s9] sm:$0x1]
    %v4534 = vperm.slane %v4532, 0
    %v4552 = vunpack.c.l.b16 %v4484
    %v4553 = vunpack.c.l.b16 %v4485
    %v4554 = vunpack.c.l.b16 %v4486
    %v4555 = vunpack.c.l.b16 %v4487
    %v4556 = vunpack.c.l.b16 %v4488
    %v4557 = vunpack.c.l.b16 %v4489
    %v4558 = vunpack.c.l.b16 %v4490
    %v4559 = vunpack.c.l.b16 %v4491
    %v4560 = vunpack.c.l.b16 %v4492
    %v4561 = vunpack.c.l.b16 %v4493
    %v4562 = vunpack.c.l.b16 %v4494
    %v4563 = vunpack.c.l.b16 %v4495
    %v4564 = vunpack.c.l.b16 %v4496
    %v4565 = vunpack.c.l.b16 %v4497
    %v4566 = vunpack.c.l.b16 %v4498
    %v4567 = vunpack.c.l.b16 %v4499
    %v4568 = vrot.slane %v4554, 7
    %v4569 = vsel %vm4443, %v4568, %v4552
    %v4570 = vrot.slane %v4556, 6
    %v4571 = vsel %vm4445, %v4570, %v4569
    %v4572 = vrot.slane %v4558, 5
    %v4573 = vsel %vm4447, %v4572, %v4571
    %v4574 = vrot.slane %v4560, 4
    %v4575 = vsel %vm4449, %v4574, %v4573
    %v4576 = vrot.slane %v4562, 3
    %v4577 = vsel %vm4451, %v4576, %v4575
    %v4578 = vrot.slane %v4564, 2
    %v4579 = vsel %vm4453, %v4578, %v4577
    %v4580 = vrot.slane %v4566, 1
    %v4581 = vsel %vm4455, %v4580, %v4579
    %v4582 = vrot.slane %v4555, 7
    %v4583 = vsel %vm4443, %v4582, %v4553
    %v4584 = vrot.slane %v4557, 6
    %v4585 = vsel %vm4445, %v4584, %v4583
    %v4586 = vrot.slane %v4559, 5
    %v4587 = vsel %vm4447, %v4586, %v4585
    %v4588 = vrot.slane %v4561, 4
    %v4589 = vsel %vm4449, %v4588, %v4587
    %v4590 = vrot.slane %v4563, 3
    %v4591 = vsel %vm4451, %v4590, %v4589
    %v4592 = vrot.slane %v4565, 2
    %v4593 = vsel %vm4453, %v4592, %v4591
    %v4594 = vrot.slane %v4567, 1
    %v4595 = vsel %vm4455, %v4594, %v4593
    %v4596 = vpack.c.b16 %v4581, %v4581
    %v4597 = vpack.c.b16 %v4595, %v4595
    %v4632 = vunpack.c.l.b16 %v4500
    %v4633 = vunpack.c.l.b16 %v4501
    %v4634 = vunpack.c.l.b16 %v4502
    %v4635 = vunpack.c.l.b16 %v4503
    %v4636 = vunpack.c.l.b16 %v4504
    %v4637 = vunpack.c.l.b16 %v4505
    %v4638 = vunpack.c.l.b16 %v4506
    %v4639 = vunpack.c.l.b16 %v4507
    %v4640 = vunpack.c.l.b16 %v4508
    %v4641 = vunpack.c.l.b16 %v4509
    %v4642 = vunpack.c.l.b16 %v4510
    %v4643 = vunpack.c.l.b16 %v4511
    %v4644 = vunpack.c.l.b16 %v4512
    %v4645 = vunpack.c.l.b16 %v4513
    %v4646 = vunpack.c.l.b16 %v4514
    %v4647 = vunpack.c.l.b16 %v4515
    %v4648 = vunpack.c.l.b16 %v4516
    %v4649 = vunpack.c.l.b16 %v4517
    %v4650 = vunpack.c.l.b16 %v4518
    %v4651 = vunpack.c.l.b16 %v4519
    %v4652 = vunpack.c.l.b16 %v4520
    %v4653 = vunpack.c.l.b16 %v4521
    %v4654 = vunpack.c.l.b16 %v4522
    %v4655 = vunpack.c.l.b16 %v4523
    %v4656 = vunpack.c.l.b16 %v4524
    %v4657 = vunpack.c.l.b16 %v4525
    %v4658 = vunpack.c.l.b16 %v4526
    %v4659 = vunpack.c.l.b16 %v4527
    %v4660 = vunpack.c.l.b16 %v4528
    %v4661 = vunpack.c.l.b16 %v4529
    %v4662 = vunpack.c.l.b16 %v4530
    %v4663 = vunpack.c.l.b16 %v4531
    %v4664 = vpack.c.b16 %v4633, %v4632
    %v4665 = vpack.c.b16 %v4635, %v4634
    %v4666 = vpack.c.b16 %v4637, %v4636
    %v4667 = vpack.c.b16 %v4639, %v4638
    %v4668 = vpack.c.b16 %v4641, %v4640
    %v4669 = vpack.c.b16 %v4643, %v4642
    %v4670 = vpack.c.b16 %v4645, %v4644
    %v4671 = vpack.c.b16 %v4647, %v4646
    %v4672 = vpack.c.b16 %v4649, %v4648
    %v4673 = vpack.c.b16 %v4651, %v4650
    %v4674 = vpack.c.b16 %v4653, %v4652
    %v4675 = vpack.c.b16 %v4655, %v4654
    %v4676 = vpack.c.b16 %v4657, %v4656
    %v4677 = vpack.c.b16 %v4659, %v4658
    %v4678 = vpack.c.b16 %v4661, %v4660
    %v4679 = vpack.c.b16 %v4663, %v4662
    %4696 = vmatpush.bf16.msra.mxu0 %v4671
    %4697 = vmatpush.bf16.msra.mxu0 %v4670
    %4698 = vmatpush.bf16.msra.mxu0 %v4669
    %4699 = vmatpush.bf16.msra.mxu0 %v4668
    %4700 = vmatpush.bf16.msra.mxu0 %v4667
    %4701 = vmatpush.bf16.msra.mxu0 %v4666
    %4702 = vmatpush.bf16.msra.mxu0 %v4665
    %4703 = vmatpush.bf16.msra.mxu0 %v4664
    %4704 = vmatmul.bf16.gmra.mxu0 %v4596
    %v4705 = vpop.f32.mrf.mxu0
    %v4706 = vadd.f32 %v4534, %v4705
    %v4707 = vpop.f32.mrf.mxu0
    %4708 = vdwg.mxu0
    %4709 = vmatpush.bf16.msra.mxu0 %v4679
    %4710 = vmatpush.bf16.msra.mxu0 %v4678
    %4711 = vmatpush.bf16.msra.mxu0 %v4677
    %4712 = vmatpush.bf16.msra.mxu0 %v4676
    %4713 = vmatpush.bf16.msra.mxu0 %v4675
    %4714 = vmatpush.bf16.msra.mxu0 %v4674
    %4715 = vmatpush.bf16.msra.mxu0 %v4673
    %4716 = vmatpush.bf16.msra.mxu0 %v4672
    %4717 = vmatmul.bf16.gmra.mxu0 %v4597
    %v4718 = vpop.f32.mrf.mxu0
    %v4719 = vadd.f32 %v4706, %v4718
    %v4720 = vpop.f32.mrf.mxu0
    %4721 = vdwg.mxu0
    %vm4722 = vcmp.gt.f32.partialorder %v4719, 0.0
    %v4723 = vmul.f32 %v4719, 0.01
    %v4724 = vsel %vm4722, %v4719, %v4723
    %v4725 = vld [vmem:[%s10] sm:$0x1]
    %v4727 = vperm.slane %v4725, 0
    %v4729 = vmul.f32 %v4724, %v4727
    %vm4730 = vcmask 523264
    %v4731 = vsel %vm4730, %v4729, 0.0
    %4732 = vadd.xlane.f32.xlu0 %v4731
    %v4733 = vpop.xlane.xlu0 %4732
    %s4734 = sld [smem:[#allocation3]]
    %v4735 = vstv %s4734
    %v4736 = vadd.f32 %v4733, %v4735
    %vm4737 = vcmp.gt.f32.partialorder %v4736, 0.0
    %v4738 = vmul.f32 %v4736, 0.01
    %v4739 = vsel %vm4737, %v4736, %v4738
    %vm4740 = vcmask 7168
    %4741 = vst.msk [vmem:[%s13] sm:$0xff] %vm4740, %v4739
    // Predicated region
    $region70: #{actor_forward.1} parent=1 // pred_check
      _
    $region71: #{actor_forward.1} parent=1 // pred_check_branch
      %4743 = sbr.rel (0) target = $region73
    $region72: #{actor_forward.1} parent=1 // pred_region
      _
    $region73: #{actor_forward.1} parent=1 // pred_fallthru
      _
    // Predicated region
    $region74: #{actor_forward.1} parent=1 // pred_check
      _
    $region75: #{actor_forward.1} parent=1 // pred_check_branch
      %4745 = sbr.rel (0) target = $region77
    $region76: #{actor_forward.1} parent=1 // pred_region
      _
    $region77: #{actor_forward.1} parent=1 // pred_fallthru
      _
    // Predicated region
    $region78: #{actor_forward.1} parent=1 // pred_check
      _
    $region79: #{actor_forward.1} parent=1 // pred_check_branch
      %4747 = sbr.rel (0) target = $region81
    $region80: #{actor_forward.1} parent=1 // pred_region
      _
    $region81: #{actor_forward.1} parent=1 // pred_fallthru
      _
    // Predicated region
    $region82: #{actor_forward.1} parent=1 // pred_check
      _
    $region83: #{actor_forward.1} parent=1 // pred_check_branch
      %4749 = sbr.rel (0) target = $region85
    $region84: #{actor_forward.1} parent=1 // pred_region
      _
    $region85: #{actor_forward.1} parent=1 // pred_fallthru
      _
    %4750 = vsyncpa [#allocation5], 1
    %4751 = vsyncpa [#allocation7], 1
    %4752 = vsyncpa [#allocation10], 1

</llo_original>
